<compile_context>
chip_gen: v7x
topology: tpu7x:2x2x1
jax: 0.10.0
libtpu: 0.0.40
codegen_flags: <defaults>
</compile_context>

<pallas_src>
import functools

import jax
import jax.numpy as jnp
from jax import lax
from jax.experimental import pallas as pl
from jax.experimental.pallas import tpu as pltpu

NEG_INF = -9e15  # pyGAT masking constant


# ----------------------------------------------------------------------------- kernel

def gat2_fused_kernel(x_ref, mask_ref, w_all_ref, a_allT_ref, w_out_ref, b_out_ref,
                      out_ref, h_scr, dst_scr, pool_scr,
                      *, nheads, nhid, alpha, n_nodes, tq):
    """Fused GAT2 forward for one graph (grid axis 0) and one query-row tile (grid axis 1).

    x_ref     : (1, N, Fin) bf16   node features for this graph (resident across row tiles)
    mask_ref  : (1, TQ, N)  int8   adjacency row-tile (nonzero => edge)
    w_all_ref : (Fin, Fh)   bf16   all head projection weights packed, Fh = nheads*nhid
    a_allT_ref: (2H, Fh)    bf16   packed attention vectors (rows 0..H-1 = a_src, H..2H-1 = a_dst)
    w_out_ref : (Fh, C) f32, b_out_ref : (1, C) f32   output Linear
    out_ref   : (1, 1, C)   f32    log-probabilities for this graph
    h_scr     : (N, Fh) bf16 scratch   projected features (all heads)
    dst_scr   : (H, N)  f32  scratch   per-node dst attention scalars (key axis on lanes)
    pool_scr  : (1, Fh) f32  scratch   running sum over nodes of the ELU'd concatenated features
    """
    qi = pl.program_id(1)

    a_t = a_allT_ref[...]                      # (2H, Fh) bf16, tiny & resident
    a_src = a_t[:nheads]                       # (H, Fh)
    a_dst = a_t[nheads:]                       # (H, Fh)

    # ---- per-graph prologue: project all heads with one wide bf16 MXU matmul --------------
    @pl.when(qi == 0)
    def _init():
        x = x_ref[0]                                                        # (N, Fin) bf16
        h = jnp.dot(x, w_all_ref[...], preferred_element_type=jnp.float32)  # (N, Fh) f32 acc
        h_bf = h.astype(jnp.bfloat16)
        h_scr[...] = h_bf
        # dst scalars with the key axis on lanes: (H, N), one small MXU matmul.
        dst_scr[...] = lax.dot_general(a_dst, h_bf, (((1,), (1,)), ((), ())),
                                       preferred_element_type=jnp.float32)
        pool_scr[...] = jnp.zeros_like(pool_scr)

    # ---- attention for this query-row tile, all heads -------------------------------------
    row0 = pl.multiple_of(qi * tq, tq)
    h_all = h_scr[...]                                                      # (N, Fh) bf16
    h_tile = h_scr[pl.ds(row0, tq), :]                                      # (TQ, Fh) bf16
    # Per-row src scalars via a tiny on-the-fly MXU matmul (no padded (N,2H) scratch).
    src_tile = lax.dot_general(h_tile, a_src, (((1,), (1,)), ((), ())),
                               preferred_element_type=jnp.float32)          # (TQ, H) f32
    edge = mask_ref[0] != 0                                                 # (TQ, N) bool
    dst_all = dst_scr[...]                                                  # (H, N) f32

    for hd in range(nheads):                                                # static unroll
        src = src_tile[:, hd:hd + 1]                                        # (TQ, 1)
        dst = dst_all[hd:hd + 1, :]                                         # (1, N)
        e = src + dst                                                       # (TQ, N)
        e = jnp.maximum(e, alpha * e)                                       # LeakyReLU (0<alpha<1)
        e = jnp.where(edge, e, NEG_INF)                                     # mask non-edges
        m = jnp.max(e, axis=1, keepdims=True)
        p = jnp.exp(e - m)                                                  # un-normalized probs
        denom = jnp.sum(p, axis=1, keepdims=True)
        h_head = h_all[:, hd * nhid:(hd + 1) * nhid]                        # (N, nhid) bf16
        o = jnp.dot(p.astype(jnp.bfloat16), h_head,
                    preferred_element_type=jnp.float32)                     # (TQ, nhid) MXU
        o = o * pl.reciprocal(denom, approx=True)                           # deferred softmax norm
        o = jnp.where(o > 0, o, jnp.exp(jnp.minimum(o, 0.0)) - 1.0)         # ELU (concat=True)
        # Per-head accumulation into the head's lane slice (no lane-concat shuffle).
        pool_scr[:, hd * nhid:(hd + 1) * nhid] += jnp.sum(o, axis=0, keepdims=True)

    # ---- epilogue on the last row tile: mean-pool + Linear + ELU + log_softmax ------------
    @pl.when(qi == pl.num_programs(1) - 1)
    def _finalize():
        pooled = pool_scr[...] * jnp.float32(1.0 / n_nodes)                 # (1, Fh)
        z = jnp.dot(pooled, w_out_ref[...],
                    preferred_element_type=jnp.float32) + b_out_ref[...]    # (1, C)
        z = jnp.where(z > 0, z, jnp.exp(jnp.minimum(z, 0.0)) - 1.0)         # ELU
        mz = jnp.max(z, axis=-1, keepdims=True)
        zz = z - mz
        lse = jnp.log(jnp.sum(jnp.exp(zz), axis=-1, keepdims=True))
        out_ref[0] = (zz - lse).astype(out_ref.dtype)


# ----------------------------------------------------------------------------- wrapper

def gat2_forward(x, adj_mask, fused_params, *, alpha, tq=None):
    """Full GAT2 forward (eval mode: dropout == identity) in one pallas_call.

    adj_mask: (B, N, N) int8, nonzero where an edge exists (precompute once; the kernel
    streams this 1-byte mask directly — no bf16 additive-bias materialization per call).
    """
    # TODO(synk): training-mode F.dropout not implemented (identity in eval mode).
    B, N, Fin = x.shape
    W_all = fused_params["W_all"]            # (Fin, Fh) bf16
    A_allT = fused_params["A_allT"]          # (2H, Fh)  bf16
    W_out = fused_params["W_out"]            # (Fh, C)   f32
    b_out = fused_params["b_out"]            # (1, C)    f32
    Fh = W_all.shape[1]
    nheads = A_allT.shape[0] // 2
    nhid = Fh // nheads
    C = W_out.shape[1]

    if tq is None:
        tq = N                                # collapse the q axis for small graphs
    assert N % tq == 0, (N, tq)
    assert tq == N or tq % 32 == 0, (N, tq)   # int8 mask sublane tiling

    x_bf = x.astype(jnp.bfloat16)             # half the dominant x DMA stream

    kern = functools.partial(gat2_fused_kernel, nheads=nheads, nhid=nhid,
                             alpha=alpha, n_nodes=N, tq=tq)

    flops = int(B * (2 * N * Fin * Fh                # x @ W_all
                     + 4 * N * Fh * nheads           # src/dst score matmuls
                     + 2 * N * N * Fh                # att @ h over all heads
                     + 6 * nheads * N * N            # elementwise attention math
                     + 2 * Fh * C))
    transcendentals = int(B * (nheads * N * N + N * Fh))
    bytes_accessed = int(x_bf.size * 2 + adj_mask.size * 1 + W_all.size * 2
                         + A_allT.size * 2 + W_out.size * 4 + b_out.size * 4 + B * C * 4)

    out = pl.pallas_call(
        kern,
        out_shape=jax.ShapeDtypeStruct((B, 1, C), jnp.float32),
        grid_spec=pltpu.PrefetchScalarGridSpec(
            num_scalar_prefetch=0,
            grid=(B, N // tq),
            in_specs=[
                pl.BlockSpec((1, N, Fin), lambda b, q: (b, 0, 0)),      # x (resident per graph)
                pl.BlockSpec((1, tq, N), lambda b, q: (b, q, 0)),       # adjacency mask tile
                pl.BlockSpec((Fin, Fh), lambda b, q: (0, 0)),           # W_all
                pl.BlockSpec((2 * nheads, Fh), lambda b, q: (0, 0)),    # A_allT
                pl.BlockSpec((Fh, C), lambda b, q: (0, 0)),             # W_out
                pl.BlockSpec((1, C), lambda b, q: (0, 0)),              # b_out
            ],
            out_specs=pl.BlockSpec((1, 1, C), lambda b, q: (b, 0, 0)),
            scratch_shapes=[
                pltpu.VMEM((N, Fh), jnp.bfloat16),           # projected features (all heads)
                pltpu.VMEM((nheads, N), jnp.float32),        # dst scalars (key-on-lanes)
                pltpu.VMEM((1, Fh), jnp.float32),            # pooled-sum accumulator
            ]),
        compiler_params=pltpu.CompilerParams(
            dimension_semantics=("parallel", "arbitrary")),
        cost_estimate=pl.CostEstimate(flops=flops, transcendentals=transcendentals,
                                      bytes_accessed=bytes_accessed),
    )(x_bf, adj_mask, W_all, A_allT, W_out, b_out)
    return out[:, 0, :]                                                     # (B, C)


# ----------------------------------------------------------------------------- params / reference

def init_head_params(key, f_in, f_out):
    k1, k2 = jax.random.split(key)
    g = jnp.sqrt(6.0 / (f_in + f_out))
    W = jax.random.uniform(k1, (f_in, f_out), jnp.float32, -g, g)
    ga = jnp.sqrt(6.0 / (2 * f_out + 1))
    a = jax.random.uniform(k2, (2 * f_out,), jnp.float32, -ga, ga)
    return W, a[:f_out], a[f_out:]


def build_fused_params(head_params, W_out, b_out):
    """Pack per-head weights once (bf16 for the MXU operands); done outside the hot path."""
    nheads = len(head_params)
    nhid = head_params[0][0].shape[1]
    Fh = nheads * nhid
    W_all = jnp.concatenate([W for (W, _, _) in head_params], axis=1)       # (Fin, Fh)
    A_allT = jnp.zeros((2 * nheads, Fh), jnp.float32)
    for h, (_, a_src, a_dst) in enumerate(head_params):
        A_allT = A_allT.at[h, h * nhid:(h + 1) * nhid].set(a_src)
        A_allT = A_allT.at[nheads + h, h * nhid:(h + 1) * nhid].set(a_dst)
    return {"W_all": W_all.astype(jnp.bfloat16),
            "A_allT": A_allT.astype(jnp.bfloat16),
            "W_out": W_out, "b_out": b_out.reshape(1, -1)}


def gat2_ref(x, adj, head_params, W_out, b_out, alpha):
    """Pure-JAX f32 reference of the GAT2 forward (eval mode)."""
    outs = []
    for (W, a_src, a_dst) in head_params:
        h = jnp.einsum('bnf,fo->bno', x, W)
        e = (jnp.einsum('bno,o->bn', h, a_src)[:, :, None]
             + jnp.einsum('bno,o->bn', h, a_dst)[:, None, :])
        e = jnp.where(e > 0, e, alpha * e)
        e = jnp.where(adj > 0, e, NEG_INF)
        att = jax.nn.softmax(e, axis=-1)
        outs.append(jax.nn.elu(jnp.einsum('bij,bjo->bio', att, h)))         # concat=True
    hcat = jnp.concatenate(outs, axis=-1)                                   # (B, N, Fh)
    pooled = hcat.mean(axis=1)                                              # global_mean_pool
    z = jax.nn.elu(pooled @ W_out + b_out)
    return jax.nn.log_softmax(z, axis=-1)


# ----------------------------------------------------------------------------- main

if __name__ == "__main__":
    B, N, nfeat, nhid, nheads, nclass = 2, 128, 64, 32, 4, 8
    alpha = 0.2            # LeakyReLU slope
    E = 1024               # random edges per graph

    key = jax.random.PRNGKey(0)
    kx, ks, kd, kp, kw, kb = jax.random.split(key, 6)

    x = jax.random.normal(kx, (B, N, nfeat), dtype=jnp.float32)

    # Dense adjacency from random directed edges, plus self-loops so every row of the masked
    # softmax has at least one valid entry.
    src_idx = jax.random.randint(ks, (B, E), 0, N, dtype=jnp.int32)
    dst_idx = jax.random.randint(kd, (B, E), 0, N, dtype=jnp.int32)
    bidx = jnp.broadcast_to(jnp.arange(B, dtype=jnp.int32)[:, None], (B, E))
    adj = jnp.zeros((B, N, N), jnp.float32).at[bidx, src_idx, dst_idx].set(1.0)
    adj = jnp.maximum(adj, jnp.eye(N, dtype=jnp.float32)[None])
    adj_mask = (adj > 0).astype(jnp.int8)      # 1-byte mask streamed into the kernel

    # Parameters (xavier-style heads, PyTorch-Linear-style output layer).
    hkeys = jax.random.split(kp, nheads)
    head_params = [init_head_params(hkeys[i], nfeat, nhid) for i in range(nheads)]
    bound = 1.0 / jnp.sqrt(nheads * nhid)
    W_out = jax.random.uniform(kw, (nheads * nhid, nclass), jnp.float32, -bound, bound)
    b_out = jax.random.uniform(kb, (nclass,), jnp.float32, -bound, bound)
    fused_params = build_fused_params(head_params, W_out, b_out)

    out = gat2_forward(x, adj_mask, fused_params, alpha=alpha)
    out = jax.block_until_ready(out)

    ref = gat2_ref(x, adj, head_params, W_out, b_out, alpha)
    assert out.shape == (B, nclass), out.shape
    # Tolerance absorbs bf16 MXU operands (x, W, h, exp-scores) + approx EUP reciprocal.
    assert jnp.allclose(out, ref, atol=3e-2, rtol=3e-2), (out, ref)

    print("KERNEL_OK")
</pallas_src>

<mosaic_0001>
module attributes {stable_mosaic.version = 11 : i64} {
  func.func @gat2_fused_kernel(%arg0: i32, %arg1: i32, %arg2: memref<1x128x64xbf16, #tpu.memory_space<vmem>>, %arg3: memref<1x128x128xi8, #tpu.memory_space<vmem>>, %arg4: memref<64x128xbf16, #tpu.memory_space<vmem>>, %arg5: memref<8x128xbf16, #tpu.memory_space<vmem>>, %arg6: memref<128x8xf32, #tpu.memory_space<vmem>>, %arg7: memref<1x8xf32, #tpu.memory_space<vmem>>, %arg8: memref<1x1x8xf32, #tpu.memory_space<vmem>>, %arg9: memref<128x128xbf16, #tpu.memory_space<vmem>>, %arg10: memref<4x128xf32, #tpu.memory_space<vmem>>, %arg11: memref<1x128xf32, #tpu.memory_space<vmem>>) attributes {dimension_semantics = [#tpu.dimension_semantics<parallel>, #tpu.dimension_semantics<arbitrary>], iteration_bounds = array<i64: 2, 1>, scalar_prefetch = 0 : i64, scratch_operands = 3 : i64, tpu.core_type = #tpu.core_type<tc>, window_params = [{transform_indices = @transform_0, window_bounds = array<i64: 1, 128, 64>}, {transform_indices = @transform_1, window_bounds = array<i64: 1, 128, 128>}, {pipeline_mode = #tpu.pipeline_mode<synchronous>, transform_indices = @transform_2, window_bounds = array<i64: 64, 128>}, {pipeline_mode = #tpu.pipeline_mode<synchronous>, transform_indices = @transform_3, window_bounds = array<i64: 8, 128>}, {pipeline_mode = #tpu.pipeline_mode<synchronous>, transform_indices = @transform_4, window_bounds = array<i64: 128, 8>}, {pipeline_mode = #tpu.pipeline_mode<synchronous>, transform_indices = @transform_5, window_bounds = array<i64: 1, 8>}, {transform_indices = @transform_6, window_bounds = array<i64: 1, 1, 8>}]} {
    %c0 = arith.constant 0 : index
    %c0_0 = arith.constant 0 : index
    %0 = vector.load %arg5[%c0, %c0_0] : memref<8x128xbf16, #tpu.memory_space<vmem>>, vector<8x128xbf16>
    %1 = vector.extract_strided_slice %0 {offsets = [0, 0], sizes = [4, 128], strides = [1, 1]} : vector<8x128xbf16> to vector<4x128xbf16>
    %2 = vector.extract_strided_slice %0 {offsets = [4, 0], sizes = [4, 128], strides = [1, 1]} : vector<8x128xbf16> to vector<4x128xbf16>
    %c0_i32 = arith.constant 0 : i32
    %3 = arith.cmpi eq, %arg1, %c0_i32 : i32
    %4 = arith.extui %3 : i1 to i32
    %c0_i32_1 = arith.constant 0 : i32
    %5 = arith.cmpi ne, %4, %c0_i32_1 : i32
    scf.if %5 {
      %c0_61 = arith.constant 0 : index
      %c0_62 = arith.constant 0 : index
      %c0_63 = arith.constant 0 : index
      %164 = vector.load %arg2[%c0_61, %c0_62, %c0_63] : memref<1x128x64xbf16, #tpu.memory_space<vmem>>, vector<1x128x64xbf16>
      %165 = vector.shape_cast %164 : vector<1x128x64xbf16> to vector<128x64xbf16>
      %c0_64 = arith.constant 0 : index
      %c0_65 = arith.constant 0 : index
      %166 = vector.load %arg4[%c0_64, %c0_65] : memref<64x128xbf16, #tpu.memory_space<vmem>>, vector<64x128xbf16>
      %cst_66 = arith.constant dense<0.000000e+00> : vector<128x128xf32>
      %167 = tpu.matmul %165, %166, %cst_66 {dimension_numbers = #tpu.dot_dimension_numbers<[1], [0], [0], [1], [0, 0, 1, 1], [], []>} : vector<128x64xbf16>, vector<64x128xbf16>, vector<128x128xf32> -> vector<128x128xf32>
      %168 = arith.truncf %167 : vector<128x128xf32> to vector<128x128xbf16>
      %c0_67 = arith.constant 0 : index
      %c0_68 = arith.constant 0 : index
      %169 = vector.load %arg9[%c0_67, %c0_68] : memref<128x128xbf16, #tpu.memory_space<vmem>>, vector<128x128xbf16>
      tpu.vector_store %arg9[%c0_67, %c0_68], %168 {strides = array<i32>} : memref<128x128xbf16, #tpu.memory_space<vmem>>, vector<128x128xbf16>,
      %cst_69 = arith.constant dense<0.000000e+00> : vector<4x128xf32>
      %170 = tpu.matmul %2, %168, %cst_69 {dimension_numbers = #tpu.dot_dimension_numbers<[1], [1], [0], [0], [0, 0, 1, 0], [], []>} : vector<4x128xbf16>, vector<128x128xbf16>, vector<4x128xf32> -> vector<4x128xf32>
      %c0_70 = arith.constant 0 : index
      %c0_71 = arith.constant 0 : index
      %171 = vector.load %arg10[%c0_70, %c0_71] : memref<4x128xf32, #tpu.memory_space<vmem>>, vector<4x128xf32>
      tpu.vector_store %arg10[%c0_70, %c0_71], %170 {strides = array<i32>} : memref<4x128xf32, #tpu.memory_space<vmem>>, vector<4x128xf32>,
      %cst_72 = arith.constant 0.000000e+00 : f32
      %172 = vector.broadcast %cst_72 : f32 to vector<1x128xf32>
      %c0_73 = arith.constant 0 : index
      %c0_74 = arith.constant 0 : index
      %173 = vector.load %arg11[%c0_73, %c0_74] : memref<1x128xf32, #tpu.memory_space<vmem>>, vector<1x128xf32>
      tpu.vector_store %arg11[%c0_73, %c0_74], %172 {strides = array<i32>} : memref<1x128xf32, #tpu.memory_space<vmem>>, vector<1x128xf32>,
    } else {
    }
    %c128_i32 = arith.constant 128 : i32
    %6 = arith.muli %arg1, %c128_i32 : i32
    %7 = tpu.assume_multiple %6, 128 : i32
    %c0_2 = arith.constant 0 : index
    %c0_3 = arith.constant 0 : index
    %8 = vector.load %arg9[%c0_2, %c0_3] : memref<128x128xbf16, #tpu.memory_space<vmem>>, vector<128x128xbf16>
    %9 = arith.index_cast %7 : i32 to index
    %c0_4 = arith.constant 0 : index
    %10 = vector.load %arg9[%9, %c0_4] : memref<128x128xbf16, #tpu.memory_space<vmem>>, vector<128x128xbf16>
    %cst = arith.constant dense<0.000000e+00> : vector<128x4xf32>
    %11 = tpu.matmul %10, %1, %cst {dimension_numbers = #tpu.dot_dimension_numbers<[1], [1], [0], [0], [0, 0, 1, 0], [], []>} : vector<128x128xbf16>, vector<4x128xbf16>, vector<128x4xf32> -> vector<128x4xf32>
    %c0_5 = arith.constant 0 : index
    %c0_6 = arith.constant 0 : index
    %c0_7 = arith.constant 0 : index
    %12 = vector.load %arg3[%c0_5, %c0_6, %c0_7] : memref<1x128x128xi8, #tpu.memory_space<vmem>>, vector<1x128x128xi8>
    %13 = vector.shape_cast %12 : vector<1x128x128xi8> to vector<128x128xi8>
    %c0_i8 = arith.constant 0 : i8
    %14 = vector.broadcast %c0_i8 : i8 to vector<128x128xi8>
    %15 = arith.cmpi ne, %13, %14 : vector<128x128xi8>
    %c0_8 = arith.constant 0 : index
    %c0_9 = arith.constant 0 : index
    %16 = vector.load %arg10[%c0_8, %c0_9] : memref<4x128xf32, #tpu.memory_space<vmem>>, vector<4x128xf32>
    %17 = vector.extract_strided_slice %11 {offsets = [0, 0], sizes = [128, 1], strides = [1, 1]} : vector<128x4xf32> to vector<128x1xf32>
    %18 = vector.extract_strided_slice %16 {offsets = [0, 0], sizes = [1, 128], strides = [1, 1]} : vector<4x128xf32> to vector<1x128xf32>
    %19 = vector.broadcast %17 : vector<128x1xf32> to vector<128x128xf32>
    %20 = vector.broadcast %18 : vector<1x128xf32> to vector<128x128xf32>
    %21 = arith.addf %19, %20 : vector<128x128xf32>
    %cst_10 = arith.constant 2.000000e-01 : f32
    %22 = vector.broadcast %cst_10 : f32 to vector<128x128xf32>
    %23 = arith.mulf %22, %21 : vector<128x128xf32>
    %24 = arith.maximumf %21, %23 : vector<128x128xf32>
    %cst_11 = arith.constant -9.000000e+15 : f32
    %25 = vector.broadcast %cst_11 : f32 to vector<128x128xf32>
    %26 = arith.select %15, %24, %25 : vector<128x128xi1>, vector<128x128xf32>
    %cst_12 = arith.constant dense<0xFF800000> : vector<128xf32>
    %27 = vector.multi_reduction <maximumf>, %26, %cst_12 [1] : vector<128x128xf32> to vector<128xf32>
    %28 = vector.shape_cast %27 : vector<128xf32> to vector<128x1xf32>
    %29 = vector.broadcast %28 : vector<128x1xf32> to vector<128x128xf32>
    %30 = arith.subf %26, %29 : vector<128x128xf32>
    %31 = math.exp %30 : vector<128x128xf32>
    %cst_13 = arith.constant dense<0.000000e+00> : vector<128xf32>
    %32 = vector.multi_reduction <add>, %31, %cst_13 [1] : vector<128x128xf32> to vector<128xf32>
    %33 = vector.shape_cast %32 : vector<128xf32> to vector<128x1xf32>
    %34 = vector.extract_strided_slice %8 {offsets = [0, 0], sizes = [128, 32], strides = [1, 1]} : vector<128x128xbf16> to vector<128x32xbf16>
    %35 = arith.truncf %31 : vector<128x128xf32> to vector<128x128xbf16>
    %cst_14 = arith.constant dense<0.000000e+00> : vector<128x32xf32>
    %36 = tpu.matmul %35, %34, %cst_14 {dimension_numbers = #tpu.dot_dimension_numbers<[1], [0], [0], [1], [0, 0, 1, 1], [], []>} : vector<128x128xbf16>, vector<128x32xbf16>, vector<128x32xf32> -> vector<128x32xf32>
    %37 = tpu.reciprocal %33 {approx = true} : vector<128x1xf32> -> vector<128x1xf32>
    %38 = vector.broadcast %37 : vector<128x1xf32> to vector<128x32xf32>
    %39 = arith.mulf %36, %38 : vector<128x32xf32>
    %cst_15 = arith.constant 0.000000e+00 : f32
    %40 = vector.broadcast %cst_15 : f32 to vector<128x32xf32>
    %41 = arith.cmpf ogt, %39, %40 : vector<128x32xf32>
    %cst_16 = arith.constant 0.000000e+00 : f32
    %42 = vector.broadcast %cst_16 : f32 to vector<128x32xf32>
    %43 = arith.minimumf %39, %42 : vector<128x32xf32>
    %44 = math.exp %43 : vector<128x32xf32>
    %cst_17 = arith.constant 1.000000e+00 : f32
    %45 = vector.broadcast %cst_17 : f32 to vector<128x32xf32>
    %46 = arith.subf %44, %45 : vector<128x32xf32>
    %47 = arith.select %41, %39, %46 : vector<128x32xi1>, vector<128x32xf32>
    %c0_18 = arith.constant 0 : index
    %c0_19 = arith.constant 0 : index
    %48 = vector.load %arg11[%c0_18, %c0_19] : memref<1x128xf32, #tpu.memory_space<vmem>>, vector<1x32xf32>
    %cst_20 = arith.constant dense<0.000000e+00> : vector<32xf32>
    %49 = vector.multi_reduction <add>, %47, %cst_20 [0] : vector<128x32xf32> to vector<32xf32>
    %50 = vector.shape_cast %49 : vector<32xf32> to vector<1x32xf32>
    %51 = arith.addf %48, %50 : vector<1x32xf32>
    %c0_21 = arith.constant 0 : index
    %c0_22 = arith.constant 0 : index
    %52 = vector.load %arg11[%c0_21, %c0_22] : memref<1x128xf32, #tpu.memory_space<vmem>>, vector<1x32xf32>
    tpu.vector_store %arg11[%c0_21, %c0_22], %51 {strides = array<i32>} : memref<1x128xf32, #tpu.memory_space<vmem>>, vector<1x32xf32>,
    %53 = vector.extract_strided_slice %11 {offsets = [0, 1], sizes = [128, 1], strides = [1, 1]} : vector<128x4xf32> to vector<128x1xf32>
    %54 = vector.extract_strided_slice %16 {offsets = [1, 0], sizes = [1, 128], strides = [1, 1]} : vector<4x128xf32> to vector<1x128xf32>
    %55 = vector.broadcast %53 : vector<128x1xf32> to vector<128x128xf32>
    %56 = vector.broadcast %54 : vector<1x128xf32> to vector<128x128xf32>
    %57 = arith.addf %55, %56 : vector<128x128xf32>
    %cst_23 = arith.constant 2.000000e-01 : f32
    %58 = vector.broadcast %cst_23 : f32 to vector<128x128xf32>
    %59 = arith.mulf %58, %57 : vector<128x128xf32>
    %60 = arith.maximumf %57, %59 : vector<128x128xf32>
    %cst_24 = arith.constant -9.000000e+15 : f32
    %61 = vector.broadcast %cst_24 : f32 to vector<128x128xf32>
    %62 = arith.select %15, %60, %61 : vector<128x128xi1>, vector<128x128xf32>
    %cst_25 = arith.constant dense<0xFF800000> : vector<128xf32>
    %63 = vector.multi_reduction <maximumf>, %62, %cst_25 [1] : vector<128x128xf32> to vector<128xf32>
    %64 = vector.shape_cast %63 : vector<128xf32> to vector<128x1xf32>
    %65 = vector.broadcast %64 : vector<128x1xf32> to vector<128x128xf32>
    %66 = arith.subf %62, %65 : vector<128x128xf32>
    %67 = math.exp %66 : vector<128x128xf32>
    %cst_26 = arith.constant dense<0.000000e+00> : vector<128xf32>
    %68 = vector.multi_reduction <add>, %67, %cst_26 [1] : vector<128x128xf32> to vector<128xf32>
    %69 = vector.shape_cast %68 : vector<128xf32> to vector<128x1xf32>
    %70 = vector.extract_strided_slice %8 {offsets = [0, 32], sizes = [128, 32], strides = [1, 1]} : vector<128x128xbf16> to vector<128x32xbf16>
    %71 = arith.truncf %67 : vector<128x128xf32> to vector<128x128xbf16>
    %cst_27 = arith.constant dense<0.000000e+00> : vector<128x32xf32>
    %72 = tpu.matmul %71, %70, %cst_27 {dimension_numbers = #tpu.dot_dimension_numbers<[1], [0], [0], [1], [0, 0, 1, 1], [], []>} : vector<128x128xbf16>, vector<128x32xbf16>, vector<128x32xf32> -> vector<128x32xf32>
    %73 = tpu.reciprocal %69 {approx = true} : vector<128x1xf32> -> vector<128x1xf32>
    %74 = vector.broadcast %73 : vector<128x1xf32> to vector<128x32xf32>
    %75 = arith.mulf %72, %74 : vector<128x32xf32>
    %cst_28 = arith.constant 0.000000e+00 : f32
    %76 = vector.broadcast %cst_28 : f32 to vector<128x32xf32>
    %77 = arith.cmpf ogt, %75, %76 : vector<128x32xf32>
    %cst_29 = arith.constant 0.000000e+00 : f32
    %78 = vector.broadcast %cst_29 : f32 to vector<128x32xf32>
    %79 = arith.minimumf %75, %78 : vector<128x32xf32>
    %80 = math.exp %79 : vector<128x32xf32>
    %cst_30 = arith.constant 1.000000e+00 : f32
    %81 = vector.broadcast %cst_30 : f32 to vector<128x32xf32>
    %82 = arith.subf %80, %81 : vector<128x32xf32>
    %83 = arith.select %77, %75, %82 : vector<128x32xi1>, vector<128x32xf32>
    %c0_31 = arith.constant 0 : index
    %c32 = arith.constant 32 : index
    %84 = vector.load %arg11[%c0_31, %c32] : memref<1x128xf32, #tpu.memory_space<vmem>>, vector<1x32xf32>
    %cst_32 = arith.constant dense<0.000000e+00> : vector<32xf32>
    %85 = vector.multi_reduction <add>, %83, %cst_32 [0] : vector<128x32xf32> to vector<32xf32>
    %86 = vector.shape_cast %85 : vector<32xf32> to vector<1x32xf32>
    %87 = arith.addf %84, %86 : vector<1x32xf32>
    %c0_33 = arith.constant 0 : index
    %c32_34 = arith.constant 32 : index
    %88 = vector.load %arg11[%c0_33, %c32_34] : memref<1x128xf32, #tpu.memory_space<vmem>>, vector<1x32xf32>
    tpu.vector_store %arg11[%c0_33, %c32_34], %87 {strides = array<i32>} : memref<1x128xf32, #tpu.memory_space<vmem>>, vector<1x32xf32>,
    %89 = vector.extract_strided_slice %11 {offsets = [0, 2], sizes = [128, 1], strides = [1, 1]} : vector<128x4xf32> to vector<128x1xf32>
    %90 = vector.extract_strided_slice %16 {offsets = [2, 0], sizes = [1, 128], strides = [1, 1]} : vector<4x128xf32> to vector<1x128xf32>
    %91 = vector.broadcast %89 : vector<128x1xf32> to vector<128x128xf32>
    %92 = vector.broadcast %90 : vector<1x128xf32> to vector<128x128xf32>
    %93 = arith.addf %91, %92 : vector<128x128xf32>
    %cst_35 = arith.constant 2.000000e-01 : f32
    %94 = vector.broadcast %cst_35 : f32 to vector<128x128xf32>
    %95 = arith.mulf %94, %93 : vector<128x128xf32>
    %96 = arith.maximumf %93, %95 : vector<128x128xf32>
    %cst_36 = arith.constant -9.000000e+15 : f32
    %97 = vector.broadcast %cst_36 : f32 to vector<128x128xf32>
    %98 = arith.select %15, %96, %97 : vector<128x128xi1>, vector<128x128xf32>
    %cst_37 = arith.constant dense<0xFF800000> : vector<128xf32>
    %99 = vector.multi_reduction <maximumf>, %98, %cst_37 [1] : vector<128x128xf32> to vector<128xf32>
    %100 = vector.shape_cast %99 : vector<128xf32> to vector<128x1xf32>
    %101 = vector.broadcast %100 : vector<128x1xf32> to vector<128x128xf32>
    %102 = arith.subf %98, %101 : vector<128x128xf32>
    %103 = math.exp %102 : vector<128x128xf32>
    %cst_38 = arith.constant dense<0.000000e+00> : vector<128xf32>
    %104 = vector.multi_reduction <add>, %103, %cst_38 [1] : vector<128x128xf32> to vector<128xf32>
    %105 = vector.shape_cast %104 : vector<128xf32> to vector<128x1xf32>
    %106 = vector.extract_strided_slice %8 {offsets = [0, 64], sizes = [128, 32], strides = [1, 1]} : vector<128x128xbf16> to vector<128x32xbf16>
    %107 = arith.truncf %103 : vector<128x128xf32> to vector<128x128xbf16>
    %cst_39 = arith.constant dense<0.000000e+00> : vector<128x32xf32>
    %108 = tpu.matmul %107, %106, %cst_39 {dimension_numbers = #tpu.dot_dimension_numbers<[1], [0], [0], [1], [0, 0, 1, 1], [], []>} : vector<128x128xbf16>, vector<128x32xbf16>, vector<128x32xf32> -> vector<128x32xf32>
    %109 = tpu.reciprocal %105 {approx = true} : vector<128x1xf32> -> vector<128x1xf32>
    %110 = vector.broadcast %109 : vector<128x1xf32> to vector<128x32xf32>
    %111 = arith.mulf %108, %110 : vector<128x32xf32>
    %cst_40 = arith.constant 0.000000e+00 : f32
    %112 = vector.broadcast %cst_40 : f32 to vector<128x32xf32>
    %113 = arith.cmpf ogt, %111, %112 : vector<128x32xf32>
    %cst_41 = arith.constant 0.000000e+00 : f32
    %114 = vector.broadcast %cst_41 : f32 to vector<128x32xf32>
    %115 = arith.minimumf %111, %114 : vector<128x32xf32>
    %116 = math.exp %115 : vector<128x32xf32>
    %cst_42 = arith.constant 1.000000e+00 : f32
    %117 = vector.broadcast %cst_42 : f32 to vector<128x32xf32>
    %118 = arith.subf %116, %117 : vector<128x32xf32>
    %119 = arith.select %113, %111, %118 : vector<128x32xi1>, vector<128x32xf32>
    %c0_43 = arith.constant 0 : index
    %c64 = arith.constant 64 : index
    %120 = vector.load %arg11[%c0_43, %c64] : memref<1x128xf32, #tpu.memory_space<vmem>>, vector<1x32xf32>
    %cst_44 = arith.constant dense<0.000000e+00> : vector<32xf32>
    %121 = vector.multi_reduction <add>, %119, %cst_44 [0] : vector<128x32xf32> to vector<32xf32>
    %122 = vector.shape_cast %121 : vector<32xf32> to vector<1x32xf32>
    %123 = arith.addf %120, %122 : vector<1x32xf32>
    %c0_45 = arith.constant 0 : index
    %c64_46 = arith.constant 64 : index
    %124 = vector.load %arg11[%c0_45, %c64_46] : memref<1x128xf32, #tpu.memory_space<vmem>>, vector<1x32xf32>
    tpu.vector_store %arg11[%c0_45, %c64_46], %123 {strides = array<i32>} : memref<1x128xf32, #tpu.memory_space<vmem>>, vector<1x32xf32>,
    %125 = vector.extract_strided_slice %11 {offsets = [0, 3], sizes = [128, 1], strides = [1, 1]} : vector<128x4xf32> to vector<128x1xf32>
    %126 = vector.extract_strided_slice %16 {offsets = [3, 0], sizes = [1, 128], strides = [1, 1]} : vector<4x128xf32> to vector<1x128xf32>
    %127 = vector.broadcast %125 : vector<128x1xf32> to vector<128x128xf32>
    %128 = vector.broadcast %126 : vector<1x128xf32> to vector<128x128xf32>
    %129 = arith.addf %127, %128 : vector<128x128xf32>
    %cst_47 = arith.constant 2.000000e-01 : f32
    %130 = vector.broadcast %cst_47 : f32 to vector<128x128xf32>
    %131 = arith.mulf %130, %129 : vector<128x128xf32>
    %132 = arith.maximumf %129, %131 : vector<128x128xf32>
    %cst_48 = arith.constant -9.000000e+15 : f32
    %133 = vector.broadcast %cst_48 : f32 to vector<128x128xf32>
    %134 = arith.select %15, %132, %133 : vector<128x128xi1>, vector<128x128xf32>
    %cst_49 = arith.constant dense<0xFF800000> : vector<128xf32>
    %135 = vector.multi_reduction <maximumf>, %134, %cst_49 [1] : vector<128x128xf32> to vector<128xf32>
    %136 = vector.shape_cast %135 : vector<128xf32> to vector<128x1xf32>
    %137 = vector.broadcast %136 : vector<128x1xf32> to vector<128x128xf32>
    %138 = arith.subf %134, %137 : vector<128x128xf32>
    %139 = math.exp %138 : vector<128x128xf32>
    %cst_50 = arith.constant dense<0.000000e+00> : vector<128xf32>
    %140 = vector.multi_reduction <add>, %139, %cst_50 [1] : vector<128x128xf32> to vector<128xf32>
    %141 = vector.shape_cast %140 : vector<128xf32> to vector<128x1xf32>
    %142 = vector.extract_strided_slice %8 {offsets = [0, 96], sizes = [128, 32], strides = [1, 1]} : vector<128x128xbf16> to vector<128x32xbf16>
    %143 = arith.truncf %139 : vector<128x128xf32> to vector<128x128xbf16>
    %cst_51 = arith.constant dense<0.000000e+00> : vector<128x32xf32>
    %144 = tpu.matmul %143, %142, %cst_51 {dimension_numbers = #tpu.dot_dimension_numbers<[1], [0], [0], [1], [0, 0, 1, 1], [], []>} : vector<128x128xbf16>, vector<128x32xbf16>, vector<128x32xf32> -> vector<128x32xf32>
    %145 = tpu.reciprocal %141 {approx = true} : vector<128x1xf32> -> vector<128x1xf32>
    %146 = vector.broadcast %145 : vector<128x1xf32> to vector<128x32xf32>
    %147 = arith.mulf %144, %146 : vector<128x32xf32>
    %cst_52 = arith.constant 0.000000e+00 : f32
    %148 = vector.broadcast %cst_52 : f32 to vector<128x32xf32>
    %149 = arith.cmpf ogt, %147, %148 : vector<128x32xf32>
    %cst_53 = arith.constant 0.000000e+00 : f32
    %150 = vector.broadcast %cst_53 : f32 to vector<128x32xf32>
    %151 = arith.minimumf %147, %150 : vector<128x32xf32>
    %152 = math.exp %151 : vector<128x32xf32>
    %cst_54 = arith.constant 1.000000e+00 : f32
    %153 = vector.broadcast %cst_54 : f32 to vector<128x32xf32>
    %154 = arith.subf %152, %153 : vector<128x32xf32>
    %155 = arith.select %149, %147, %154 : vector<128x32xi1>, vector<128x32xf32>
    %c0_55 = arith.constant 0 : index
    %c96 = arith.constant 96 : index
    %156 = vector.load %arg11[%c0_55, %c96] : memref<1x128xf32, #tpu.memory_space<vmem>>, vector<1x32xf32>
    %cst_56 = arith.constant dense<0.000000e+00> : vector<32xf32>
    %157 = vector.multi_reduction <add>, %155, %cst_56 [0] : vector<128x32xf32> to vector<32xf32>
    %158 = vector.shape_cast %157 : vector<32xf32> to vector<1x32xf32>
    %159 = arith.addf %156, %158 : vector<1x32xf32>
    %c0_57 = arith.constant 0 : index
    %c96_58 = arith.constant 96 : index
    %160 = vector.load %arg11[%c0_57, %c96_58] : memref<1x128xf32, #tpu.memory_space<vmem>>, vector<1x32xf32>
    tpu.vector_store %arg11[%c0_57, %c96_58], %159 {strides = array<i32>} : memref<1x128xf32, #tpu.memory_space<vmem>>, vector<1x32xf32>,
    %c0_i32_59 = arith.constant 0 : i32
    %161 = arith.cmpi eq, %arg1, %c0_i32_59 : i32
    %162 = arith.extui %161 : i1 to i32
    %c0_i32_60 = arith.constant 0 : i32
    %163 = arith.cmpi ne, %162, %c0_i32_60 : i32
    scf.if %163 {
      %c0_61 = arith.constant 0 : index
      %c0_62 = arith.constant 0 : index
      %164 = vector.load %arg11[%c0_61, %c0_62] : memref<1x128xf32, #tpu.memory_space<vmem>>, vector<1x128xf32>
      %cst_63 = arith.constant 7.812500e-03 : f32
      %165 = vector.broadcast %cst_63 : f32 to vector<1x128xf32>
      %166 = arith.mulf %164, %165 : vector<1x128xf32>
      %c0_64 = arith.constant 0 : index
      %c0_65 = arith.constant 0 : index
      %167 = vector.load %arg6[%c0_64, %c0_65] : memref<128x8xf32, #tpu.memory_space<vmem>>, vector<128x8xf32>
      %cst_66 = arith.constant dense<0.000000e+00> : vector<1x8xf32>
      %168 = tpu.matmul %166, %167, %cst_66 {dimension_numbers = #tpu.dot_dimension_numbers<[1], [0], [0], [1], [0, 0, 1, 1], [], []>} : vector<1x128xf32>, vector<128x8xf32>, vector<1x8xf32> -> vector<1x8xf32>
      %c0_67 = arith.constant 0 : index
      %c0_68 = arith.constant 0 : index
      %169 = vector.load %arg7[%c0_67, %c0_68] : memref<1x8xf32, #tpu.memory_space<vmem>>, vector<1x8xf32>
      %170 = arith.addf %168, %169 : vector<1x8xf32>
      %cst_69 = arith.constant 0.000000e+00 : f32
      %171 = vector.broadcast %cst_69 : f32 to vector<1x8xf32>
      %172 = arith.cmpf ogt, %170, %171 : vector<1x8xf32>
      %cst_70 = arith.constant 0.000000e+00 : f32
      %173 = vector.broadcast %cst_70 : f32 to vector<1x8xf32>
      %174 = arith.minimumf %170, %173 : vector<1x8xf32>
      %175 = math.exp %174 : vector<1x8xf32>
      %cst_71 = arith.constant 1.000000e+00 : f32
      %176 = vector.broadcast %cst_71 : f32 to vector<1x8xf32>
      %177 = arith.subf %175, %176 : vector<1x8xf32>
      %178 = arith.select %172, %170, %177 : vector<1x8xi1>, vector<1x8xf32>
      %cst_72 = arith.constant dense<0xFF800000> : vector<1xf32>
      %179 = vector.multi_reduction <maximumf>, %178, %cst_72 [1] : vector<1x8xf32> to vector<1xf32>
      %180 = vector.shape_cast %179 : vector<1xf32> to vector<1x1xf32>
      %181 = vector.broadcast %180 : vector<1x1xf32> to vector<1x8xf32>
      %182 = arith.subf %178, %181 : vector<1x8xf32>
      %183 = math.exp %182 : vector<1x8xf32>
      %cst_73 = arith.constant dense<0.000000e+00> : vector<1xf32>
      %184 = vector.multi_reduction <add>, %183, %cst_73 [1] : vector<1x8xf32> to vector<1xf32>
      %185 = vector.shape_cast %184 : vector<1xf32> to vector<1x1xf32>
      %186 = math.log %185 : vector<1x1xf32>
      %187 = vector.broadcast %186 : vector<1x1xf32> to vector<1x8xf32>
      %188 = arith.subf %182, %187 : vector<1x8xf32>
      %c0_74 = arith.constant 0 : index
      %c0_75 = arith.constant 0 : index
      %c0_76 = arith.constant 0 : index
      %189 = vector.load %arg8[%c0_74, %c0_75, %c0_76] : memref<1x1x8xf32, #tpu.memory_space<vmem>>, vector<1x1x8xf32>
      %190 = vector.shape_cast %189 : vector<1x1x8xf32> to vector<1x8xf32>
      %191 = vector.shape_cast %188 : vector<1x8xf32> to vector<1x1x8xf32>
      tpu.vector_store %arg8[%c0_74, %c0_75, %c0_76], %191 {strides = array<i32>} : memref<1x1x8xf32, #tpu.memory_space<vmem>>, vector<1x1x8xf32>,
    } else {
    }
    return
  }
  func.func @transform_0(%arg0: i32, %arg1: i32) -> (i32, i32, i32) {
    %c0_i32 = arith.constant 0 : i32
    %c0_i32_0 = arith.constant 0 : i32
    %c0_i32_1 = arith.constant 0 : i32
    return %arg0, %c0_i32, %c0_i32_0 : i32, i32, i32
  }
  func.func @transform_1(%arg0: i32, %arg1: i32) -> (i32, i32, i32) {
    %c0_i32 = arith.constant 0 : i32
    %c0_i32_0 = arith.constant 0 : i32
    return %arg0, %arg1, %c0_i32 : i32, i32, i32
  }
  func.func @transform_2(%arg0: i32, %arg1: i32) -> (i32, i32) {
    %c0_i32 = arith.constant 0 : i32
    %c0_i32_0 = arith.constant 0 : i32
    %c0_i32_1 = arith.constant 0 : i32
    return %c0_i32, %c0_i32_0 : i32, i32
  }
  func.func @transform_3(%arg0: i32, %arg1: i32) -> (i32, i32) {
    %c0_i32 = arith.constant 0 : i32
    %c0_i32_0 = arith.constant 0 : i32
    %c0_i32_1 = arith.constant 0 : i32
    return %c0_i32, %c0_i32_0 : i32, i32
  }
  func.func @transform_4(%arg0: i32, %arg1: i32) -> (i32, i32) {
    %c0_i32 = arith.constant 0 : i32
    %c0_i32_0 = arith.constant 0 : i32
    %c0_i32_1 = arith.constant 0 : i32
    return %c0_i32, %c0_i32_0 : i32, i32
  }
  func.func @transform_5(%arg0: i32, %arg1: i32) -> (i32, i32) {
    %c0_i32 = arith.constant 0 : i32
    %c0_i32_0 = arith.constant 0 : i32
    %c0_i32_1 = arith.constant 0 : i32
    return %c0_i32, %c0_i32_0 : i32, i32
  }
  func.func @transform_6(%arg0: i32, %arg1: i32) -> (i32, i32, i32) {
    %c0_i32 = arith.constant 0 : i32
    %c0_i32_0 = arith.constant 0 : i32
    %c0_i32_1 = arith.constant 0 : i32
    return %arg0, %c0_i32, %c0_i32_0 : i32, i32, i32
  }
}

</mosaic_0001>

<llo_original>
// kernel: tpu_custom_call.1
$region0: #{tpu_custom_call.1}
  #allocation0 [shape = 'u32[]', space=smem, size = 0x4, offset = 0x4, fixed_abs, tag = 'smem constant byte address 0x4 - core index']
  #allocation1 [shape = 'u32[144,128]{1,0:T(1,128)}', space=vmem, size = 0x12000, scoped, tag = 'internal scratch']
  #allocation2 [shape = 'bf16[128,128]{1,0:T(16,128)(2,1)}', space=vmem, size = 0x8000, scoped, tag = 'scratch operand']
  #allocation3 [shape = 'f32[4,128]{1,0:T(4,128)}', space=vmem, size = 0x800, scoped, tag = 'scratch operand']
  #allocation4 [shape = 'f32[1,128]{1,0:T(1,128)}', space=vmem, size = 0x200, scoped, tag = 'scratch operand']
  %s0 = inlined_call_operand.vmem [shape: bf16[2,128,64], index: 0, kind: input, shape index: {}]
  %s1 = inlined_call_operand.vmem [shape: s8[2,128,128], index: 1, kind: input, shape index: {}]
  %s2 = inlined_call_operand.vmem [shape: bf16[64,128], index: 2, kind: input, shape index: {}]
  %s3 = inlined_call_operand.vmem [shape: bf16[8,128], index: 3, kind: input, shape index: {}]
  %s4 = inlined_call_operand.vmem [shape: f32[128,8], index: 4, kind: input, shape index: {}]
  %s5 = inlined_call_operand.vmem [shape: f32[1,8], index: 5, kind: input, shape index: {}]
  %s6 = inlined_call_operand.hbm [shape: f32[2,1,8], index: 6, kind: output, shape index: {}]
  %s7 = sld [smem:[#allocation0]]
  $region65: #{tpu_custom_call.1} parent=0
    _
  %s9 = ssub.s32 1, %s7
  %s10 = scalar_select 0, %s9, %s7
  $region1: #{tpu_custom_call.1} parent=0
    #allocation5 [shape = 'u8[1024]{0}', space=vmem, size = 0x400, scoped, tag = 'output window, operand 0']
    #allocation6 [shape = 's32[2]{0}', space=sflag, size = 0x8, scoped, tag = 'scoped memory for tpu_custom_call.1']
    %11 = vsyncpa [#allocation6], 0
    %s12 = scalar_lea.sflag [#allocation6], 1
    %13 = vsyncpa %s12, 0
    loop: start=0, step=1, limit=4
    $region2: #{tpu_custom_call.1} parent=1 // loop_pre_header
      _
    $region3: #{tpu_custom_call.1} parent=1 // loop_header
      %s15 = sphi 0, %s19
      %p16 = scmp.ge.s32.totalorder %s15, 4
      %s22 = sphi 0, %s34
      %s23 = sphi 0, %s30
      %s24 = sphi 0, %s22
      %s25 = sphi 0, %s23
      %s26 = sphi 0, %s24
      %s27 = sphi 0, %s25
      %s37 = sphi 0, %s39
      %s40 = sphi 0, %s37
      %s41 = sphi 0, %s40
      %s57 = sphi 0, %s41
      %s65 = sphi 0, %s67
      %s68 = sphi 0, %s65
      %s69 = sphi 0, %s68
      %s85 = sphi 0, %s69
      %s89 = sphi 0, %s89
      %s91 = sphi 0, %s89
      %s92 = sphi 0, %s91
      %s106 = sphi 0, %s92
      %s110 = sphi 0, %s110
      %s112 = sphi 0, %s110
      %s113 = sphi 0, %s112
      %s127 = sphi 0, %s113
      %s131 = sphi 0, %s131
      %s133 = sphi 0, %s131
      %s134 = sphi 0, %s133
      %s148 = sphi 0, %s134
      %s152 = sphi 0, %s152
      %s154 = sphi 0, %s152
      %s155 = sphi 0, %s154
      %s169 = sphi 0, %s155
      %s175 = sphi 0, %s177
      %s178 = sphi 0, %s175
      %s179 = sphi 0, %s178
      %s195 = sphi 0, %s179
    $region4: #{tpu_custom_call.1} parent=1 // loop_header_branch
      %18 = sbr.rel (%p16) target = $region8
    $region5: #{tpu_custom_call.1} parent=1 // loop_body
      %s20 = ssub.s32 %s15, 1
      %s21 = ssub.s32 %s15, 2
      %s28 = sadd.s32 1, %s23
      %p29 = scmp.ge.s32.totalorder %s28, 1
      %s30 = scalar_select %p29, 0, %s28
      %s31 = sadd.s32 1, %s22
      %s32 = scalar_select %p29, %s31, %s22
      %p33 = scmp.ge.s32.totalorder %s32, 2
      %s34 = scalar_select %p33, 0, %s32
      %s35 = ssub.s32 %s22, %s34
      %p36 = scmp.eq.s32.totalorder %s35, 0
      %s38 = sadd.s32 %s37, 1
      %s39 = scalar_select %p36, %s37, %s38
      %p42 = pneg %p36
      %p43 = scmp.eq.s32.totalorder %s15, 1
      %p44 = por %p42, %p43
      %p45 = scmp.ne.s32.totalorder %s37, %s40
      %p46 = scmp.eq.s32.totalorder %s15, 0
      %p47 = por %p45, %p46
      %p48 = scmp.ne.s32.totalorder %s37, %s40
      %p49 = scmp.eq.s32.totalorder %s20, 1
      %p50 = por %p48, %p49
      %p51 = scmp.ne.s32.totalorder %s40, %s41
      %p52 = scmp.eq.s32.totalorder %s20, 0
      %p53 = por %p51, %p52
      %p54 = scmp.ne.s32.totalorder %s40, %s41
      %p55 = scmp.eq.s32.totalorder %s21, 1
      %p56 = por %p54, %p55
      %p58 = scmp.ne.s32.totalorder %s41, %s57
      %p59 = scmp.eq.s32.totalorder %s21, 0
      %p60 = por %p58, %p59
      %s61 = ssub.s32 %s22, %s34
      %s62 = ssub.s32 %s23, %s30
      %s63 = sor.u32 %s61, %s62
      %p64 = scmp.eq.s32.totalorder %s63, 0
      %s66 = sadd.s32 %s65, 1
      %s67 = scalar_select %p64, %s65, %s66
      %p70 = pneg %p64
      %p71 = scmp.eq.s32.totalorder %s15, 1
      %p72 = por %p70, %p71
      %p73 = scmp.ne.s32.totalorder %s65, %s68
      %p74 = scmp.eq.s32.totalorder %s15, 0
      %p75 = por %p73, %p74
      %p76 = scmp.ne.s32.totalorder %s65, %s68
      %p77 = scmp.eq.s32.totalorder %s20, 1
      %p78 = por %p76, %p77
      %p79 = scmp.ne.s32.totalorder %s68, %s69
      %p80 = scmp.eq.s32.totalorder %s20, 0
      %p81 = por %p79, %p80
      %p82 = scmp.ne.s32.totalorder %s68, %s69
      %p83 = scmp.eq.s32.totalorder %s21, 1
      %p84 = por %p82, %p83
      %p86 = scmp.ne.s32.totalorder %s69, %s85
      %p87 = scmp.eq.s32.totalorder %s21, 0
      %p88 = por %p86, %p87
      %s90 = sadd.s32 %s89, 1
      %p93 = scmp.eq.s32.totalorder %s15, 1
      %p94 = scmp.ne.s32.totalorder %s89, %s91
      %p95 = scmp.eq.s32.totalorder %s15, 0
      %p96 = por %p94, %p95
      %p97 = scmp.ne.s32.totalorder %s89, %s91
      %p98 = scmp.eq.s32.totalorder %s20, 1
      %p99 = por %p97, %p98
      %p100 = scmp.ne.s32.totalorder %s91, %s92
      %p101 = scmp.eq.s32.totalorder %s20, 0
      %p102 = por %p100, %p101
      %p103 = scmp.ne.s32.totalorder %s91, %s92
      %p104 = scmp.eq.s32.totalorder %s21, 1
      %p105 = por %p103, %p104
      %p107 = scmp.ne.s32.totalorder %s92, %s106
      %p108 = scmp.eq.s32.totalorder %s21, 0
      %p109 = por %p107, %p108
      %s111 = sadd.s32 %s110, 1
      %p114 = scmp.eq.s32.totalorder %s15, 1
      %p115 = scmp.ne.s32.totalorder %s110, %s112
      %p116 = scmp.eq.s32.totalorder %s15, 0
      %p117 = por %p115, %p116
      %p118 = scmp.ne.s32.totalorder %s110, %s112
      %p119 = scmp.eq.s32.totalorder %s20, 1
      %p120 = por %p118, %p119
      %p121 = scmp.ne.s32.totalorder %s112, %s113
      %p122 = scmp.eq.s32.totalorder %s20, 0
      %p123 = por %p121, %p122
      %p124 = scmp.ne.s32.totalorder %s112, %s113
      %p125 = scmp.eq.s32.totalorder %s21, 1
      %p126 = por %p124, %p125
      %p128 = scmp.ne.s32.totalorder %s113, %s127
      %p129 = scmp.eq.s32.totalorder %s21, 0
      %p130 = por %p128, %p129
      %s132 = sadd.s32 %s131, 1
      %p135 = scmp.eq.s32.totalorder %s15, 1
      %p136 = scmp.ne.s32.totalorder %s131, %s133
      %p137 = scmp.eq.s32.totalorder %s15, 0
      %p138 = por %p136, %p137
      %p139 = scmp.ne.s32.totalorder %s131, %s133
      %p140 = scmp.eq.s32.totalorder %s20, 1
      %p141 = por %p139, %p140
      %p142 = scmp.ne.s32.totalorder %s133, %s134
      %p143 = scmp.eq.s32.totalorder %s20, 0
      %p144 = por %p142, %p143
      %p145 = scmp.ne.s32.totalorder %s133, %s134
      %p146 = scmp.eq.s32.totalorder %s21, 1
      %p147 = por %p145, %p146
      %p149 = scmp.ne.s32.totalorder %s134, %s148
      %p150 = scmp.eq.s32.totalorder %s21, 0
      %p151 = por %p149, %p150
      %s153 = sadd.s32 %s152, 1
      %p156 = scmp.eq.s32.totalorder %s15, 1
      %p157 = scmp.ne.s32.totalorder %s152, %s154
      %p158 = scmp.eq.s32.totalorder %s15, 0
      %p159 = por %p157, %p158
      %p160 = scmp.ne.s32.totalorder %s152, %s154
      %p161 = scmp.eq.s32.totalorder %s20, 1
      %p162 = por %p160, %p161
      %p163 = scmp.ne.s32.totalorder %s154, %s155
      %p164 = scmp.eq.s32.totalorder %s20, 0
      %p165 = por %p163, %p164
      %p166 = scmp.ne.s32.totalorder %s154, %s155
      %p167 = scmp.eq.s32.totalorder %s21, 1
      %p168 = por %p166, %p167
      %p170 = scmp.ne.s32.totalorder %s155, %s169
      %p171 = scmp.eq.s32.totalorder %s21, 0
      %p172 = por %p170, %p171
      %s173 = ssub.s32 %s22, %s34
      %p174 = scmp.eq.s32.totalorder %s173, 0
      %s176 = sadd.s32 %s175, 1
      %s177 = scalar_select %p174, %s175, %s176
      %p180 = pneg %p174
      %p181 = scmp.eq.s32.totalorder %s15, 1
      %p182 = por %p180, %p181
      %p183 = scmp.ne.s32.totalorder %s175, %s178
      %p184 = scmp.eq.s32.totalorder %s15, 0
      %p185 = por %p183, %p184
      %p186 = scmp.ne.s32.totalorder %s175, %s178
      %p187 = scmp.eq.s32.totalorder %s20, 1
      %p188 = por %p186, %p187
      %p189 = scmp.ne.s32.totalorder %s178, %s179
      %p190 = scmp.eq.s32.totalorder %s20, 0
      %p191 = por %p189, %p190
      %p192 = scmp.ne.s32.totalorder %s178, %s179
      %p193 = scmp.eq.s32.totalorder %s21, 1
      %p194 = por %p192, %p193
      %p196 = scmp.ne.s32.totalorder %s179, %s195
      %p197 = scmp.eq.s32.totalorder %s21, 0
      %p198 = por %p196, %p197
      %p199 = scmp.le.s32.totalorder 1, %s15
      %p200 = scmp.lt.s32.totalorder %s15, 3
      %p201 = pnand %p199, %p200
      %p202 = pneg %p201
      // Predicated region
      $region9: #{tpu_custom_call.1} parent=5 // pred_check
        _
      $region10: #{tpu_custom_call.1} parent=5 // pred_check_branch
        %204 = sbr.rel (%p201) target = $region12
      $region11: #{tpu_custom_call.1} parent=5 // pred_region
        %s205 = ssub.s32 %s15, 1
        // Predicated region
        $region13: #{tpu_custom_call.1} parent=11 // pred_check
          %p206 = pneg %p102
        $region14: #{tpu_custom_call.1} parent=11 // pred_check_branch
          %208 = sbr.rel (%p206) target = $region16
        $region15: #{tpu_custom_call.1} parent=11 // pred_region
          _
        $region16: #{tpu_custom_call.1} parent=11 // pred_fallthru
          _
        // Predicated region
        $region17: #{tpu_custom_call.1} parent=11 // pred_check
          %p209 = pneg %p123
        $region18: #{tpu_custom_call.1} parent=11 // pred_check_branch
          %211 = sbr.rel (%p209) target = $region20
        $region19: #{tpu_custom_call.1} parent=11 // pred_region
          _
        $region20: #{tpu_custom_call.1} parent=11 // pred_fallthru
          _
        // Predicated region
        $region21: #{tpu_custom_call.1} parent=11 // pred_check
          %p212 = pneg %p144
        $region22: #{tpu_custom_call.1} parent=11 // pred_check_branch
          %214 = sbr.rel (%p212) target = $region24
        $region23: #{tpu_custom_call.1} parent=11 // pred_region
          _
        $region24: #{tpu_custom_call.1} parent=11 // pred_fallthru
          _
        // Predicated region
        $region25: #{tpu_custom_call.1} parent=11 // pred_check
          %p215 = pneg %p165
        $region26: #{tpu_custom_call.1} parent=11 // pred_check_branch
          %217 = sbr.rel (%p215) target = $region28
        $region27: #{tpu_custom_call.1} parent=11 // pred_region
          _
        $region28: #{tpu_custom_call.1} parent=11 // pred_fallthru
          _
      $region12: #{tpu_custom_call.1} parent=5 // pred_fallthru
        _
      %p218 = scmp.lt.s32.totalorder %s15, 2
      // Predicated region
      $region29: #{tpu_custom_call.1} parent=5 // pred_check
        %p219 = pneg %p218
      $region30: #{tpu_custom_call.1} parent=5 // pred_check_branch
        %221 = sbr.rel (%p219) target = $region32
      $region31: #{tpu_custom_call.1} parent=5 // pred_region
        // Predicated region
        $region33: #{tpu_custom_call.1} parent=31 // pred_check
          %p222 = pneg %p47
        $region34: #{tpu_custom_call.1} parent=31 // pred_check_branch
          %224 = sbr.rel (%p222) target = $region36
        $region35: #{tpu_custom_call.1} parent=31 // pred_region
          %p225 = scmp.lt.s32.totalorder %s22, 1
          %s226 = scalar_select %p225, %s22, 1
          %s227 = smul.addr %s226, 16
          %s228 = smul.addr %s227, 4
          %s229 = scalar_lea.vmem %s0, %s228
        $region36: #{tpu_custom_call.1} parent=31 // pred_fallthru
          _
        // Predicated region
        $region37: #{tpu_custom_call.1} parent=31 // pred_check
          %p230 = pneg %p75
        $region38: #{tpu_custom_call.1} parent=31 // pred_check_branch
          %232 = sbr.rel (%p230) target = $region40
        $region39: #{tpu_custom_call.1} parent=31 // pred_region
          %s233 = smul.u32 4, %s23
          %p234 = scmp.lt.s32.totalorder %s22, 1
          %s235 = scalar_select %p234, %s22, 1
          %p236 = scmp.lt.s32.totalorder %s233, 3
          %s237 = scalar_select %p236, %s233, 3
          %s238 = smul.addr %s235, 4
          %s239 = sadd.s32 %s237, %s238
          %s240 = smul.addr %s239, 8
          %s241 = scalar_lea.vmem %s1, %s240
          %s242 = smul.u32 4, %s23
        $region40: #{tpu_custom_call.1} parent=31 // pred_fallthru
          _
      $region32: #{tpu_custom_call.1} parent=5 // pred_fallthru
        _
      %p243 = scmp.le.s32.totalorder 1, %s15
      %p244 = scmp.lt.s32.totalorder %s15, 3
      %p245 = pnand %p243, %p244
      %p246 = pneg %p245
      // Predicated region
      $region41: #{tpu_custom_call.1} parent=5 // pred_check
        _
      $region42: #{tpu_custom_call.1} parent=5 // pred_check_branch
        %248 = sbr.rel (%p245) target = $region44
      $region43: #{tpu_custom_call.1} parent=5 // pred_region
        %s249 = ssub.s32 %s15, 1
        %p250 = scmp.lt.s32.totalorder %s24, 1
        %s251 = scalar_select %p250, %s24, 1
        %s252 = smul.addr %s251, 16
        %s253 = smul.addr %s252, 4
        %s254 = scalar_lea.vmem %s0, %s253
        %p255 = pneg %p53
        %p256 = pneg %p50
        %s257 = smul.u32 4, %s25
        %p258 = scmp.lt.s32.totalorder %s24, 1
        %s259 = scalar_select %p258, %s24, 1
        %p260 = scmp.lt.s32.totalorder %s257, 3
        %s261 = scalar_select %p260, %s257, 3
        %s262 = smul.addr %s259, 4
        %s263 = sadd.s32 %s261, %s262
        %s264 = smul.addr %s263, 8
        %s265 = scalar_lea.vmem %s1, %s264
        %p266 = pneg %p81
        %p267 = pneg %p78
        %p268 = pneg %p102
        %p269 = pneg %p99
        %p270 = pneg %p123
        %p271 = pneg %p120
        %p272 = pneg %p144
        %p273 = pneg %p141
        %p274 = pneg %p165
        %p275 = pneg %p162
        %p276 = pneg %p191
        %p277 = pneg %p188
        %s278 = sand.u32 %s178, 1
        %s279 = scalar_lea.sflag [#allocation6], %s278
        %s280 = sand.u32 %s178, 1
        %s281 = scalar_lea.vmem [#allocation5], %s280
        %p282 = scmp.lt.s32.totalorder %s24, 1
        %s283 = scalar_select %p282, %s24, 1
        %s284 = smul.addr %s283, 16
        %s285 = smul.addr %s284, 4
        %s286 = scalar_lea.vmem %s0, %s285
        %s287 = smul.u32 4, %s25
        %p288 = scmp.lt.s32.totalorder %s24, 1
        %s289 = scalar_select %p288, %s24, 1
        %p290 = scmp.lt.s32.totalorder %s287, 3
        %s291 = scalar_select %p290, %s287, 3
        %s292 = smul.addr %s289, 4
        %s293 = sadd.s32 %s291, %s292
        %s294 = smul.addr %s293, 8
        %s295 = scalar_lea.vmem %s1, %s294
        %s296 = smul.u32 4, %s25
        %v300 = vld [vmem:[%s3] sm:$0xf]
        %p301 = scmp.eq.s32.totalorder %s25, 0
        // Predicated region
        $region45: #{tpu_custom_call.1} parent=43 // pred_check
          %p302 = pneg %p301
        $region46: #{tpu_custom_call.1} parent=43 // pred_check_branch
          %304 = sbr.rel (%p302) target = $region48
        $region47: #{tpu_custom_call.1} parent=43 // pred_region
          %v305 = vld [vmem:[%s286] sm:$0xf]
          %v306 = vld [vmem:[%s286 + $0x4] sm:$0xf]
          %v307 = vld [vmem:[%s286 + $0x8] sm:$0xf]
          %v308 = vld [vmem:[%s286 + $0xc] sm:$0xf]
          %v309 = vld [vmem:[%s286 + $0x10] sm:$0xf]
          %v310 = vld [vmem:[%s286 + $0x14] sm:$0xf]
          %v311 = vld [vmem:[%s286 + $0x18] sm:$0xf]
          %v312 = vld [vmem:[%s286 + $0x1c] sm:$0xf]
          %v313 = vld [vmem:[%s286 + $0x20] sm:$0xf]
          %v314 = vld [vmem:[%s286 + $0x24] sm:$0xf]
          %v315 = vld [vmem:[%s286 + $0x28] sm:$0xf]
          %v316 = vld [vmem:[%s286 + $0x2c] sm:$0xf]
          %v317 = vld [vmem:[%s286 + $0x30] sm:$0xf]
          %v318 = vld [vmem:[%s286 + $0x34] sm:$0xf]
          %v319 = vld [vmem:[%s286 + $0x38] sm:$0xf]
          %v320 = vld [vmem:[%s286 + $0x3c] sm:$0xf]
          %v321 = vld [vmem:[%s2] sm:$0xf]
          %v322 = vld [vmem:[%s2 + $0x4] sm:$0xf]
          %v323 = vld [vmem:[%s2 + $0x8] sm:$0xf]
          %v324 = vld [vmem:[%s2 + $0xc] sm:$0xf]
          %v325 = vld [vmem:[%s2 + $0x10] sm:$0xf]
          %v326 = vld [vmem:[%s2 + $0x14] sm:$0xf]
          %v327 = vld [vmem:[%s2 + $0x18] sm:$0xf]
          %v328 = vld [vmem:[%s2 + $0x1c] sm:$0xf]
          %v345 = vunpack.c.l.b16 %v305
          %v346 = vunpack.c.l.b16 %v306
          %v347 = vunpack.c.l.b16 %v307
          %v348 = vunpack.c.l.b16 %v308
          %v349 = vunpack.c.l.b16 %v309
          %v350 = vunpack.c.l.b16 %v310
          %v351 = vunpack.c.l.b16 %v311
          %v352 = vunpack.c.l.b16 %v312
          %v353 = vunpack.c.l.b16 %v313
          %v354 = vunpack.c.l.b16 %v314
          %v355 = vunpack.c.l.b16 %v315
          %v356 = vunpack.c.l.b16 %v316
          %v357 = vunpack.c.l.b16 %v317
          %v358 = vunpack.c.l.b16 %v318
          %v359 = vunpack.c.l.b16 %v319
          %v360 = vunpack.c.l.b16 %v320
          %v361 = vpack.c.b16 %v346, %v345
          %v362 = vpack.c.b16 %v348, %v347
          %v363 = vpack.c.b16 %v350, %v349
          %v364 = vpack.c.b16 %v352, %v351
          %v365 = vpack.c.b16 %v354, %v353
          %v366 = vpack.c.b16 %v356, %v355
          %v367 = vpack.c.b16 %v358, %v357
          %v368 = vpack.c.b16 %v360, %v359
          %v377 = vunpack.c.l.b16 %v321
          %v378 = vunpack.c.l.b16 %v322
          %v379 = vunpack.c.l.b16 %v323
          %v380 = vunpack.c.l.b16 %v324
          %v381 = vunpack.c.l.b16 %v325
          %v382 = vunpack.c.l.b16 %v326
          %v383 = vunpack.c.l.b16 %v327
          %v384 = vunpack.c.l.b16 %v328
          %v385 = vpack.c.b16 %v378, %v377
          %v386 = vpack.c.b16 %v380, %v379
          %v387 = vpack.c.b16 %v382, %v381
          %v388 = vpack.c.b16 %v384, %v383
          %vm393 = vcmask 523264
          %v395 = vsel %vm393, %v361, 0
          %v398 = vsel %vm393, %v362, 0
          %v401 = vsel %vm393, %v363, 0
          %v404 = vsel %vm393, %v364, 0
          %v407 = vsel %vm393, %v365, 0
          %v410 = vsel %vm393, %v366, 0
          %v413 = vsel %vm393, %v367, 0
          %v416 = vsel %vm393, %v368, 0
          %418 = vmatprep.subr.bf16.mxu0 0
          %419 = vmatpush1.bf16.msra.mxu0 %v385
          %420 = vmatprep.subr.bf16.mxu0 0
          %421 = vmatpush1.bf16.msra.mxu0 %v386
          %422 = vmatprep.subr.bf16.mxu0 0
          %423 = vmatpush1.bf16.msra.mxu0 %v387
          %424 = vmatprep.subr.bf16.mxu0 0
          %425 = vmatpush1.bf16.msra.mxu0 %v388
          %426 = vmatprep.subr.bf16.mxu0 0
          %427 = vmatpush1.bf16.msra.mxu0 0
          %428 = vmatprep.subr.bf16.mxu0 0
          %429 = vmatpush1.bf16.msra.mxu0 0
          %430 = vmatprep.subr.bf16.mxu0 0
          %431 = vmatpush1.bf16.msra.mxu0 0
          %432 = vmatprep.subr.bf16.mxu0 0
          %433 = vmatpush1.bf16.msra.mxu0 0
          %434 = vmatprep.subr.bf16.mxu0 0
          %435 = vmatpush1.bf16.msra.mxu0 0
          %436 = vmatprep.subr.bf16.mxu0 0
          %437 = vmatpush1.bf16.msra.mxu0 0
          %438 = vmatprep.subr.bf16.mxu0 0
          %439 = vmatpush1.bf16.msra.mxu0 0
          %440 = vmatprep.subr.bf16.mxu0 0
          %441 = vmatpush1.bf16.msra.mxu0 0
          %442 = vmatprep.subr.bf16.mxu0 0
          %443 = vmatpush1.bf16.msra.mxu0 0
          %444 = vmatprep.subr.bf16.mxu0 0
          %445 = vmatpush1.bf16.msra.mxu0 0
          %446 = vmatprep.subr.bf16.mxu0 0
          %447 = vmatpush1.bf16.msra.mxu0 0
          %448 = vmatprep.subr.bf16.mxu0 0
          %449 = vmatpush1.bf16.msra.mxu0 0
          %450 = vmatprep.mubr.bf16.mxu0 0
          %451 = vmatmul.mubr.bf16.gmra.mrb[0].mxu0 %v395
          %v452 = vpop.f32.mrb[0].mxu0
          %v453 = vadd.f32 0.0, %v452
          %v454 = vpop.f32.mrb[0].mxu0
          %v455 = vpop.f32.mrb[0].mxu0
          %v456 = vadd.f32 0.0, %v455
          %v457 = vpop.f32.mrb[0].mxu0
          %458 = vmatprep.mubr.bf16.mxu0 0
          %459 = vmatmul.mubr.bf16.gmra.mrb[0].mxu0 %v398
          %v460 = vpop.f32.mrb[0].mxu0
          %v461 = vadd.f32 0.0, %v460
          %v462 = vpop.f32.mrb[0].mxu0
          %v463 = vpop.f32.mrb[0].mxu0
          %v464 = vadd.f32 0.0, %v463
          %v465 = vpop.f32.mrb[0].mxu0
          %466 = vmatprep.mubr.bf16.mxu0 0
          %467 = vmatmul.mubr.bf16.gmra.mrb[0].mxu0 %v401
          %v468 = vpop.f32.mrb[0].mxu0
          %v469 = vadd.f32 0.0, %v468
          %v470 = vpop.f32.mrb[0].mxu0
          %v471 = vpop.f32.mrb[0].mxu0
          %v472 = vadd.f32 0.0, %v471
          %v473 = vpop.f32.mrb[0].mxu0
          %474 = vmatprep.mubr.bf16.mxu0 0
          %475 = vmatmul.mubr.bf16.gmra.mrb[0].mxu0 %v404
          %v476 = vpop.f32.mrb[0].mxu0
          %v477 = vadd.f32 0.0, %v476
          %v478 = vpop.f32.mrb[0].mxu0
          %v479 = vpop.f32.mrb[0].mxu0
          %v480 = vadd.f32 0.0, %v479
          %v481 = vpop.f32.mrb[0].mxu0
          %482 = vmatprep.mubr.bf16.mxu0 0
          %483 = vmatmul.mubr.bf16.gmra.mrb[0].mxu0 %v407
          %v484 = vpop.f32.mrb[0].mxu0
          %v485 = vadd.f32 0.0, %v484
          %v486 = vpop.f32.mrb[0].mxu0
          %v487 = vpop.f32.mrb[0].mxu0
          %v488 = vadd.f32 0.0, %v487
          %v489 = vpop.f32.mrb[0].mxu0
          %490 = vmatprep.mubr.bf16.mxu0 0
          %491 = vmatmul.mubr.bf16.gmra.mrb[0].mxu0 %v410
          %v492 = vpop.f32.mrb[0].mxu0
          %v493 = vadd.f32 0.0, %v492
          %v494 = vpop.f32.mrb[0].mxu0
          %v495 = vpop.f32.mrb[0].mxu0
          %v496 = vadd.f32 0.0, %v495
          %v497 = vpop.f32.mrb[0].mxu0
          %498 = vmatprep.mubr.bf16.mxu0 0
          %499 = vmatmul.mubr.bf16.gmra.mrb[0].mxu0 %v413
          %v500 = vpop.f32.mrb[0].mxu0
          %v501 = vadd.f32 0.0, %v500
          %v502 = vpop.f32.mrb[0].mxu0
          %v503 = vpop.f32.mrb[0].mxu0
          %v504 = vadd.f32 0.0, %v503
          %v505 = vpop.f32.mrb[0].mxu0
          %506 = vmatprep.mubr.bf16.mxu0 0
          %507 = vmatmul.mubr.bf16.gmra.mrb[0].mxu0 %v416
          %v508 = vpop.f32.mrb[0].mxu0
          %v509 = vadd.f32 0.0, %v508
          %v510 = vpop.f32.mrb[0].mxu0
          %v511 = vpop.f32.mrb[0].mxu0
          %v512 = vadd.f32 0.0, %v511
          %v513 = vpop.f32.mrb[0].mxu0
          %514 = vdwg.mxu0
          %v515 = vpack.c.bf16 %v456, %v453
          %v516 = vpack.c.bf16 %v464, %v461
          %v517 = vpack.c.bf16 %v472, %v469
          %v518 = vpack.c.bf16 %v480, %v477
          %v519 = vpack.c.bf16 %v488, %v485
          %v520 = vpack.c.bf16 %v496, %v493
          %v521 = vpack.c.bf16 %v504, %v501
          %v522 = vpack.c.bf16 %v512, %v509
          %523 = vst [vmem:[#allocation2] sm:$0xff] %v515
          %524 = vst [vmem:[#allocation2 + $0x8] sm:$0xff] %v516
          %525 = vst [vmem:[#allocation2 + $0x10] sm:$0xff] %v517
          %526 = vst [vmem:[#allocation2 + $0x18] sm:$0xff] %v518
          %527 = vst [vmem:[#allocation2 + $0x20] sm:$0xff] %v519
          %528 = vst [vmem:[#allocation2 + $0x28] sm:$0xff] %v520
          %529 = vst [vmem:[#allocation2 + $0x30] sm:$0xff] %v521
          %530 = vst [vmem:[#allocation2 + $0x38] sm:$0xff] %v522
          %v532 = vunpack.c.l.b16 %v300
          %v533 = vpack.c.b16 %v532, %v532
          %v534 = vrot.slane %v533, 2
          %536 = vmatprep.subr.bf16.mxu0 0
          %537 = vmatpush1.bf16.xpose.msra.mxu0 %v515
          %538 = vmatprep.subr.bf16.mxu0 0
          %539 = vmatpush1.bf16.xpose.msra.mxu0 %v516
          %540 = vmatprep.subr.bf16.mxu0 0
          %541 = vmatpush1.bf16.xpose.msra.mxu0 %v517
          %542 = vmatprep.subr.bf16.mxu0 0
          %543 = vmatpush1.bf16.xpose.msra.mxu0 %v518
          %544 = vmatprep.subr.bf16.mxu0 0
          %545 = vmatpush1.bf16.xpose.msra.mxu0 %v519
          %546 = vmatprep.subr.bf16.mxu0 0
          %547 = vmatpush1.bf16.xpose.msra.mxu0 %v520
          %548 = vmatprep.subr.bf16.mxu0 0
          %549 = vmatpush1.bf16.xpose.msra.mxu0 %v521
          %550 = vmatprep.subr.bf16.mxu0 0
          %551 = vmatpush1.bf16.xpose.msra.mxu0 %v522
          %552 = vmatprep.subr.bf16.mxu0 0
          %553 = vmatpush1.bf16.xpose.msra.mxu0 0
          %554 = vmatprep.subr.bf16.mxu0 0
          %555 = vmatpush1.bf16.xpose.msra.mxu0 0
          %556 = vmatprep.subr.bf16.mxu0 0
          %557 = vmatpush1.bf16.xpose.msra.mxu0 0
          %558 = vmatprep.subr.bf16.mxu0 0
          %559 = vmatpush1.bf16.xpose.msra.mxu0 0
          %560 = vmatprep.subr.bf16.mxu0 0
          %561 = vmatpush1.bf16.xpose.msra.mxu0 0
          %562 = vmatprep.subr.bf16.mxu0 0
          %563 = vmatpush1.bf16.xpose.msra.mxu0 0
          %564 = vmatprep.subr.bf16.mxu0 0
          %565 = vmatpush1.bf16.xpose.msra.mxu0 0
          %566 = vmatprep.subr.bf16.mxu0 0
          %567 = vmatpush1.bf16.xpose.msra.mxu0 0
          %568 = vmatprep.mubr.bf16.mxu0 0
          %569 = vmatmul.mubr.bf16.gmra.mrb[0].mxu0 %v534
          %v570 = vpop.f32.mrb[0].mxu0
          %v571 = vadd.f32 0.0, %v570
          %v572 = vpop.f32.mrb[0].mxu0
          %v573 = vpop.f32.mrb[0].mxu0
          %v574 = vpop.f32.mrb[0].mxu0
          %575 = vdwg.mxu0
          %576 = vst [vmem:[#allocation3] sm:$0xf] %v571
          %577 = vst [vmem:[#allocation4] sm:$0x1] 0.0
        $region48: #{tpu_custom_call.1} parent=43 // pred_fallthru
          _
        %s578 = smul.u32 %s25, 128
        %v579 = vld [vmem:[#allocation2] sm:$0xff]
        %v580 = vld [vmem:[#allocation2 + $0x8] sm:$0xff]
        %v581 = vld [vmem:[#allocation2 + $0x10] sm:$0xff]
        %v582 = vld [vmem:[#allocation2 + $0x18] sm:$0xff]
        %v583 = vld [vmem:[#allocation2 + $0x20] sm:$0xff]
        %v584 = vld [vmem:[#allocation2 + $0x28] sm:$0xff]
        %v585 = vld [vmem:[#allocation2 + $0x30] sm:$0xff]
        %v586 = vld [vmem:[#allocation2 + $0x38] sm:$0xff]
        %s587 = sshra.s32 %s578, 4
        %s588 = sand.u32 %s578, 15
        %s589 = smul.addr %s587, 8
        %s590 = scalar_lea.vmem [#allocation2], %s589
        %v591 = vld [vmem:[%s590] sm:$0xff]
        %v592 = vld [vmem:[%s590 + $0x8] sm:$0xff]
        %v593 = vld [vmem:[%s590 + $0x10] sm:$0xff]
        %v594 = vld [vmem:[%s590 + $0x18] sm:$0xff]
        %v595 = vld [vmem:[%s590 + $0x20] sm:$0xff]
        %v596 = vld [vmem:[%s590 + $0x28] sm:$0xff]
        %v597 = vld [vmem:[%s590 + $0x30] sm:$0xff]
        %v598 = vld [vmem:[%s590 + $0x38] sm:$0xff]
        %599 = vmatprep.subr.bf16.mxu0 0
        %600 = vmatpush1.bf16.xpose.msra.mxu0 %v300
        %601 = vmatprep.subr.bf16.mxu0 0
        %602 = vmatpush1.bf16.xpose.msra.mxu0 0
        %603 = vmatprep.subr.bf16.mxu0 0
        %604 = vmatpush1.bf16.xpose.msra.mxu0 0
        %605 = vmatprep.subr.bf16.mxu0 0
        %606 = vmatpush1.bf16.xpose.msra.mxu0 0
        %607 = vmatprep.subr.bf16.mxu0 0
        %608 = vmatpush1.bf16.xpose.msra.mxu0 0
        %609 = vmatprep.subr.bf16.mxu0 0
        %610 = vmatpush1.bf16.xpose.msra.mxu0 0
        %611 = vmatprep.subr.bf16.mxu0 0
        %612 = vmatpush1.bf16.xpose.msra.mxu0 0
        %613 = vmatprep.subr.bf16.mxu0 0
        %614 = vmatpush1.bf16.xpose.msra.mxu0 0
        %615 = vmatprep.subr.bf16.mxu0 0
        %616 = vmatpush1.bf16.xpose.msra.mxu0 0
        %617 = vmatprep.subr.bf16.mxu0 0
        %618 = vmatpush1.bf16.xpose.msra.mxu0 0
        %619 = vmatprep.subr.bf16.mxu0 0
        %620 = vmatpush1.bf16.xpose.msra.mxu0 0
        %621 = vmatprep.subr.bf16.mxu0 0
        %622 = vmatpush1.bf16.xpose.msra.mxu0 0
        %623 = vmatprep.subr.bf16.mxu0 0
        %624 = vmatpush1.bf16.xpose.msra.mxu0 0
        %625 = vmatprep.subr.bf16.mxu0 0
        %626 = vmatpush1.bf16.xpose.msra.mxu0 0
        %627 = vmatprep.subr.bf16.mxu0 0
        %628 = vmatpush1.bf16.xpose.msra.mxu0 0
        %629 = vmatprep.subr.bf16.mxu0 0
        %630 = vmatpush1.bf16.xpose.msra.mxu0 0
        %631 = vmatprep.mubr.bf16.mxu0 0
        %632 = vmatmul.mubr.bf16.gmra.mrb[0].mxu0 %v591
        %v633 = vpop.f32.mrb[0].mxu0
        %v634 = vadd.f32 0.0, %v633
        %v635 = vpop.f32.mrb[0].mxu0
        %v636 = vpop.f32.mrb[0].mxu0
        %v637 = vadd.f32 0.0, %v636
        %v638 = vpop.f32.mrb[0].mxu0
        %639 = vmatprep.mubr.bf16.mxu0 0
        %640 = vmatmul.mubr.bf16.gmra.mrb[0].mxu0 %v592
        %v641 = vpop.f32.mrb[0].mxu0
        %v642 = vadd.f32 0.0, %v641
        %v643 = vpop.f32.mrb[0].mxu0
        %v644 = vpop.f32.mrb[0].mxu0
        %v645 = vadd.f32 0.0, %v644
        %v646 = vpop.f32.mrb[0].mxu0
        %647 = vmatprep.mubr.bf16.mxu0 0
        %648 = vmatmul.mubr.bf16.gmra.mrb[0].mxu0 %v593
        %v649 = vpop.f32.mrb[0].mxu0
        %v650 = vadd.f32 0.0, %v649
        %v651 = vpop.f32.mrb[0].mxu0
        %v652 = vpop.f32.mrb[0].mxu0
        %v653 = vadd.f32 0.0, %v652
        %v654 = vpop.f32.mrb[0].mxu0
        %655 = vmatprep.mubr.bf16.mxu0 0
        %656 = vmatmul.mubr.bf16.gmra.mrb[0].mxu0 %v594
        %v657 = vpop.f32.mrb[0].mxu0
        %v658 = vadd.f32 0.0, %v657
        %v659 = vpop.f32.mrb[0].mxu0
        %v660 = vpop.f32.mrb[0].mxu0
        %v661 = vadd.f32 0.0, %v660
        %v662 = vpop.f32.mrb[0].mxu0
        %663 = vmatprep.mubr.bf16.mxu0 0
        %664 = vmatmul.mubr.bf16.gmra.mrb[0].mxu0 %v595
        %v665 = vpop.f32.mrb[0].mxu0
        %v666 = vadd.f32 0.0, %v665
        %v667 = vpop.f32.mrb[0].mxu0
        %v668 = vpop.f32.mrb[0].mxu0
        %v669 = vadd.f32 0.0, %v668
        %v670 = vpop.f32.mrb[0].mxu0
        %671 = vmatprep.mubr.bf16.mxu0 0
        %672 = vmatmul.mubr.bf16.gmra.mrb[0].mxu0 %v596
        %v673 = vpop.f32.mrb[0].mxu0
        %v674 = vadd.f32 0.0, %v673
        %v675 = vpop.f32.mrb[0].mxu0
        %v676 = vpop.f32.mrb[0].mxu0
        %v677 = vadd.f32 0.0, %v676
        %v678 = vpop.f32.mrb[0].mxu0
        %679 = vmatprep.mubr.bf16.mxu0 0
        %680 = vmatmul.mubr.bf16.gmra.mrb[0].mxu0 %v597
        %v681 = vpop.f32.mrb[0].mxu0
        %v682 = vadd.f32 0.0, %v681
        %v683 = vpop.f32.mrb[0].mxu0
        %v684 = vpop.f32.mrb[0].mxu0
        %v685 = vadd.f32 0.0, %v684
        %v686 = vpop.f32.mrb[0].mxu0
        %687 = vmatprep.mubr.bf16.mxu0 0
        %688 = vmatmul.mubr.bf16.gmra.mrb[0].mxu0 %v598
        %v689 = vpop.f32.mrb[0].mxu0
        %v690 = vadd.f32 0.0, %v689
        %v691 = vpop.f32.mrb[0].mxu0
        %v692 = vpop.f32.mrb[0].mxu0
        %v693 = vadd.f32 0.0, %v692
        %v694 = vpop.f32.mrb[0].mxu0
        %695 = vdwg.mxu0
        %v696 = vld [vmem:[%s295] sm:$0xff]
        %v697 = vld [vmem:[%s295 + $0x8] sm:$0xff]
        %v698 = vld [vmem:[%s295 + $0x10] sm:$0xff]
        %v699 = vld [vmem:[%s295 + $0x18] sm:$0xff]
        %vm700 = vnez %v696
        %vm701 = vnez %v697
        %vm702 = vnez %v698
        %vm703 = vnez %v699
        %v704 = vld [vmem:[#allocation3] sm:$0xf]
        %706 = vset.pattern.permute.xlu0 0
        %707 = vperm.xlu0 %706, %v634
        %v708 = vpop.permute.xlu0 %707
        %711 = vset.pattern.permute.xlu0 0
        %712 = vperm.xlu0 %711, %v637
        %v713 = vpop.permute.xlu0 %712
        %716 = vset.pattern.permute.xlu0 0
        %717 = vperm.xlu0 %716, %v642
        %v718 = vpop.permute.xlu0 %717
        %721 = vset.pattern.permute.xlu0 0
        %722 = vperm.xlu0 %721, %v645
        %v723 = vpop.permute.xlu0 %722
        %726 = vset.pattern.permute.xlu0 0
        %727 = vperm.xlu0 %726, %v650
        %v728 = vpop.permute.xlu0 %727
        %731 = vset.pattern.permute.xlu0 0
        %732 = vperm.xlu0 %731, %v653
        %v733 = vpop.permute.xlu0 %732
        %736 = vset.pattern.permute.xlu0 0
        %737 = vperm.xlu0 %736, %v658
        %v738 = vpop.permute.xlu0 %737
        %741 = vset.pattern.permute.xlu0 0
        %742 = vperm.xlu0 %741, %v661
        %v743 = vpop.permute.xlu0 %742
        %746 = vset.pattern.permute.xlu0 0
        %747 = vperm.xlu0 %746, %v666
        %v748 = vpop.permute.xlu0 %747
        %751 = vset.pattern.permute.xlu0 0
        %752 = vperm.xlu0 %751, %v669
        %v753 = vpop.permute.xlu0 %752
        %756 = vset.pattern.permute.xlu0 0
        %757 = vperm.xlu0 %756, %v674
        %v758 = vpop.permute.xlu0 %757
        %761 = vset.pattern.permute.xlu0 0
        %762 = vperm.xlu0 %761, %v677
        %v763 = vpop.permute.xlu0 %762
        %766 = vset.pattern.permute.xlu0 0
        %767 = vperm.xlu0 %766, %v682
        %v768 = vpop.permute.xlu0 %767
        %771 = vset.pattern.permute.xlu0 0
        %772 = vperm.xlu0 %771, %v685
        %v773 = vpop.permute.xlu0 %772
        %776 = vset.pattern.permute.xlu0 0
        %777 = vperm.xlu0 %776, %v690
        %v778 = vpop.permute.xlu0 %777
        %781 = vset.pattern.permute.xlu0 0
        %782 = vperm.xlu0 %781, %v693
        %v783 = vpop.permute.xlu0 %782
        %v785 = vlaneseq
        %v786 = vshrl.u32 %v785, 7
        %v787 = vsub.s32 0, %v786
        %v788 = vrot.slane %v704, %v787
        %v789 = vadd.f32 %v708, %v788
        %v790 = vadd.f32 %v713, %v788
        %v791 = vadd.f32 %v718, %v788
        %v792 = vadd.f32 %v723, %v788
        %v793 = vadd.f32 %v728, %v788
        %v794 = vadd.f32 %v733, %v788
        %v795 = vadd.f32 %v738, %v788
        %v796 = vadd.f32 %v743, %v788
        %v797 = vadd.f32 %v748, %v788
        %v798 = vadd.f32 %v753, %v788
        %v799 = vadd.f32 %v758, %v788
        %v800 = vadd.f32 %v763, %v788
        %v801 = vadd.f32 %v768, %v788
        %v802 = vadd.f32 %v773, %v788
        %v803 = vadd.f32 %v778, %v788
        %v804 = vadd.f32 %v783, %v788
        %v805 = vmul.f32 %v789, 0.2
        %v806 = vmul.f32 %v790, 0.2
        %v807 = vmul.f32 %v791, 0.2
        %v808 = vmul.f32 %v792, 0.2
        %v809 = vmul.f32 %v793, 0.2
        %v810 = vmul.f32 %v794, 0.2
        %v811 = vmul.f32 %v795, 0.2
        %v812 = vmul.f32 %v796, 0.2
        %v813 = vmul.f32 %v797, 0.2
        %v814 = vmul.f32 %v798, 0.2
        %v815 = vmul.f32 %v799, 0.2
        %v816 = vmul.f32 %v800, 0.2
        %v817 = vmul.f32 %v801, 0.2
        %v818 = vmul.f32 %v802, 0.2
        %v819 = vmul.f32 %v803, 0.2
        %v820 = vmul.f32 %v804, 0.2
        %v821 = vmax.f32 %v789, %v805
        %v822 = vmax.f32 %v790, %v806
        %v823 = vmax.f32 %v791, %v807
        %v824 = vmax.f32 %v792, %v808
        %v825 = vmax.f32 %v793, %v809
        %v826 = vmax.f32 %v794, %v810
        %v827 = vmax.f32 %v795, %v811
        %v828 = vmax.f32 %v796, %v812
        %v829 = vmax.f32 %v797, %v813
        %v830 = vmax.f32 %v798, %v814
        %v831 = vmax.f32 %v799, %v815
        %v832 = vmax.f32 %v800, %v816
        %v833 = vmax.f32 %v801, %v817
        %v834 = vmax.f32 %v802, %v818
        %v835 = vmax.f32 %v803, %v819
        %v836 = vmax.f32 %v804, %v820
        %v837 = vsel %vm700, 16843009, 0
        %v838 = vsel %vm701, 16843009, 0
        %v839 = vsel %vm702, 16843009, 0
        %v840 = vsel %vm703, 16843009, 0
        %v841 = vunpack.c.0.s8 %v837
        %v842 = vunpack.c.1.s8 %v837
        %v843 = vunpack.c.2.s8 %v837
        %v844 = vunpack.c.3.s8 %v837
        %v845 = vunpack.c.0.s8 %v838
        %v846 = vunpack.c.1.s8 %v838
        %v847 = vunpack.c.2.s8 %v838
        %v848 = vunpack.c.3.s8 %v838
        %v849 = vunpack.c.0.s8 %v839
        %v850 = vunpack.c.1.s8 %v839
        %v851 = vunpack.c.2.s8 %v839
        %v852 = vunpack.c.3.s8 %v839
        %v853 = vunpack.c.0.s8 %v840
        %v854 = vunpack.c.1.s8 %v840
        %v855 = vunpack.c.2.s8 %v840
        %v856 = vunpack.c.3.s8 %v840
        %v857 = vpack.c.b16 %v841, %v841
        %v858 = vpack.c.b8 %v857, %v857
        %v859 = vpack.c.b16 %v842, %v842
        %v860 = vpack.c.b8 %v859, %v859
        %v861 = vpack.c.b16 %v843, %v843
        %v862 = vpack.c.b8 %v861, %v861
        %v863 = vpack.c.b16 %v844, %v844
        %v864 = vpack.c.b8 %v863, %v863
        %v865 = vpack.c.b16 %v845, %v845
        %v866 = vpack.c.b8 %v865, %v865
        %v867 = vpack.c.b16 %v846, %v846
        %v868 = vpack.c.b8 %v867, %v867
        %v869 = vpack.c.b16 %v847, %v847
        %v870 = vpack.c.b8 %v869, %v869
        %v871 = vpack.c.b16 %v848, %v848
        %v872 = vpack.c.b8 %v871, %v871
        %v873 = vpack.c.b16 %v849, %v849
        %v874 = vpack.c.b8 %v873, %v873
        %v875 = vpack.c.b16 %v850, %v850
        %v876 = vpack.c.b8 %v875, %v875
        %v877 = vpack.c.b16 %v851, %v851
        %v878 = vpack.c.b8 %v877, %v877
        %v879 = vpack.c.b16 %v852, %v852
        %v880 = vpack.c.b8 %v879, %v879
        %v881 = vpack.c.b16 %v853, %v853
        %v882 = vpack.c.b8 %v881, %v881
        %v883 = vpack.c.b16 %v854, %v854
        %v884 = vpack.c.b8 %v883, %v883
        %v885 = vpack.c.b16 %v855, %v855
        %v886 = vpack.c.b8 %v885, %v885
        %v887 = vpack.c.b16 %v856, %v856
        %v888 = vpack.c.b8 %v887, %v887
        %vm889 = vnez %v858
        %vm890 = vnez %v860
        %vm891 = vnez %v862
        %vm892 = vnez %v864
        %vm893 = vnez %v866
        %vm894 = vnez %v868
        %vm895 = vnez %v870
        %vm896 = vnez %v872
        %vm897 = vnez %v874
        %vm898 = vnez %v876
        %vm899 = vnez %v878
        %vm900 = vnez %v880
        %vm901 = vnez %v882
        %vm902 = vnez %v884
        %vm903 = vnez %v886
        %vm904 = vnez %v888
        %v905 = vsel %vm889, 16843009, 0
        %v906 = vsel %vm890, 16843009, 0
        %v907 = vsel %vm891, 16843009, 0
        %v908 = vsel %vm892, 16843009, 0
        %v909 = vsel %vm893, 16843009, 0
        %v910 = vsel %vm894, 16843009, 0
        %v911 = vsel %vm895, 16843009, 0
        %v912 = vsel %vm896, 16843009, 0
        %v913 = vsel %vm897, 16843009, 0
        %v914 = vsel %vm898, 16843009, 0
        %v915 = vsel %vm899, 16843009, 0
        %v916 = vsel %vm900, 16843009, 0
        %v917 = vsel %vm901, 16843009, 0
        %v918 = vsel %vm902, 16843009, 0
        %v919 = vsel %vm903, 16843009, 0
        %v920 = vsel %vm904, 16843009, 0
        %v921 = vunpack.c.0.s8 %v905
        %v922 = vunpack.c.0.s8 %v906
        %v923 = vunpack.c.0.s8 %v907
        %v924 = vunpack.c.0.s8 %v908
        %v925 = vunpack.c.0.s8 %v909
        %v926 = vunpack.c.0.s8 %v910
        %v927 = vunpack.c.0.s8 %v911
        %v928 = vunpack.c.0.s8 %v912
        %v929 = vunpack.c.0.s8 %v913
        %v930 = vunpack.c.0.s8 %v914
        %v931 = vunpack.c.0.s8 %v915
        %v932 = vunpack.c.0.s8 %v916
        %v933 = vunpack.c.0.s8 %v917
        %v934 = vunpack.c.0.s8 %v918
        %v935 = vunpack.c.0.s8 %v919
        %v936 = vunpack.c.0.s8 %v920
        %vm937 = vcmp.ne.s32.totalorder %v921, 0
        %vm938 = vcmp.ne.s32.totalorder %v922, 0
        %vm939 = vcmp.ne.s32.totalorder %v923, 0
        %vm940 = vcmp.ne.s32.totalorder %v924, 0
        %vm941 = vcmp.ne.s32.totalorder %v925, 0
        %vm942 = vcmp.ne.s32.totalorder %v926, 0
        %vm943 = vcmp.ne.s32.totalorder %v927, 0
        %vm944 = vcmp.ne.s32.totalorder %v928, 0
        %vm945 = vcmp.ne.s32.totalorder %v929, 0
        %vm946 = vcmp.ne.s32.totalorder %v930, 0
        %vm947 = vcmp.ne.s32.totalorder %v931, 0
        %vm948 = vcmp.ne.s32.totalorder %v932, 0
        %vm949 = vcmp.ne.s32.totalorder %v933, 0
        %vm950 = vcmp.ne.s32.totalorder %v934, 0
        %vm951 = vcmp.ne.s32.totalorder %v935, 0
        %vm952 = vcmp.ne.s32.totalorder %v936, 0
        %v953 = vsel %vm937, %v821, -9e+15
        %v954 = vsel %vm938, %v822, -9e+15
        %v955 = vsel %vm939, %v823, -9e+15
        %v956 = vsel %vm940, %v824, -9e+15
        %v957 = vsel %vm941, %v825, -9e+15
        %v958 = vsel %vm942, %v826, -9e+15
        %v959 = vsel %vm943, %v827, -9e+15
        %v960 = vsel %vm944, %v828, -9e+15
        %v961 = vsel %vm945, %v829, -9e+15
        %v962 = vsel %vm946, %v830, -9e+15
        %v963 = vsel %vm947, %v831, -9e+15
        %v964 = vsel %vm948, %v832, -9e+15
        %v965 = vsel %vm949, %v833, -9e+15
        %v966 = vsel %vm950, %v834, -9e+15
        %v967 = vsel %vm951, %v835, -9e+15
        %v968 = vsel %vm952, %v836, -9e+15
        %969 = vmax.xlane.f32.xlu0 %v953
        %v970 = vpop.xlane.xlu0 %969
        %971 = vmax.xlane.f32.xlu0 %v954
        %v972 = vpop.xlane.xlu0 %971
        %973 = vmax.xlane.f32.xlu0 %v955
        %v974 = vpop.xlane.xlu0 %973
        %975 = vmax.xlane.f32.xlu0 %v956
        %v976 = vpop.xlane.xlu0 %975
        %977 = vmax.xlane.f32.xlu0 %v957
        %v978 = vpop.xlane.xlu0 %977
        %979 = vmax.xlane.f32.xlu0 %v958
        %v980 = vpop.xlane.xlu0 %979
        %981 = vmax.xlane.f32.xlu0 %v959
        %v982 = vpop.xlane.xlu0 %981
        %983 = vmax.xlane.f32.xlu0 %v960
        %v984 = vpop.xlane.xlu0 %983
        %985 = vmax.xlane.f32.xlu0 %v961
        %v986 = vpop.xlane.xlu0 %985
        %987 = vmax.xlane.f32.xlu0 %v962
        %v988 = vpop.xlane.xlu0 %987
        %989 = vmax.xlane.f32.xlu0 %v963
        %v990 = vpop.xlane.xlu0 %989
        %991 = vmax.xlane.f32.xlu0 %v964
        %v992 = vpop.xlane.xlu0 %991
        %993 = vmax.xlane.f32.xlu0 %v965
        %v994 = vpop.xlane.xlu0 %993
        %995 = vmax.xlane.f32.xlu0 %v966
        %v996 = vpop.xlane.xlu0 %995
        %997 = vmax.xlane.f32.xlu0 %v967
        %v998 = vpop.xlane.xlu0 %997
        %999 = vmax.xlane.f32.xlu0 %v968
        %v1000 = vpop.xlane.xlu0 %999
        %v1001 = vsub.f32 %v953, %v970
        %v1002 = vsub.f32 %v954, %v972
        %v1003 = vsub.f32 %v955, %v974
        %v1004 = vsub.f32 %v956, %v976
        %v1005 = vsub.f32 %v957, %v978
        %v1006 = vsub.f32 %v958, %v980
        %v1007 = vsub.f32 %v959, %v982
        %v1008 = vsub.f32 %v960, %v984
        %v1009 = vsub.f32 %v961, %v986
        %v1010 = vsub.f32 %v962, %v988
        %v1011 = vsub.f32 %v963, %v990
        %v1012 = vsub.f32 %v964, %v992
        %v1013 = vsub.f32 %v965, %v994
        %v1014 = vsub.f32 %v966, %v996
        %v1015 = vsub.f32 %v967, %v998
        %v1016 = vsub.f32 %v968, %v1000
        %v1017 = vmul.f32 %v1001, 1.442695
        %v1018 = vpow.pop %v1017
        %v1019 = vmul.f32 %v1002, 1.442695
        %v1020 = vpow.pop %v1019
        %v1021 = vmul.f32 %v1003, 1.442695
        %v1022 = vpow.pop %v1021
        %v1023 = vmul.f32 %v1004, 1.442695
        %v1024 = vpow.pop %v1023
        %v1025 = vmul.f32 %v1005, 1.442695
        %v1026 = vpow.pop %v1025
        %v1027 = vmul.f32 %v1006, 1.442695
        %v1028 = vpow.pop %v1027
        %v1029 = vmul.f32 %v1007, 1.442695
        %v1030 = vpow.pop %v1029
        %v1031 = vmul.f32 %v1008, 1.442695
        %v1032 = vpow.pop %v1031
        %v1033 = vmul.f32 %v1009, 1.442695
        %v1034 = vpow.pop %v1033
        %v1035 = vmul.f32 %v1010, 1.442695
        %v1036 = vpow.pop %v1035
        %v1037 = vmul.f32 %v1011, 1.442695
        %v1038 = vpow.pop %v1037
        %v1039 = vmul.f32 %v1012, 1.442695
        %v1040 = vpow.pop %v1039
        %v1041 = vmul.f32 %v1013, 1.442695
        %v1042 = vpow.pop %v1041
        %v1043 = vmul.f32 %v1014, 1.442695
        %v1044 = vpow.pop %v1043
        %v1045 = vmul.f32 %v1015, 1.442695
        %v1046 = vpow.pop %v1045
        %v1047 = vmul.f32 %v1016, 1.442695
        %v1048 = vpow.pop %v1047
        %1049 = vadd.xlane.f32.xlu0 %v1018
        %v1050 = vpop.xlane.xlu0 %1049
        %1051 = vadd.xlane.f32.xlu0 %v1020
        %v1052 = vpop.xlane.xlu0 %1051
        %1053 = vadd.xlane.f32.xlu0 %v1022
        %v1054 = vpop.xlane.xlu0 %1053
        %1055 = vadd.xlane.f32.xlu0 %v1024
        %v1056 = vpop.xlane.xlu0 %1055
        %1057 = vadd.xlane.f32.xlu0 %v1026
        %v1058 = vpop.xlane.xlu0 %1057
        %1059 = vadd.xlane.f32.xlu0 %v1028
        %v1060 = vpop.xlane.xlu0 %1059
        %1061 = vadd.xlane.f32.xlu0 %v1030
        %v1062 = vpop.xlane.xlu0 %1061
        %1063 = vadd.xlane.f32.xlu0 %v1032
        %v1064 = vpop.xlane.xlu0 %1063
        %1065 = vadd.xlane.f32.xlu0 %v1034
        %v1066 = vpop.xlane.xlu0 %1065
        %1067 = vadd.xlane.f32.xlu0 %v1036
        %v1068 = vpop.xlane.xlu0 %1067
        %1069 = vadd.xlane.f32.xlu0 %v1038
        %v1070 = vpop.xlane.xlu0 %1069
        %1071 = vadd.xlane.f32.xlu0 %v1040
        %v1072 = vpop.xlane.xlu0 %1071
        %1073 = vadd.xlane.f32.xlu0 %v1042
        %v1074 = vpop.xlane.xlu0 %1073
        %1075 = vadd.xlane.f32.xlu0 %v1044
        %v1076 = vpop.xlane.xlu0 %1075
        %1077 = vadd.xlane.f32.xlu0 %v1046
        %v1078 = vpop.xlane.xlu0 %1077
        %1079 = vadd.xlane.f32.xlu0 %v1048
        %v1080 = vpop.xlane.xlu0 %1079
        %v1081 = vpack.c.bf16 %v1020, %v1018
        %v1082 = vpack.c.bf16 %v1024, %v1022
        %v1083 = vpack.c.bf16 %v1028, %v1026
        %v1084 = vpack.c.bf16 %v1032, %v1030
        %v1085 = vpack.c.bf16 %v1036, %v1034
        %v1086 = vpack.c.bf16 %v1040, %v1038
        %v1087 = vpack.c.bf16 %v1044, %v1042
        %v1088 = vpack.c.bf16 %v1048, %v1046
        %1089 = vmatprep.subr.bf16.mxu0 0
        %1090 = vmatpush1.bf16.msra.mxu0 %v579
        %1091 = vmatprep.subr.bf16.mxu0 0
        %1092 = vmatpush1.bf16.msra.mxu0 %v580
        %1093 = vmatprep.subr.bf16.mxu0 0
        %1094 = vmatpush1.bf16.msra.mxu0 %v581
        %1095 = vmatprep.subr.bf16.mxu0 0
        %1096 = vmatpush1.bf16.msra.mxu0 %v582
        %1097 = vmatprep.subr.bf16.mxu0 0
        %1098 = vmatpush1.bf16.msra.mxu0 %v583
        %1099 = vmatprep.subr.bf16.mxu0 0
        %1100 = vmatpush1.bf16.msra.mxu0 %v584
        %1101 = vmatprep.subr.bf16.mxu0 0
        %1102 = vmatpush1.bf16.msra.mxu0 %v585
        %1103 = vmatprep.subr.bf16.mxu0 0
        %1104 = vmatpush1.bf16.msra.mxu0 %v586
        %1105 = vmatprep.subr.bf16.mxu0 0
        %1106 = vmatpush1.bf16.msra.mxu0 0
        %1107 = vmatprep.subr.bf16.mxu0 0
        %1108 = vmatpush1.bf16.msra.mxu0 0
        %1109 = vmatprep.subr.bf16.mxu0 0
        %1110 = vmatpush1.bf16.msra.mxu0 0
        %1111 = vmatprep.subr.bf16.mxu0 0
        %1112 = vmatpush1.bf16.msra.mxu0 0
        %1113 = vmatprep.subr.bf16.mxu0 0
        %1114 = vmatpush1.bf16.msra.mxu0 0
        %1115 = vmatprep.subr.bf16.mxu0 0
        %1116 = vmatpush1.bf16.msra.mxu0 0
        %1117 = vmatprep.subr.bf16.mxu0 0
        %1118 = vmatpush1.bf16.msra.mxu0 0
        %1119 = vmatprep.subr.bf16.mxu0 0
        %1120 = vmatpush1.bf16.msra.mxu0 0
        %1121 = vmatprep.mubr.bf16.mxu0 0
        %1122 = vmatmul.mubr.bf16.gmra.mrb[0].mxu0 %v1081
        %v1123 = vpop.f32.mrb[0].mxu0
        %v1124 = vadd.f32 0.0, %v1123
        %v1125 = vpop.f32.mrb[0].mxu0
        %v1126 = vpop.f32.mrb[0].mxu0
        %v1127 = vadd.f32 0.0, %v1126
        %v1128 = vpop.f32.mrb[0].mxu0
        %1129 = vmatprep.mubr.bf16.mxu0 0
        %1130 = vmatmul.mubr.bf16.gmra.mrb[0].mxu0 %v1082
        %v1131 = vpop.f32.mrb[0].mxu0
        %v1132 = vadd.f32 0.0, %v1131
        %v1133 = vpop.f32.mrb[0].mxu0
        %v1134 = vpop.f32.mrb[0].mxu0
        %v1135 = vadd.f32 0.0, %v1134
        %v1136 = vpop.f32.mrb[0].mxu0
        %1137 = vmatprep.mubr.bf16.mxu0 0
        %1138 = vmatmul.mubr.bf16.gmra.mrb[0].mxu0 %v1083
        %v1139 = vpop.f32.mrb[0].mxu0
        %v1140 = vadd.f32 0.0, %v1139
        %v1141 = vpop.f32.mrb[0].mxu0
        %v1142 = vpop.f32.mrb[0].mxu0
        %v1143 = vadd.f32 0.0, %v1142
        %v1144 = vpop.f32.mrb[0].mxu0
        %1145 = vmatprep.mubr.bf16.mxu0 0
        %1146 = vmatmul.mubr.bf16.gmra.mrb[0].mxu0 %v1084
        %v1147 = vpop.f32.mrb[0].mxu0
        %v1148 = vadd.f32 0.0, %v1147
        %v1149 = vpop.f32.mrb[0].mxu0
        %v1150 = vpop.f32.mrb[0].mxu0
        %v1151 = vadd.f32 0.0, %v1150
        %v1152 = vpop.f32.mrb[0].mxu0
        %1153 = vmatprep.mubr.bf16.mxu0 0
        %1154 = vmatmul.mubr.bf16.gmra.mrb[0].mxu0 %v1085
        %v1155 = vpop.f32.mrb[0].mxu0
        %v1156 = vadd.f32 0.0, %v1155
        %v1157 = vpop.f32.mrb[0].mxu0
        %v1158 = vpop.f32.mrb[0].mxu0
        %v1159 = vadd.f32 0.0, %v1158
        %v1160 = vpop.f32.mrb[0].mxu0
        %1161 = vmatprep.mubr.bf16.mxu0 0
        %1162 = vmatmul.mubr.bf16.gmra.mrb[0].mxu0 %v1086
        %v1163 = vpop.f32.mrb[0].mxu0
        %v1164 = vadd.f32 0.0, %v1163
        %v1165 = vpop.f32.mrb[0].mxu0
        %v1166 = vpop.f32.mrb[0].mxu0
        %v1167 = vadd.f32 0.0, %v1166
        %v1168 = vpop.f32.mrb[0].mxu0
        %1169 = vmatprep.mubr.bf16.mxu0 0
        %1170 = vmatmul.mubr.bf16.gmra.mrb[0].mxu0 %v1087
        %v1171 = vpop.f32.mrb[0].mxu0
        %v1172 = vadd.f32 0.0, %v1171
        %v1173 = vpop.f32.mrb[0].mxu0
        %v1174 = vpop.f32.mrb[0].mxu0
        %v1175 = vadd.f32 0.0, %v1174
        %v1176 = vpop.f32.mrb[0].mxu0
        %1177 = vmatprep.mubr.bf16.mxu0 0
        %1178 = vmatmul.mubr.bf16.gmra.mrb[0].mxu0 %v1088
        %v1179 = vpop.f32.mrb[0].mxu0
        %v1180 = vadd.f32 0.0, %v1179
        %v1181 = vpop.f32.mrb[0].mxu0
        %v1182 = vpop.f32.mrb[0].mxu0
        %v1183 = vadd.f32 0.0, %v1182
        %v1184 = vpop.f32.mrb[0].mxu0
        %1185 = vdwg.mxu0
        %v1186 = vrcp.pop %v1050
        %v1187 = vrcp.pop %v1052
        %v1188 = vrcp.pop %v1054
        %v1189 = vrcp.pop %v1056
        %v1190 = vrcp.pop %v1058
        %v1191 = vrcp.pop %v1060
        %v1192 = vrcp.pop %v1062
        %v1193 = vrcp.pop %v1064
        %v1194 = vrcp.pop %v1066
        %v1195 = vrcp.pop %v1068
        %v1196 = vrcp.pop %v1070
        %v1197 = vrcp.pop %v1072
        %v1198 = vrcp.pop %v1074
        %v1199 = vrcp.pop %v1076
        %v1200 = vrcp.pop %v1078
        %v1201 = vrcp.pop %v1080
        %v1202 = vmul.f32 %v1124, %v1186
        %v1203 = vmul.f32 %v1127, %v1187
        %v1204 = vmul.f32 %v1132, %v1188
        %v1205 = vmul.f32 %v1135, %v1189
        %v1206 = vmul.f32 %v1140, %v1190
        %v1207 = vmul.f32 %v1143, %v1191
        %v1208 = vmul.f32 %v1148, %v1192
        %v1209 = vmul.f32 %v1151, %v1193
        %v1210 = vmul.f32 %v1156, %v1194
        %v1211 = vmul.f32 %v1159, %v1195
        %v1212 = vmul.f32 %v1164, %v1196
        %v1213 = vmul.f32 %v1167, %v1197
        %v1214 = vmul.f32 %v1172, %v1198
        %v1215 = vmul.f32 %v1175, %v1199
        %v1216 = vmul.f32 %v1180, %v1200
        %v1217 = vmul.f32 %v1183, %v1201
        %vm1218 = vcmp.gt.f32.partialorder %v1202, 0.0
        %vm1219 = vcmp.gt.f32.partialorder %v1203, 0.0
        %vm1220 = vcmp.gt.f32.partialorder %v1204, 0.0
        %vm1221 = vcmp.gt.f32.partialorder %v1205, 0.0
        %vm1222 = vcmp.gt.f32.partialorder %v1206, 0.0
        %vm1223 = vcmp.gt.f32.partialorder %v1207, 0.0
        %vm1224 = vcmp.gt.f32.partialorder %v1208, 0.0
        %vm1225 = vcmp.gt.f32.partialorder %v1209, 0.0
        %vm1226 = vcmp.gt.f32.partialorder %v1210, 0.0
        %vm1227 = vcmp.gt.f32.partialorder %v1211, 0.0
        %vm1228 = vcmp.gt.f32.partialorder %v1212, 0.0
        %vm1229 = vcmp.gt.f32.partialorder %v1213, 0.0
        %vm1230 = vcmp.gt.f32.partialorder %v1214, 0.0
        %vm1231 = vcmp.gt.f32.partialorder %v1215, 0.0
        %vm1232 = vcmp.gt.f32.partialorder %v1216, 0.0
        %vm1233 = vcmp.gt.f32.partialorder %v1217, 0.0
        %v1234 = vmin.f32 %v1202, 0.0
        %v1235 = vmin.f32 %v1203, 0.0
        %v1236 = vmin.f32 %v1204, 0.0
        %v1237 = vmin.f32 %v1205, 0.0
        %v1238 = vmin.f32 %v1206, 0.0
        %v1239 = vmin.f32 %v1207, 0.0
        %v1240 = vmin.f32 %v1208, 0.0
        %v1241 = vmin.f32 %v1209, 0.0
        %v1242 = vmin.f32 %v1210, 0.0
        %v1243 = vmin.f32 %v1211, 0.0
        %v1244 = vmin.f32 %v1212, 0.0
        %v1245 = vmin.f32 %v1213, 0.0
        %v1246 = vmin.f32 %v1214, 0.0
        %v1247 = vmin.f32 %v1215, 0.0
        %v1248 = vmin.f32 %v1216, 0.0
        %v1249 = vmin.f32 %v1217, 0.0
        %v1250 = vmul.f32 %v1234, 1.442695
        %v1251 = vpow.pop %v1250
        %v1252 = vmul.f32 %v1235, 1.442695
        %v1253 = vpow.pop %v1252
        %v1254 = vmul.f32 %v1236, 1.442695
        %v1255 = vpow.pop %v1254
        %v1256 = vmul.f32 %v1237, 1.442695
        %v1257 = vpow.pop %v1256
        %v1258 = vmul.f32 %v1238, 1.442695
        %v1259 = vpow.pop %v1258
        %v1260 = vmul.f32 %v1239, 1.442695
        %v1261 = vpow.pop %v1260
        %v1262 = vmul.f32 %v1240, 1.442695
        %v1263 = vpow.pop %v1262
        %v1264 = vmul.f32 %v1241, 1.442695
        %v1265 = vpow.pop %v1264
        %v1266 = vmul.f32 %v1242, 1.442695
        %v1267 = vpow.pop %v1266
        %v1268 = vmul.f32 %v1243, 1.442695
        %v1269 = vpow.pop %v1268
        %v1270 = vmul.f32 %v1244, 1.442695
        %v1271 = vpow.pop %v1270
        %v1272 = vmul.f32 %v1245, 1.442695
        %v1273 = vpow.pop %v1272
        %v1274 = vmul.f32 %v1246, 1.442695
        %v1275 = vpow.pop %v1274
        %v1276 = vmul.f32 %v1247, 1.442695
        %v1277 = vpow.pop %v1276
        %v1278 = vmul.f32 %v1248, 1.442695
        %v1279 = vpow.pop %v1278
        %v1280 = vmul.f32 %v1249, 1.442695
        %v1281 = vpow.pop %v1280
        %v1282 = vsub.f32 %v1251, 1.0
        %v1283 = vsub.f32 %v1253, 1.0
        %v1284 = vsub.f32 %v1255, 1.0
        %v1285 = vsub.f32 %v1257, 1.0
        %v1286 = vsub.f32 %v1259, 1.0
        %v1287 = vsub.f32 %v1261, 1.0
        %v1288 = vsub.f32 %v1263, 1.0
        %v1289 = vsub.f32 %v1265, 1.0
        %v1290 = vsub.f32 %v1267, 1.0
        %v1291 = vsub.f32 %v1269, 1.0
        %v1292 = vsub.f32 %v1271, 1.0
        %v1293 = vsub.f32 %v1273, 1.0
        %v1294 = vsub.f32 %v1275, 1.0
        %v1295 = vsub.f32 %v1277, 1.0
        %v1296 = vsub.f32 %v1279, 1.0
        %v1297 = vsub.f32 %v1281, 1.0
        %v1298 = vsel %vm1218, %v1202, %v1282
        %v1299 = vsel %vm1219, %v1203, %v1283
        %v1300 = vsel %vm1220, %v1204, %v1284
        %v1301 = vsel %vm1221, %v1205, %v1285
        %v1302 = vsel %vm1222, %v1206, %v1286
        %v1303 = vsel %vm1223, %v1207, %v1287
        %v1304 = vsel %vm1224, %v1208, %v1288
        %v1305 = vsel %vm1225, %v1209, %v1289
        %v1306 = vsel %vm1226, %v1210, %v1290
        %v1307 = vsel %vm1227, %v1211, %v1291
        %v1308 = vsel %vm1228, %v1212, %v1292
        %v1309 = vsel %vm1229, %v1213, %v1293
        %v1310 = vsel %vm1230, %v1214, %v1294
        %v1311 = vsel %vm1231, %v1215, %v1295
        %v1312 = vsel %vm1232, %v1216, %v1296
        %v1313 = vsel %vm1233, %v1217, %v1297
        %v1314 = vld [vmem:[#allocation4] sm:$0x1]
        %vm1315 = vcmask 261120
        %v1316 = vsel %vm1315, %v1298, 0.0
        %v1317 = vsel %vm1315, %v1299, 0.0
        %v1318 = vadd.f32 %v1316, %v1317
        %v1319 = vsel %vm1315, %v1300, 0.0
        %v1320 = vadd.f32 %v1318, %v1319
        %v1321 = vsel %vm1315, %v1301, 0.0
        %v1322 = vadd.f32 %v1320, %v1321
        %v1323 = vsel %vm1315, %v1302, 0.0
        %v1324 = vadd.f32 %v1322, %v1323
        %v1325 = vsel %vm1315, %v1303, 0.0
        %v1326 = vadd.f32 %v1324, %v1325
        %v1327 = vsel %vm1315, %v1304, 0.0
        %v1328 = vadd.f32 %v1326, %v1327
        %v1329 = vsel %vm1315, %v1305, 0.0
        %v1330 = vadd.f32 %v1328, %v1329
        %v1331 = vsel %vm1315, %v1306, 0.0
        %v1332 = vadd.f32 %v1330, %v1331
        %v1333 = vsel %vm1315, %v1307, 0.0
        %v1334 = vadd.f32 %v1332, %v1333
        %v1335 = vsel %vm1315, %v1308, 0.0
        %v1336 = vadd.f32 %v1334, %v1335
        %v1337 = vsel %vm1315, %v1309, 0.0
        %v1338 = vadd.f32 %v1336, %v1337
        %v1339 = vsel %vm1315, %v1310, 0.0
        %v1340 = vadd.f32 %v1338, %v1339
        %v1341 = vsel %vm1315, %v1311, 0.0
        %v1342 = vadd.f32 %v1340, %v1341
        %v1343 = vsel %vm1315, %v1312, 0.0
        %v1344 = vadd.f32 %v1342, %v1343
        %v1345 = vsel %vm1315, %v1313, 0.0
        %v1346 = vadd.f32 %v1344, %v1345
        %v1347 = vrot.slane %v1346, 4
        %v1348 = vadd.f32 %v1346, %v1347
        %v1349 = vrot.slane %v1348, 2
        %v1350 = vadd.f32 %v1348, %v1349
        %v1351 = vrot.slane %v1350, 1
        %v1352 = vadd.f32 %v1350, %v1351
        %v1353 = vadd.f32 %v1314, %v1352
        %vm1354 = vcmask 253952
        %1355 = vst.msk [vmem:[#allocation4] sm:$0x1] %vm1354, %v1353
        %1356 = vset.pattern.permute.xlu0 1
        %1357 = vperm.xlu0 %1356, %v634
        %v1358 = vpop.permute.xlu0 %1357
        %1360 = vset.pattern.permute.xlu0 1
        %1361 = vperm.xlu0 %1360, %v637
        %v1362 = vpop.permute.xlu0 %1361
        %1364 = vset.pattern.permute.xlu0 1
        %1365 = vperm.xlu0 %1364, %v642
        %v1366 = vpop.permute.xlu0 %1365
        %1368 = vset.pattern.permute.xlu0 1
        %1369 = vperm.xlu0 %1368, %v645
        %v1370 = vpop.permute.xlu0 %1369
        %1372 = vset.pattern.permute.xlu0 1
        %1373 = vperm.xlu0 %1372, %v650
        %v1374 = vpop.permute.xlu0 %1373
        %1376 = vset.pattern.permute.xlu0 1
        %1377 = vperm.xlu0 %1376, %v653
        %v1378 = vpop.permute.xlu0 %1377
        %1380 = vset.pattern.permute.xlu0 1
        %1381 = vperm.xlu0 %1380, %v658
        %v1382 = vpop.permute.xlu0 %1381
        %1384 = vset.pattern.permute.xlu0 1
        %1385 = vperm.xlu0 %1384, %v661
        %v1386 = vpop.permute.xlu0 %1385
        %1388 = vset.pattern.permute.xlu0 1
        %1389 = vperm.xlu0 %1388, %v666
        %v1390 = vpop.permute.xlu0 %1389
        %1392 = vset.pattern.permute.xlu0 1
        %1393 = vperm.xlu0 %1392, %v669
        %v1394 = vpop.permute.xlu0 %1393
        %1396 = vset.pattern.permute.xlu0 1
        %1397 = vperm.xlu0 %1396, %v674
        %v1398 = vpop.permute.xlu0 %1397
        %1400 = vset.pattern.permute.xlu0 1
        %1401 = vperm.xlu0 %1400, %v677
        %v1402 = vpop.permute.xlu0 %1401
        %1404 = vset.pattern.permute.xlu0 1
        %1405 = vperm.xlu0 %1404, %v682
        %v1406 = vpop.permute.xlu0 %1405
        %1408 = vset.pattern.permute.xlu0 1
        %1409 = vperm.xlu0 %1408, %v685
        %v1410 = vpop.permute.xlu0 %1409
        %1412 = vset.pattern.permute.xlu0 1
        %1413 = vperm.xlu0 %1412, %v690
        %v1414 = vpop.permute.xlu0 %1413
        %1416 = vset.pattern.permute.xlu0 1
        %1417 = vperm.xlu0 %1416, %v693
        %v1418 = vpop.permute.xlu0 %1417
        %v1420 = vlaneseq
        %v1421 = vshrl.u32 %v1420, 7
        %v1422 = vsub.s32 1, %v1421
        %v1423 = vrot.slane %v704, %v1422
        %v1424 = vadd.f32 %v1358, %v1423
        %v1425 = vadd.f32 %v1362, %v1423
        %v1426 = vadd.f32 %v1366, %v1423
        %v1427 = vadd.f32 %v1370, %v1423
        %v1428 = vadd.f32 %v1374, %v1423
        %v1429 = vadd.f32 %v1378, %v1423
        %v1430 = vadd.f32 %v1382, %v1423
        %v1431 = vadd.f32 %v1386, %v1423
        %v1432 = vadd.f32 %v1390, %v1423
        %v1433 = vadd.f32 %v1394, %v1423
        %v1434 = vadd.f32 %v1398, %v1423
        %v1435 = vadd.f32 %v1402, %v1423
        %v1436 = vadd.f32 %v1406, %v1423
        %v1437 = vadd.f32 %v1410, %v1423
        %v1438 = vadd.f32 %v1414, %v1423
        %v1439 = vadd.f32 %v1418, %v1423
        %v1440 = vmul.f32 %v1424, 0.2
        %v1441 = vmul.f32 %v1425, 0.2
        %v1442 = vmul.f32 %v1426, 0.2
        %v1443 = vmul.f32 %v1427, 0.2
        %v1444 = vmul.f32 %v1428, 0.2
        %v1445 = vmul.f32 %v1429, 0.2
        %v1446 = vmul.f32 %v1430, 0.2
        %v1447 = vmul.f32 %v1431, 0.2
        %v1448 = vmul.f32 %v1432, 0.2
        %v1449 = vmul.f32 %v1433, 0.2
        %v1450 = vmul.f32 %v1434, 0.2
        %v1451 = vmul.f32 %v1435, 0.2
        %v1452 = vmul.f32 %v1436, 0.2
        %v1453 = vmul.f32 %v1437, 0.2
        %v1454 = vmul.f32 %v1438, 0.2
        %v1455 = vmul.f32 %v1439, 0.2
        %v1456 = vmax.f32 %v1424, %v1440
        %v1457 = vmax.f32 %v1425, %v1441
        %v1458 = vmax.f32 %v1426, %v1442
        %v1459 = vmax.f32 %v1427, %v1443
        %v1460 = vmax.f32 %v1428, %v1444
        %v1461 = vmax.f32 %v1429, %v1445
        %v1462 = vmax.f32 %v1430, %v1446
        %v1463 = vmax.f32 %v1431, %v1447
        %v1464 = vmax.f32 %v1432, %v1448
        %v1465 = vmax.f32 %v1433, %v1449
        %v1466 = vmax.f32 %v1434, %v1450
        %v1467 = vmax.f32 %v1435, %v1451
        %v1468 = vmax.f32 %v1436, %v1452
        %v1469 = vmax.f32 %v1437, %v1453
        %v1470 = vmax.f32 %v1438, %v1454
        %v1471 = vmax.f32 %v1439, %v1455
        %v1472 = vsel %vm937, %v1456, -9e+15
        %v1473 = vsel %vm938, %v1457, -9e+15
        %v1474 = vsel %vm939, %v1458, -9e+15
        %v1475 = vsel %vm940, %v1459, -9e+15
        %v1476 = vsel %vm941, %v1460, -9e+15
        %v1477 = vsel %vm942, %v1461, -9e+15
        %v1478 = vsel %vm943, %v1462, -9e+15
        %v1479 = vsel %vm944, %v1463, -9e+15
        %v1480 = vsel %vm945, %v1464, -9e+15
        %v1481 = vsel %vm946, %v1465, -9e+15
        %v1482 = vsel %vm947, %v1466, -9e+15
        %v1483 = vsel %vm948, %v1467, -9e+15
        %v1484 = vsel %vm949, %v1468, -9e+15
        %v1485 = vsel %vm950, %v1469, -9e+15
        %v1486 = vsel %vm951, %v1470, -9e+15
        %v1487 = vsel %vm952, %v1471, -9e+15
        %1488 = vmax.xlane.f32.xlu0 %v1472
        %v1489 = vpop.xlane.xlu0 %1488
        %1490 = vmax.xlane.f32.xlu0 %v1473
        %v1491 = vpop.xlane.xlu0 %1490
        %1492 = vmax.xlane.f32.xlu0 %v1474
        %v1493 = vpop.xlane.xlu0 %1492
        %1494 = vmax.xlane.f32.xlu0 %v1475
        %v1495 = vpop.xlane.xlu0 %1494
        %1496 = vmax.xlane.f32.xlu0 %v1476
        %v1497 = vpop.xlane.xlu0 %1496
        %1498 = vmax.xlane.f32.xlu0 %v1477
        %v1499 = vpop.xlane.xlu0 %1498
        %1500 = vmax.xlane.f32.xlu0 %v1478
        %v1501 = vpop.xlane.xlu0 %1500
        %1502 = vmax.xlane.f32.xlu0 %v1479
        %v1503 = vpop.xlane.xlu0 %1502
        %1504 = vmax.xlane.f32.xlu0 %v1480
        %v1505 = vpop.xlane.xlu0 %1504
        %1506 = vmax.xlane.f32.xlu0 %v1481
        %v1507 = vpop.xlane.xlu0 %1506
        %1508 = vmax.xlane.f32.xlu0 %v1482
        %v1509 = vpop.xlane.xlu0 %1508
        %1510 = vmax.xlane.f32.xlu0 %v1483
        %v1511 = vpop.xlane.xlu0 %1510
        %1512 = vmax.xlane.f32.xlu0 %v1484
        %v1513 = vpop.xlane.xlu0 %1512
        %1514 = vmax.xlane.f32.xlu0 %v1485
        %v1515 = vpop.xlane.xlu0 %1514
        %1516 = vmax.xlane.f32.xlu0 %v1486
        %v1517 = vpop.xlane.xlu0 %1516
        %1518 = vmax.xlane.f32.xlu0 %v1487
        %v1519 = vpop.xlane.xlu0 %1518
        %v1520 = vsub.f32 %v1472, %v1489
        %v1521 = vsub.f32 %v1473, %v1491
        %v1522 = vsub.f32 %v1474, %v1493
        %v1523 = vsub.f32 %v1475, %v1495
        %v1524 = vsub.f32 %v1476, %v1497
        %v1525 = vsub.f32 %v1477, %v1499
        %v1526 = vsub.f32 %v1478, %v1501
        %v1527 = vsub.f32 %v1479, %v1503
        %v1528 = vsub.f32 %v1480, %v1505
        %v1529 = vsub.f32 %v1481, %v1507
        %v1530 = vsub.f32 %v1482, %v1509
        %v1531 = vsub.f32 %v1483, %v1511
        %v1532 = vsub.f32 %v1484, %v1513
        %v1533 = vsub.f32 %v1485, %v1515
        %v1534 = vsub.f32 %v1486, %v1517
        %v1535 = vsub.f32 %v1487, %v1519
        %v1536 = vmul.f32 %v1520, 1.442695
        %v1537 = vpow.pop %v1536
        %v1538 = vmul.f32 %v1521, 1.442695
        %v1539 = vpow.pop %v1538
        %v1540 = vmul.f32 %v1522, 1.442695
        %v1541 = vpow.pop %v1540
        %v1542 = vmul.f32 %v1523, 1.442695
        %v1543 = vpow.pop %v1542
        %v1544 = vmul.f32 %v1524, 1.442695
        %v1545 = vpow.pop %v1544
        %v1546 = vmul.f32 %v1525, 1.442695
        %v1547 = vpow.pop %v1546
        %v1548 = vmul.f32 %v1526, 1.442695
        %v1549 = vpow.pop %v1548
        %v1550 = vmul.f32 %v1527, 1.442695
        %v1551 = vpow.pop %v1550
        %v1552 = vmul.f32 %v1528, 1.442695
        %v1553 = vpow.pop %v1552
        %v1554 = vmul.f32 %v1529, 1.442695
        %v1555 = vpow.pop %v1554
        %v1556 = vmul.f32 %v1530, 1.442695
        %v1557 = vpow.pop %v1556
        %v1558 = vmul.f32 %v1531, 1.442695
        %v1559 = vpow.pop %v1558
        %v1560 = vmul.f32 %v1532, 1.442695
        %v1561 = vpow.pop %v1560
        %v1562 = vmul.f32 %v1533, 1.442695
        %v1563 = vpow.pop %v1562
        %v1564 = vmul.f32 %v1534, 1.442695
        %v1565 = vpow.pop %v1564
        %v1566 = vmul.f32 %v1535, 1.442695
        %v1567 = vpow.pop %v1566
        %1568 = vadd.xlane.f32.xlu0 %v1537
        %v1569 = vpop.xlane.xlu0 %1568
        %1570 = vadd.xlane.f32.xlu0 %v1539
        %v1571 = vpop.xlane.xlu0 %1570
        %1572 = vadd.xlane.f32.xlu0 %v1541
        %v1573 = vpop.xlane.xlu0 %1572
        %1574 = vadd.xlane.f32.xlu0 %v1543
        %v1575 = vpop.xlane.xlu0 %1574
        %1576 = vadd.xlane.f32.xlu0 %v1545
        %v1577 = vpop.xlane.xlu0 %1576
        %1578 = vadd.xlane.f32.xlu0 %v1547
        %v1579 = vpop.xlane.xlu0 %1578
        %1580 = vadd.xlane.f32.xlu0 %v1549
        %v1581 = vpop.xlane.xlu0 %1580
        %1582 = vadd.xlane.f32.xlu0 %v1551
        %v1583 = vpop.xlane.xlu0 %1582
        %1584 = vadd.xlane.f32.xlu0 %v1553
        %v1585 = vpop.xlane.xlu0 %1584
        %1586 = vadd.xlane.f32.xlu0 %v1555
        %v1587 = vpop.xlane.xlu0 %1586
        %1588 = vadd.xlane.f32.xlu0 %v1557
        %v1589 = vpop.xlane.xlu0 %1588
        %1590 = vadd.xlane.f32.xlu0 %v1559
        %v1591 = vpop.xlane.xlu0 %1590
        %1592 = vadd.xlane.f32.xlu0 %v1561
        %v1593 = vpop.xlane.xlu0 %1592
        %1594 = vadd.xlane.f32.xlu0 %v1563
        %v1595 = vpop.xlane.xlu0 %1594
        %1596 = vadd.xlane.f32.xlu0 %v1565
        %v1597 = vpop.xlane.xlu0 %1596
        %1598 = vadd.xlane.f32.xlu0 %v1567
        %v1599 = vpop.xlane.xlu0 %1598
        %v1600 = vpack.c.bf16 %v1539, %v1537
        %v1601 = vpack.c.bf16 %v1543, %v1541
        %v1602 = vpack.c.bf16 %v1547, %v1545
        %v1603 = vpack.c.bf16 %v1551, %v1549
        %v1604 = vpack.c.bf16 %v1555, %v1553
        %v1605 = vpack.c.bf16 %v1559, %v1557
        %v1606 = vpack.c.bf16 %v1563, %v1561
        %v1607 = vpack.c.bf16 %v1567, %v1565
        %1616 = vrot.lane.b32.xlu0 %v579, 96
        %v1617 = vpop.permute.xlu0 %1616
        %1618 = vrot.lane.b32.xlu0 %v580, 96
        %v1619 = vpop.permute.xlu0 %1618
        %1620 = vrot.lane.b32.xlu0 %v581, 96
        %v1621 = vpop.permute.xlu0 %1620
        %1622 = vrot.lane.b32.xlu0 %v582, 96
        %v1623 = vpop.permute.xlu0 %1622
        %1624 = vrot.lane.b32.xlu0 %v583, 96
        %v1625 = vpop.permute.xlu0 %1624
        %1626 = vrot.lane.b32.xlu0 %v584, 96
        %v1627 = vpop.permute.xlu0 %1626
        %1628 = vrot.lane.b32.xlu0 %v585, 96
        %v1629 = vpop.permute.xlu0 %1628
        %1630 = vrot.lane.b32.xlu0 %v586, 96
        %v1631 = vpop.permute.xlu0 %1630
        %1640 = vmatprep.subr.bf16.mxu0 0
        %1641 = vmatpush1.bf16.msra.mxu0 %v1617
        %1642 = vmatprep.subr.bf16.mxu0 0
        %1643 = vmatpush1.bf16.msra.mxu0 %v1619
        %1644 = vmatprep.subr.bf16.mxu0 0
        %1645 = vmatpush1.bf16.msra.mxu0 %v1621
        %1646 = vmatprep.subr.bf16.mxu0 0
        %1647 = vmatpush1.bf16.msra.mxu0 %v1623
        %1648 = vmatprep.subr.bf16.mxu0 0
        %1649 = vmatpush1.bf16.msra.mxu0 %v1625
        %1650 = vmatprep.subr.bf16.mxu0 0
        %1651 = vmatpush1.bf16.msra.mxu0 %v1627
        %1652 = vmatprep.subr.bf16.mxu0 0
        %1653 = vmatpush1.bf16.msra.mxu0 %v1629
        %1654 = vmatprep.subr.bf16.mxu0 0
        %1655 = vmatpush1.bf16.msra.mxu0 %v1631
        %1656 = vmatprep.subr.bf16.mxu0 0
        %1657 = vmatpush1.bf16.msra.mxu0 0
        %1658 = vmatprep.subr.bf16.mxu0 0
        %1659 = vmatpush1.bf16.msra.mxu0 0
        %1660 = vmatprep.subr.bf16.mxu0 0
        %1661 = vmatpush1.bf16.msra.mxu0 0
        %1662 = vmatprep.subr.bf16.mxu0 0
        %1663 = vmatpush1.bf16.msra.mxu0 0
        %1664 = vmatprep.subr.bf16.mxu0 0
        %1665 = vmatpush1.bf16.msra.mxu0 0
        %1666 = vmatprep.subr.bf16.mxu0 0
        %1667 = vmatpush1.bf16.msra.mxu0 0
        %1668 = vmatprep.subr.bf16.mxu0 0
        %1669 = vmatpush1.bf16.msra.mxu0 0
        %1670 = vmatprep.subr.bf16.mxu0 0
        %1671 = vmatpush1.bf16.msra.mxu0 0
        %1672 = vmatprep.mubr.bf16.mxu0 0
        %1673 = vmatmul.mubr.bf16.gmra.mrb[0].mxu0 %v1600
        %v1674 = vpop.f32.mrb[0].mxu0
        %v1675 = vadd.f32 0.0, %v1674
        %v1676 = vpop.f32.mrb[0].mxu0
        %v1677 = vpop.f32.mrb[0].mxu0
        %v1678 = vadd.f32 0.0, %v1677
        %v1679 = vpop.f32.mrb[0].mxu0
        %1680 = vmatprep.mubr.bf16.mxu0 0
        %1681 = vmatmul.mubr.bf16.gmra.mrb[0].mxu0 %v1601
        %v1682 = vpop.f32.mrb[0].mxu0
        %v1683 = vadd.f32 0.0, %v1682
        %v1684 = vpop.f32.mrb[0].mxu0
        %v1685 = vpop.f32.mrb[0].mxu0
        %v1686 = vadd.f32 0.0, %v1685
        %v1687 = vpop.f32.mrb[0].mxu0
        %1688 = vmatprep.mubr.bf16.mxu0 0
        %1689 = vmatmul.mubr.bf16.gmra.mrb[0].mxu0 %v1602
        %v1690 = vpop.f32.mrb[0].mxu0
        %v1691 = vadd.f32 0.0, %v1690
        %v1692 = vpop.f32.mrb[0].mxu0
        %v1693 = vpop.f32.mrb[0].mxu0
        %v1694 = vadd.f32 0.0, %v1693
        %v1695 = vpop.f32.mrb[0].mxu0
        %1696 = vmatprep.mubr.bf16.mxu0 0
        %1697 = vmatmul.mubr.bf16.gmra.mrb[0].mxu0 %v1603
        %v1698 = vpop.f32.mrb[0].mxu0
        %v1699 = vadd.f32 0.0, %v1698
        %v1700 = vpop.f32.mrb[0].mxu0
        %v1701 = vpop.f32.mrb[0].mxu0
        %v1702 = vadd.f32 0.0, %v1701
        %v1703 = vpop.f32.mrb[0].mxu0
        %1704 = vmatprep.mubr.bf16.mxu0 0
        %1705 = vmatmul.mubr.bf16.gmra.mrb[0].mxu0 %v1604
        %v1706 = vpop.f32.mrb[0].mxu0
        %v1707 = vadd.f32 0.0, %v1706
        %v1708 = vpop.f32.mrb[0].mxu0
        %v1709 = vpop.f32.mrb[0].mxu0
        %v1710 = vadd.f32 0.0, %v1709
        %v1711 = vpop.f32.mrb[0].mxu0
        %1712 = vmatprep.mubr.bf16.mxu0 0
        %1713 = vmatmul.mubr.bf16.gmra.mrb[0].mxu0 %v1605
        %v1714 = vpop.f32.mrb[0].mxu0
        %v1715 = vadd.f32 0.0, %v1714
        %v1716 = vpop.f32.mrb[0].mxu0
        %v1717 = vpop.f32.mrb[0].mxu0
        %v1718 = vadd.f32 0.0, %v1717
        %v1719 = vpop.f32.mrb[0].mxu0
        %1720 = vmatprep.mubr.bf16.mxu0 0
        %1721 = vmatmul.mubr.bf16.gmra.mrb[0].mxu0 %v1606
        %v1722 = vpop.f32.mrb[0].mxu0
        %v1723 = vadd.f32 0.0, %v1722
        %v1724 = vpop.f32.mrb[0].mxu0
        %v1725 = vpop.f32.mrb[0].mxu0
        %v1726 = vadd.f32 0.0, %v1725
        %v1727 = vpop.f32.mrb[0].mxu0
        %1728 = vmatprep.mubr.bf16.mxu0 0
        %1729 = vmatmul.mubr.bf16.gmra.mrb[0].mxu0 %v1607
        %v1730 = vpop.f32.mrb[0].mxu0
        %v1731 = vadd.f32 0.0, %v1730
        %v1732 = vpop.f32.mrb[0].mxu0
        %v1733 = vpop.f32.mrb[0].mxu0
        %v1734 = vadd.f32 0.0, %v1733
        %v1735 = vpop.f32.mrb[0].mxu0
        %1736 = vdwg.mxu0
        %v1737 = vrcp.pop %v1569
        %v1738 = vrcp.pop %v1571
        %v1739 = vrcp.pop %v1573
        %v1740 = vrcp.pop %v1575
        %v1741 = vrcp.pop %v1577
        %v1742 = vrcp.pop %v1579
        %v1743 = vrcp.pop %v1581
        %v1744 = vrcp.pop %v1583
        %v1745 = vrcp.pop %v1585
        %v1746 = vrcp.pop %v1587
        %v1747 = vrcp.pop %v1589
        %v1748 = vrcp.pop %v1591
        %v1749 = vrcp.pop %v1593
        %v1750 = vrcp.pop %v1595
        %v1751 = vrcp.pop %v1597
        %v1752 = vrcp.pop %v1599
        %v1753 = vmul.f32 %v1675, %v1737
        %v1754 = vmul.f32 %v1678, %v1738
        %v1755 = vmul.f32 %v1683, %v1739
        %v1756 = vmul.f32 %v1686, %v1740
        %v1757 = vmul.f32 %v1691, %v1741
        %v1758 = vmul.f32 %v1694, %v1742
        %v1759 = vmul.f32 %v1699, %v1743
        %v1760 = vmul.f32 %v1702, %v1744
        %v1761 = vmul.f32 %v1707, %v1745
        %v1762 = vmul.f32 %v1710, %v1746
        %v1763 = vmul.f32 %v1715, %v1747
        %v1764 = vmul.f32 %v1718, %v1748
        %v1765 = vmul.f32 %v1723, %v1749
        %v1766 = vmul.f32 %v1726, %v1750
        %v1767 = vmul.f32 %v1731, %v1751
        %v1768 = vmul.f32 %v1734, %v1752
        %vm1769 = vcmp.gt.f32.partialorder %v1753, 0.0
        %vm1770 = vcmp.gt.f32.partialorder %v1754, 0.0
        %vm1771 = vcmp.gt.f32.partialorder %v1755, 0.0
        %vm1772 = vcmp.gt.f32.partialorder %v1756, 0.0
        %vm1773 = vcmp.gt.f32.partialorder %v1757, 0.0
        %vm1774 = vcmp.gt.f32.partialorder %v1758, 0.0
        %vm1775 = vcmp.gt.f32.partialorder %v1759, 0.0
        %vm1776 = vcmp.gt.f32.partialorder %v1760, 0.0
        %vm1777 = vcmp.gt.f32.partialorder %v1761, 0.0
        %vm1778 = vcmp.gt.f32.partialorder %v1762, 0.0
        %vm1779 = vcmp.gt.f32.partialorder %v1763, 0.0
        %vm1780 = vcmp.gt.f32.partialorder %v1764, 0.0
        %vm1781 = vcmp.gt.f32.partialorder %v1765, 0.0
        %vm1782 = vcmp.gt.f32.partialorder %v1766, 0.0
        %vm1783 = vcmp.gt.f32.partialorder %v1767, 0.0
        %vm1784 = vcmp.gt.f32.partialorder %v1768, 0.0
        %v1785 = vmin.f32 %v1753, 0.0
        %v1786 = vmin.f32 %v1754, 0.0
        %v1787 = vmin.f32 %v1755, 0.0
        %v1788 = vmin.f32 %v1756, 0.0
        %v1789 = vmin.f32 %v1757, 0.0
        %v1790 = vmin.f32 %v1758, 0.0
        %v1791 = vmin.f32 %v1759, 0.0
        %v1792 = vmin.f32 %v1760, 0.0
        %v1793 = vmin.f32 %v1761, 0.0
        %v1794 = vmin.f32 %v1762, 0.0
        %v1795 = vmin.f32 %v1763, 0.0
        %v1796 = vmin.f32 %v1764, 0.0
        %v1797 = vmin.f32 %v1765, 0.0
        %v1798 = vmin.f32 %v1766, 0.0
        %v1799 = vmin.f32 %v1767, 0.0
        %v1800 = vmin.f32 %v1768, 0.0
        %v1801 = vmul.f32 %v1785, 1.442695
        %v1802 = vpow.pop %v1801
        %v1803 = vmul.f32 %v1786, 1.442695
        %v1804 = vpow.pop %v1803
        %v1805 = vmul.f32 %v1787, 1.442695
        %v1806 = vpow.pop %v1805
        %v1807 = vmul.f32 %v1788, 1.442695
        %v1808 = vpow.pop %v1807
        %v1809 = vmul.f32 %v1789, 1.442695
        %v1810 = vpow.pop %v1809
        %v1811 = vmul.f32 %v1790, 1.442695
        %v1812 = vpow.pop %v1811
        %v1813 = vmul.f32 %v1791, 1.442695
        %v1814 = vpow.pop %v1813
        %v1815 = vmul.f32 %v1792, 1.442695
        %v1816 = vpow.pop %v1815
        %v1817 = vmul.f32 %v1793, 1.442695
        %v1818 = vpow.pop %v1817
        %v1819 = vmul.f32 %v1794, 1.442695
        %v1820 = vpow.pop %v1819
        %v1821 = vmul.f32 %v1795, 1.442695
        %v1822 = vpow.pop %v1821
        %v1823 = vmul.f32 %v1796, 1.442695
        %v1824 = vpow.pop %v1823
        %v1825 = vmul.f32 %v1797, 1.442695
        %v1826 = vpow.pop %v1825
        %v1827 = vmul.f32 %v1798, 1.442695
        %v1828 = vpow.pop %v1827
        %v1829 = vmul.f32 %v1799, 1.442695
        %v1830 = vpow.pop %v1829
        %v1831 = vmul.f32 %v1800, 1.442695
        %v1832 = vpow.pop %v1831
        %v1833 = vsub.f32 %v1802, 1.0
        %v1834 = vsub.f32 %v1804, 1.0
        %v1835 = vsub.f32 %v1806, 1.0
        %v1836 = vsub.f32 %v1808, 1.0
        %v1837 = vsub.f32 %v1810, 1.0
        %v1838 = vsub.f32 %v1812, 1.0
        %v1839 = vsub.f32 %v1814, 1.0
        %v1840 = vsub.f32 %v1816, 1.0
        %v1841 = vsub.f32 %v1818, 1.0
        %v1842 = vsub.f32 %v1820, 1.0
        %v1843 = vsub.f32 %v1822, 1.0
        %v1844 = vsub.f32 %v1824, 1.0
        %v1845 = vsub.f32 %v1826, 1.0
        %v1846 = vsub.f32 %v1828, 1.0
        %v1847 = vsub.f32 %v1830, 1.0
        %v1848 = vsub.f32 %v1832, 1.0
        %v1849 = vsel %vm1769, %v1753, %v1833
        %v1850 = vsel %vm1770, %v1754, %v1834
        %v1851 = vsel %vm1771, %v1755, %v1835
        %v1852 = vsel %vm1772, %v1756, %v1836
        %v1853 = vsel %vm1773, %v1757, %v1837
        %v1854 = vsel %vm1774, %v1758, %v1838
        %v1855 = vsel %vm1775, %v1759, %v1839
        %v1856 = vsel %vm1776, %v1760, %v1840
        %v1857 = vsel %vm1777, %v1761, %v1841
        %v1858 = vsel %vm1778, %v1762, %v1842
        %v1859 = vsel %vm1779, %v1763, %v1843
        %v1860 = vsel %vm1780, %v1764, %v1844
        %v1861 = vsel %vm1781, %v1765, %v1845
        %v1862 = vsel %vm1782, %v1766, %v1846
        %v1863 = vsel %vm1783, %v1767, %v1847
        %v1864 = vsel %vm1784, %v1768, %v1848
        %v1865 = vld [vmem:[#allocation4] sm:$0x1]
        %v1866 = vsel %vm1315, %v1849, 0.0
        %v1867 = vsel %vm1315, %v1850, 0.0
        %v1868 = vadd.f32 %v1866, %v1867
        %v1869 = vsel %vm1315, %v1851, 0.0
        %v1870 = vadd.f32 %v1868, %v1869
        %v1871 = vsel %vm1315, %v1852, 0.0
        %v1872 = vadd.f32 %v1870, %v1871
        %v1873 = vsel %vm1315, %v1853, 0.0
        %v1874 = vadd.f32 %v1872, %v1873
        %v1875 = vsel %vm1315, %v1854, 0.0
        %v1876 = vadd.f32 %v1874, %v1875
        %v1877 = vsel %vm1315, %v1855, 0.0
        %v1878 = vadd.f32 %v1876, %v1877
        %v1879 = vsel %vm1315, %v1856, 0.0
        %v1880 = vadd.f32 %v1878, %v1879
        %v1881 = vsel %vm1315, %v1857, 0.0
        %v1882 = vadd.f32 %v1880, %v1881
        %v1883 = vsel %vm1315, %v1858, 0.0
        %v1884 = vadd.f32 %v1882, %v1883
        %v1885 = vsel %vm1315, %v1859, 0.0
        %v1886 = vadd.f32 %v1884, %v1885
        %v1887 = vsel %vm1315, %v1860, 0.0
        %v1888 = vadd.f32 %v1886, %v1887
        %v1889 = vsel %vm1315, %v1861, 0.0
        %v1890 = vadd.f32 %v1888, %v1889
        %v1891 = vsel %vm1315, %v1862, 0.0
        %v1892 = vadd.f32 %v1890, %v1891
        %v1893 = vsel %vm1315, %v1863, 0.0
        %v1894 = vadd.f32 %v1892, %v1893
        %v1895 = vsel %vm1315, %v1864, 0.0
        %v1896 = vadd.f32 %v1894, %v1895
        %v1897 = vrot.slane %v1896, 4
        %v1898 = vadd.f32 %v1896, %v1897
        %v1899 = vrot.slane %v1898, 2
        %v1900 = vadd.f32 %v1898, %v1899
        %v1901 = vrot.slane %v1900, 1
        %v1902 = vadd.f32 %v1900, %v1901
        %v1905 = vunpack.c.l.s4 1966171168
        %v1906 = vunpack.c.0.s8 %v1905
        %v1907 = vlaneseq
        %v1908 = vshrl.u32 %v1907, 7
        %v1909 = vsub.s32 %v1906, %v1908
        %v1910 = vrot.slane %v1902, %v1909
        %v1912 = vunpack.c.l.s4 1966171168
        %v1913 = vunpack.c.0.s8 %v1912
        %v1914 = vlaneseq
        %v1915 = vshrl.u32 %v1914, 7
        %v1916 = vsub.s32 %v1913, %v1915
        %v1917 = vrot.slane %v1910, %v1916
        %1918 = vrot.lane.b32.xlu0 %v1917, 32
        %v1919 = vpop.permute.xlu0 %1918
        %v1921 = vadd.f32 %v1865, %v1919
        %vm1922 = vcmask 516352
        %1923 = vst.msk [vmem:[#allocation4] sm:$0x1] %vm1922, %v1921
        %1924 = vset.pattern.permute.xlu0 2
        %1925 = vperm.xlu0 %1924, %v634
        %v1926 = vpop.permute.xlu0 %1925
        %1928 = vset.pattern.permute.xlu0 2
        %1929 = vperm.xlu0 %1928, %v637
        %v1930 = vpop.permute.xlu0 %1929
        %1932 = vset.pattern.permute.xlu0 2
        %1933 = vperm.xlu0 %1932, %v642
        %v1934 = vpop.permute.xlu0 %1933
        %1936 = vset.pattern.permute.xlu0 2
        %1937 = vperm.xlu0 %1936, %v645
        %v1938 = vpop.permute.xlu0 %1937
        %1940 = vset.pattern.permute.xlu0 2
        %1941 = vperm.xlu0 %1940, %v650
        %v1942 = vpop.permute.xlu0 %1941
        %1944 = vset.pattern.permute.xlu0 2
        %1945 = vperm.xlu0 %1944, %v653
        %v1946 = vpop.permute.xlu0 %1945
        %1948 = vset.pattern.permute.xlu0 2
        %1949 = vperm.xlu0 %1948, %v658
        %v1950 = vpop.permute.xlu0 %1949
        %1952 = vset.pattern.permute.xlu0 2
        %1953 = vperm.xlu0 %1952, %v661
        %v1954 = vpop.permute.xlu0 %1953
        %1956 = vset.pattern.permute.xlu0 2
        %1957 = vperm.xlu0 %1956, %v666
        %v1958 = vpop.permute.xlu0 %1957
        %1960 = vset.pattern.permute.xlu0 2
        %1961 = vperm.xlu0 %1960, %v669
        %v1962 = vpop.permute.xlu0 %1961
        %1964 = vset.pattern.permute.xlu0 2
        %1965 = vperm.xlu0 %1964, %v674
        %v1966 = vpop.permute.xlu0 %1965
        %1968 = vset.pattern.permute.xlu0 2
        %1969 = vperm.xlu0 %1968, %v677
        %v1970 = vpop.permute.xlu0 %1969
        %1972 = vset.pattern.permute.xlu0 2
        %1973 = vperm.xlu0 %1972, %v682
        %v1974 = vpop.permute.xlu0 %1973
        %1976 = vset.pattern.permute.xlu0 2
        %1977 = vperm.xlu0 %1976, %v685
        %v1978 = vpop.permute.xlu0 %1977
        %1980 = vset.pattern.permute.xlu0 2
        %1981 = vperm.xlu0 %1980, %v690
        %v1982 = vpop.permute.xlu0 %1981
        %1984 = vset.pattern.permute.xlu0 2
        %1985 = vperm.xlu0 %1984, %v693
        %v1986 = vpop.permute.xlu0 %1985
        %v1988 = vlaneseq
        %v1989 = vshrl.u32 %v1988, 7
        %v1990 = vsub.s32 2, %v1989
        %v1991 = vrot.slane %v704, %v1990
        %v1992 = vadd.f32 %v1926, %v1991
        %v1993 = vadd.f32 %v1930, %v1991
        %v1994 = vadd.f32 %v1934, %v1991
        %v1995 = vadd.f32 %v1938, %v1991
        %v1996 = vadd.f32 %v1942, %v1991
        %v1997 = vadd.f32 %v1946, %v1991
        %v1998 = vadd.f32 %v1950, %v1991
        %v1999 = vadd.f32 %v1954, %v1991
        %v2000 = vadd.f32 %v1958, %v1991
        %v2001 = vadd.f32 %v1962, %v1991
        %v2002 = vadd.f32 %v1966, %v1991
        %v2003 = vadd.f32 %v1970, %v1991
        %v2004 = vadd.f32 %v1974, %v1991
        %v2005 = vadd.f32 %v1978, %v1991
        %v2006 = vadd.f32 %v1982, %v1991
        %v2007 = vadd.f32 %v1986, %v1991
        %v2008 = vmul.f32 %v1992, 0.2
        %v2009 = vmul.f32 %v1993, 0.2
        %v2010 = vmul.f32 %v1994, 0.2
        %v2011 = vmul.f32 %v1995, 0.2
        %v2012 = vmul.f32 %v1996, 0.2
        %v2013 = vmul.f32 %v1997, 0.2
        %v2014 = vmul.f32 %v1998, 0.2
        %v2015 = vmul.f32 %v1999, 0.2
        %v2016 = vmul.f32 %v2000, 0.2
        %v2017 = vmul.f32 %v2001, 0.2
        %v2018 = vmul.f32 %v2002, 0.2
        %v2019 = vmul.f32 %v2003, 0.2
        %v2020 = vmul.f32 %v2004, 0.2
        %v2021 = vmul.f32 %v2005, 0.2
        %v2022 = vmul.f32 %v2006, 0.2
        %v2023 = vmul.f32 %v2007, 0.2
        %v2024 = vmax.f32 %v1992, %v2008
        %v2025 = vmax.f32 %v1993, %v2009
        %v2026 = vmax.f32 %v1994, %v2010
        %v2027 = vmax.f32 %v1995, %v2011
        %v2028 = vmax.f32 %v1996, %v2012
        %v2029 = vmax.f32 %v1997, %v2013
        %v2030 = vmax.f32 %v1998, %v2014
        %v2031 = vmax.f32 %v1999, %v2015
        %v2032 = vmax.f32 %v2000, %v2016
        %v2033 = vmax.f32 %v2001, %v2017
        %v2034 = vmax.f32 %v2002, %v2018
        %v2035 = vmax.f32 %v2003, %v2019
        %v2036 = vmax.f32 %v2004, %v2020
        %v2037 = vmax.f32 %v2005, %v2021
        %v2038 = vmax.f32 %v2006, %v2022
        %v2039 = vmax.f32 %v2007, %v2023
        %v2040 = vsel %vm937, %v2024, -9e+15
        %v2041 = vsel %vm938, %v2025, -9e+15
        %v2042 = vsel %vm939, %v2026, -9e+15
        %v2043 = vsel %vm940, %v2027, -9e+15
        %v2044 = vsel %vm941, %v2028, -9e+15
        %v2045 = vsel %vm942, %v2029, -9e+15
        %v2046 = vsel %vm943, %v2030, -9e+15
        %v2047 = vsel %vm944, %v2031, -9e+15
        %v2048 = vsel %vm945, %v2032, -9e+15
        %v2049 = vsel %vm946, %v2033, -9e+15
        %v2050 = vsel %vm947, %v2034, -9e+15
        %v2051 = vsel %vm948, %v2035, -9e+15
        %v2052 = vsel %vm949, %v2036, -9e+15
        %v2053 = vsel %vm950, %v2037, -9e+15
        %v2054 = vsel %vm951, %v2038, -9e+15
        %v2055 = vsel %vm952, %v2039, -9e+15
        %2056 = vmax.xlane.f32.xlu0 %v2040
        %v2057 = vpop.xlane.xlu0 %2056
        %2058 = vmax.xlane.f32.xlu0 %v2041
        %v2059 = vpop.xlane.xlu0 %2058
        %2060 = vmax.xlane.f32.xlu0 %v2042
        %v2061 = vpop.xlane.xlu0 %2060
        %2062 = vmax.xlane.f32.xlu0 %v2043
        %v2063 = vpop.xlane.xlu0 %2062
        %2064 = vmax.xlane.f32.xlu0 %v2044
        %v2065 = vpop.xlane.xlu0 %2064
        %2066 = vmax.xlane.f32.xlu0 %v2045
        %v2067 = vpop.xlane.xlu0 %2066
        %2068 = vmax.xlane.f32.xlu0 %v2046
        %v2069 = vpop.xlane.xlu0 %2068
        %2070 = vmax.xlane.f32.xlu0 %v2047
        %v2071 = vpop.xlane.xlu0 %2070
        %2072 = vmax.xlane.f32.xlu0 %v2048
        %v2073 = vpop.xlane.xlu0 %2072
        %2074 = vmax.xlane.f32.xlu0 %v2049
        %v2075 = vpop.xlane.xlu0 %2074
        %2076 = vmax.xlane.f32.xlu0 %v2050
        %v2077 = vpop.xlane.xlu0 %2076
        %2078 = vmax.xlane.f32.xlu0 %v2051
        %v2079 = vpop.xlane.xlu0 %2078
        %2080 = vmax.xlane.f32.xlu0 %v2052
        %v2081 = vpop.xlane.xlu0 %2080
        %2082 = vmax.xlane.f32.xlu0 %v2053
        %v2083 = vpop.xlane.xlu0 %2082
        %2084 = vmax.xlane.f32.xlu0 %v2054
        %v2085 = vpop.xlane.xlu0 %2084
        %2086 = vmax.xlane.f32.xlu0 %v2055
        %v2087 = vpop.xlane.xlu0 %2086
        %v2088 = vsub.f32 %v2040, %v2057
        %v2089 = vsub.f32 %v2041, %v2059
        %v2090 = vsub.f32 %v2042, %v2061
        %v2091 = vsub.f32 %v2043, %v2063
        %v2092 = vsub.f32 %v2044, %v2065
        %v2093 = vsub.f32 %v2045, %v2067
        %v2094 = vsub.f32 %v2046, %v2069
        %v2095 = vsub.f32 %v2047, %v2071
        %v2096 = vsub.f32 %v2048, %v2073
        %v2097 = vsub.f32 %v2049, %v2075
        %v2098 = vsub.f32 %v2050, %v2077
        %v2099 = vsub.f32 %v2051, %v2079
        %v2100 = vsub.f32 %v2052, %v2081
        %v2101 = vsub.f32 %v2053, %v2083
        %v2102 = vsub.f32 %v2054, %v2085
        %v2103 = vsub.f32 %v2055, %v2087
        %v2104 = vmul.f32 %v2088, 1.442695
        %v2105 = vpow.pop %v2104
        %v2106 = vmul.f32 %v2089, 1.442695
        %v2107 = vpow.pop %v2106
        %v2108 = vmul.f32 %v2090, 1.442695
        %v2109 = vpow.pop %v2108
        %v2110 = vmul.f32 %v2091, 1.442695
        %v2111 = vpow.pop %v2110
        %v2112 = vmul.f32 %v2092, 1.442695
        %v2113 = vpow.pop %v2112
        %v2114 = vmul.f32 %v2093, 1.442695
        %v2115 = vpow.pop %v2114
        %v2116 = vmul.f32 %v2094, 1.442695
        %v2117 = vpow.pop %v2116
        %v2118 = vmul.f32 %v2095, 1.442695
        %v2119 = vpow.pop %v2118
        %v2120 = vmul.f32 %v2096, 1.442695
        %v2121 = vpow.pop %v2120
        %v2122 = vmul.f32 %v2097, 1.442695
        %v2123 = vpow.pop %v2122
        %v2124 = vmul.f32 %v2098, 1.442695
        %v2125 = vpow.pop %v2124
        %v2126 = vmul.f32 %v2099, 1.442695
        %v2127 = vpow.pop %v2126
        %v2128 = vmul.f32 %v2100, 1.442695
        %v2129 = vpow.pop %v2128
        %v2130 = vmul.f32 %v2101, 1.442695
        %v2131 = vpow.pop %v2130
        %v2132 = vmul.f32 %v2102, 1.442695
        %v2133 = vpow.pop %v2132
        %v2134 = vmul.f32 %v2103, 1.442695
        %v2135 = vpow.pop %v2134
        %2136 = vadd.xlane.f32.xlu0 %v2105
        %v2137 = vpop.xlane.xlu0 %2136
        %2138 = vadd.xlane.f32.xlu0 %v2107
        %v2139 = vpop.xlane.xlu0 %2138
        %2140 = vadd.xlane.f32.xlu0 %v2109
        %v2141 = vpop.xlane.xlu0 %2140
        %2142 = vadd.xlane.f32.xlu0 %v2111
        %v2143 = vpop.xlane.xlu0 %2142
        %2144 = vadd.xlane.f32.xlu0 %v2113
        %v2145 = vpop.xlane.xlu0 %2144
        %2146 = vadd.xlane.f32.xlu0 %v2115
        %v2147 = vpop.xlane.xlu0 %2146
        %2148 = vadd.xlane.f32.xlu0 %v2117
        %v2149 = vpop.xlane.xlu0 %2148
        %2150 = vadd.xlane.f32.xlu0 %v2119
        %v2151 = vpop.xlane.xlu0 %2150
        %2152 = vadd.xlane.f32.xlu0 %v2121
        %v2153 = vpop.xlane.xlu0 %2152
        %2154 = vadd.xlane.f32.xlu0 %v2123
        %v2155 = vpop.xlane.xlu0 %2154
        %2156 = vadd.xlane.f32.xlu0 %v2125
        %v2157 = vpop.xlane.xlu0 %2156
        %2158 = vadd.xlane.f32.xlu0 %v2127
        %v2159 = vpop.xlane.xlu0 %2158
        %2160 = vadd.xlane.f32.xlu0 %v2129
        %v2161 = vpop.xlane.xlu0 %2160
        %2162 = vadd.xlane.f32.xlu0 %v2131
        %v2163 = vpop.xlane.xlu0 %2162
        %2164 = vadd.xlane.f32.xlu0 %v2133
        %v2165 = vpop.xlane.xlu0 %2164
        %2166 = vadd.xlane.f32.xlu0 %v2135
        %v2167 = vpop.xlane.xlu0 %2166
        %v2168 = vpack.c.bf16 %v2107, %v2105
        %v2169 = vpack.c.bf16 %v2111, %v2109
        %v2170 = vpack.c.bf16 %v2115, %v2113
        %v2171 = vpack.c.bf16 %v2119, %v2117
        %v2172 = vpack.c.bf16 %v2123, %v2121
        %v2173 = vpack.c.bf16 %v2127, %v2125
        %v2174 = vpack.c.bf16 %v2131, %v2129
        %v2175 = vpack.c.bf16 %v2135, %v2133
        %2176 = vrot.lane.b32.xlu0 %v579, 64
        %v2177 = vpop.permute.xlu0 %2176
        %2178 = vrot.lane.b32.xlu0 %v580, 64
        %v2179 = vpop.permute.xlu0 %2178
        %2180 = vrot.lane.b32.xlu0 %v581, 64
        %v2181 = vpop.permute.xlu0 %2180
        %2182 = vrot.lane.b32.xlu0 %v582, 64
        %v2183 = vpop.permute.xlu0 %2182
        %2184 = vrot.lane.b32.xlu0 %v583, 64
        %v2185 = vpop.permute.xlu0 %2184
        %2186 = vrot.lane.b32.xlu0 %v584, 64
        %v2187 = vpop.permute.xlu0 %2186
        %2188 = vrot.lane.b32.xlu0 %v585, 64
        %v2189 = vpop.permute.xlu0 %2188
        %2190 = vrot.lane.b32.xlu0 %v586, 64
        %v2191 = vpop.permute.xlu0 %2190
        %2200 = vmatprep.subr.bf16.mxu0 0
        %2201 = vmatpush1.bf16.msra.mxu0 %v2177
        %2202 = vmatprep.subr.bf16.mxu0 0
        %2203 = vmatpush1.bf16.msra.mxu0 %v2179
        %2204 = vmatprep.subr.bf16.mxu0 0
        %2205 = vmatpush1.bf16.msra.mxu0 %v2181
        %2206 = vmatprep.subr.bf16.mxu0 0
        %2207 = vmatpush1.bf16.msra.mxu0 %v2183
        %2208 = vmatprep.subr.bf16.mxu0 0
        %2209 = vmatpush1.bf16.msra.mxu0 %v2185
        %2210 = vmatprep.subr.bf16.mxu0 0
        %2211 = vmatpush1.bf16.msra.mxu0 %v2187
        %2212 = vmatprep.subr.bf16.mxu0 0
        %2213 = vmatpush1.bf16.msra.mxu0 %v2189
        %2214 = vmatprep.subr.bf16.mxu0 0
        %2215 = vmatpush1.bf16.msra.mxu0 %v2191
        %2216 = vmatprep.subr.bf16.mxu0 0
        %2217 = vmatpush1.bf16.msra.mxu0 0
        %2218 = vmatprep.subr.bf16.mxu0 0
        %2219 = vmatpush1.bf16.msra.mxu0 0
        %2220 = vmatprep.subr.bf16.mxu0 0
        %2221 = vmatpush1.bf16.msra.mxu0 0
        %2222 = vmatprep.subr.bf16.mxu0 0
        %2223 = vmatpush1.bf16.msra.mxu0 0
        %2224 = vmatprep.subr.bf16.mxu0 0
        %2225 = vmatpush1.bf16.msra.mxu0 0
        %2226 = vmatprep.subr.bf16.mxu0 0
        %2227 = vmatpush1.bf16.msra.mxu0 0
        %2228 = vmatprep.subr.bf16.mxu0 0
        %2229 = vmatpush1.bf16.msra.mxu0 0
        %2230 = vmatprep.subr.bf16.mxu0 0
        %2231 = vmatpush1.bf16.msra.mxu0 0
        %2232 = vmatprep.mubr.bf16.mxu0 0
        %2233 = vmatmul.mubr.bf16.gmra.mrb[0].mxu0 %v2168
        %v2234 = vpop.f32.mrb[0].mxu0
        %v2235 = vadd.f32 0.0, %v2234
        %v2236 = vpop.f32.mrb[0].mxu0
        %v2237 = vpop.f32.mrb[0].mxu0
        %v2238 = vadd.f32 0.0, %v2237
        %v2239 = vpop.f32.mrb[0].mxu0
        %2240 = vmatprep.mubr.bf16.mxu0 0
        %2241 = vmatmul.mubr.bf16.gmra.mrb[0].mxu0 %v2169
        %v2242 = vpop.f32.mrb[0].mxu0
        %v2243 = vadd.f32 0.0, %v2242
        %v2244 = vpop.f32.mrb[0].mxu0
        %v2245 = vpop.f32.mrb[0].mxu0
        %v2246 = vadd.f32 0.0, %v2245
        %v2247 = vpop.f32.mrb[0].mxu0
        %2248 = vmatprep.mubr.bf16.mxu0 0
        %2249 = vmatmul.mubr.bf16.gmra.mrb[0].mxu0 %v2170
        %v2250 = vpop.f32.mrb[0].mxu0
        %v2251 = vadd.f32 0.0, %v2250
        %v2252 = vpop.f32.mrb[0].mxu0
        %v2253 = vpop.f32.mrb[0].mxu0
        %v2254 = vadd.f32 0.0, %v2253
        %v2255 = vpop.f32.mrb[0].mxu0
        %2256 = vmatprep.mubr.bf16.mxu0 0
        %2257 = vmatmul.mubr.bf16.gmra.mrb[0].mxu0 %v2171
        %v2258 = vpop.f32.mrb[0].mxu0
        %v2259 = vadd.f32 0.0, %v2258
        %v2260 = vpop.f32.mrb[0].mxu0
        %v2261 = vpop.f32.mrb[0].mxu0
        %v2262 = vadd.f32 0.0, %v2261
        %v2263 = vpop.f32.mrb[0].mxu0
        %2264 = vmatprep.mubr.bf16.mxu0 0
        %2265 = vmatmul.mubr.bf16.gmra.mrb[0].mxu0 %v2172
        %v2266 = vpop.f32.mrb[0].mxu0
        %v2267 = vadd.f32 0.0, %v2266
        %v2268 = vpop.f32.mrb[0].mxu0
        %v2269 = vpop.f32.mrb[0].mxu0
        %v2270 = vadd.f32 0.0, %v2269
        %v2271 = vpop.f32.mrb[0].mxu0
        %2272 = vmatprep.mubr.bf16.mxu0 0
        %2273 = vmatmul.mubr.bf16.gmra.mrb[0].mxu0 %v2173
        %v2274 = vpop.f32.mrb[0].mxu0
        %v2275 = vadd.f32 0.0, %v2274
        %v2276 = vpop.f32.mrb[0].mxu0
        %v2277 = vpop.f32.mrb[0].mxu0
        %v2278 = vadd.f32 0.0, %v2277
        %v2279 = vpop.f32.mrb[0].mxu0
        %2280 = vmatprep.mubr.bf16.mxu0 0
        %2281 = vmatmul.mubr.bf16.gmra.mrb[0].mxu0 %v2174
        %v2282 = vpop.f32.mrb[0].mxu0
        %v2283 = vadd.f32 0.0, %v2282
        %v2284 = vpop.f32.mrb[0].mxu0
        %v2285 = vpop.f32.mrb[0].mxu0
        %v2286 = vadd.f32 0.0, %v2285
        %v2287 = vpop.f32.mrb[0].mxu0
        %2288 = vmatprep.mubr.bf16.mxu0 0
        %2289 = vmatmul.mubr.bf16.gmra.mrb[0].mxu0 %v2175
        %v2290 = vpop.f32.mrb[0].mxu0
        %v2291 = vadd.f32 0.0, %v2290
        %v2292 = vpop.f32.mrb[0].mxu0
        %v2293 = vpop.f32.mrb[0].mxu0
        %v2294 = vadd.f32 0.0, %v2293
        %v2295 = vpop.f32.mrb[0].mxu0
        %2296 = vdwg.mxu0
        %v2297 = vrcp.pop %v2137
        %v2298 = vrcp.pop %v2139
        %v2299 = vrcp.pop %v2141
        %v2300 = vrcp.pop %v2143
        %v2301 = vrcp.pop %v2145
        %v2302 = vrcp.pop %v2147
        %v2303 = vrcp.pop %v2149
        %v2304 = vrcp.pop %v2151
        %v2305 = vrcp.pop %v2153
        %v2306 = vrcp.pop %v2155
        %v2307 = vrcp.pop %v2157
        %v2308 = vrcp.pop %v2159
        %v2309 = vrcp.pop %v2161
        %v2310 = vrcp.pop %v2163
        %v2311 = vrcp.pop %v2165
        %v2312 = vrcp.pop %v2167
        %v2313 = vmul.f32 %v2235, %v2297
        %v2314 = vmul.f32 %v2238, %v2298
        %v2315 = vmul.f32 %v2243, %v2299
        %v2316 = vmul.f32 %v2246, %v2300
        %v2317 = vmul.f32 %v2251, %v2301
        %v2318 = vmul.f32 %v2254, %v2302
        %v2319 = vmul.f32 %v2259, %v2303
        %v2320 = vmul.f32 %v2262, %v2304
        %v2321 = vmul.f32 %v2267, %v2305
        %v2322 = vmul.f32 %v2270, %v2306
        %v2323 = vmul.f32 %v2275, %v2307
        %v2324 = vmul.f32 %v2278, %v2308
        %v2325 = vmul.f32 %v2283, %v2309
        %v2326 = vmul.f32 %v2286, %v2310
        %v2327 = vmul.f32 %v2291, %v2311
        %v2328 = vmul.f32 %v2294, %v2312
        %vm2329 = vcmp.gt.f32.partialorder %v2313, 0.0
        %vm2330 = vcmp.gt.f32.partialorder %v2314, 0.0
        %vm2331 = vcmp.gt.f32.partialorder %v2315, 0.0
        %vm2332 = vcmp.gt.f32.partialorder %v2316, 0.0
        %vm2333 = vcmp.gt.f32.partialorder %v2317, 0.0
        %vm2334 = vcmp.gt.f32.partialorder %v2318, 0.0
        %vm2335 = vcmp.gt.f32.partialorder %v2319, 0.0
        %vm2336 = vcmp.gt.f32.partialorder %v2320, 0.0
        %vm2337 = vcmp.gt.f32.partialorder %v2321, 0.0
        %vm2338 = vcmp.gt.f32.partialorder %v2322, 0.0
        %vm2339 = vcmp.gt.f32.partialorder %v2323, 0.0
        %vm2340 = vcmp.gt.f32.partialorder %v2324, 0.0
        %vm2341 = vcmp.gt.f32.partialorder %v2325, 0.0
        %vm2342 = vcmp.gt.f32.partialorder %v2326, 0.0
        %vm2343 = vcmp.gt.f32.partialorder %v2327, 0.0
        %vm2344 = vcmp.gt.f32.partialorder %v2328, 0.0
        %v2345 = vmin.f32 %v2313, 0.0
        %v2346 = vmin.f32 %v2314, 0.0
        %v2347 = vmin.f32 %v2315, 0.0
        %v2348 = vmin.f32 %v2316, 0.0
        %v2349 = vmin.f32 %v2317, 0.0
        %v2350 = vmin.f32 %v2318, 0.0
        %v2351 = vmin.f32 %v2319, 0.0
        %v2352 = vmin.f32 %v2320, 0.0
        %v2353 = vmin.f32 %v2321, 0.0
        %v2354 = vmin.f32 %v2322, 0.0
        %v2355 = vmin.f32 %v2323, 0.0
        %v2356 = vmin.f32 %v2324, 0.0
        %v2357 = vmin.f32 %v2325, 0.0
        %v2358 = vmin.f32 %v2326, 0.0
        %v2359 = vmin.f32 %v2327, 0.0
        %v2360 = vmin.f32 %v2328, 0.0
        %v2361 = vmul.f32 %v2345, 1.442695
        %v2362 = vpow.pop %v2361
        %v2363 = vmul.f32 %v2346, 1.442695
        %v2364 = vpow.pop %v2363
        %v2365 = vmul.f32 %v2347, 1.442695
        %v2366 = vpow.pop %v2365
        %v2367 = vmul.f32 %v2348, 1.442695
        %v2368 = vpow.pop %v2367
        %v2369 = vmul.f32 %v2349, 1.442695
        %v2370 = vpow.pop %v2369
        %v2371 = vmul.f32 %v2350, 1.442695
        %v2372 = vpow.pop %v2371
        %v2373 = vmul.f32 %v2351, 1.442695
        %v2374 = vpow.pop %v2373
        %v2375 = vmul.f32 %v2352, 1.442695
        %v2376 = vpow.pop %v2375
        %v2377 = vmul.f32 %v2353, 1.442695
        %v2378 = vpow.pop %v2377
        %v2379 = vmul.f32 %v2354, 1.442695
        %v2380 = vpow.pop %v2379
        %v2381 = vmul.f32 %v2355, 1.442695
        %v2382 = vpow.pop %v2381
        %v2383 = vmul.f32 %v2356, 1.442695
        %v2384 = vpow.pop %v2383
        %v2385 = vmul.f32 %v2357, 1.442695
        %v2386 = vpow.pop %v2385
        %v2387 = vmul.f32 %v2358, 1.442695
        %v2388 = vpow.pop %v2387
        %v2389 = vmul.f32 %v2359, 1.442695
        %v2390 = vpow.pop %v2389
        %v2391 = vmul.f32 %v2360, 1.442695
        %v2392 = vpow.pop %v2391
        %v2393 = vsub.f32 %v2362, 1.0
        %v2394 = vsub.f32 %v2364, 1.0
        %v2395 = vsub.f32 %v2366, 1.0
        %v2396 = vsub.f32 %v2368, 1.0
        %v2397 = vsub.f32 %v2370, 1.0
        %v2398 = vsub.f32 %v2372, 1.0
        %v2399 = vsub.f32 %v2374, 1.0
        %v2400 = vsub.f32 %v2376, 1.0
        %v2401 = vsub.f32 %v2378, 1.0
        %v2402 = vsub.f32 %v2380, 1.0
        %v2403 = vsub.f32 %v2382, 1.0
        %v2404 = vsub.f32 %v2384, 1.0
        %v2405 = vsub.f32 %v2386, 1.0
        %v2406 = vsub.f32 %v2388, 1.0
        %v2407 = vsub.f32 %v2390, 1.0
        %v2408 = vsub.f32 %v2392, 1.0
        %v2409 = vsel %vm2329, %v2313, %v2393
        %v2410 = vsel %vm2330, %v2314, %v2394
        %v2411 = vsel %vm2331, %v2315, %v2395
        %v2412 = vsel %vm2332, %v2316, %v2396
        %v2413 = vsel %vm2333, %v2317, %v2397
        %v2414 = vsel %vm2334, %v2318, %v2398
        %v2415 = vsel %vm2335, %v2319, %v2399
        %v2416 = vsel %vm2336, %v2320, %v2400
        %v2417 = vsel %vm2337, %v2321, %v2401
        %v2418 = vsel %vm2338, %v2322, %v2402
        %v2419 = vsel %vm2339, %v2323, %v2403
        %v2420 = vsel %vm2340, %v2324, %v2404
        %v2421 = vsel %vm2341, %v2325, %v2405
        %v2422 = vsel %vm2342, %v2326, %v2406
        %v2423 = vsel %vm2343, %v2327, %v2407
        %v2424 = vsel %vm2344, %v2328, %v2408
        %v2425 = vld [vmem:[#allocation4] sm:$0x1]
        %v2426 = vsel %vm1315, %v2409, 0.0
        %v2427 = vsel %vm1315, %v2410, 0.0
        %v2428 = vadd.f32 %v2426, %v2427
        %v2429 = vsel %vm1315, %v2411, 0.0
        %v2430 = vadd.f32 %v2428, %v2429
        %v2431 = vsel %vm1315, %v2412, 0.0
        %v2432 = vadd.f32 %v2430, %v2431
        %v2433 = vsel %vm1315, %v2413, 0.0
        %v2434 = vadd.f32 %v2432, %v2433
        %v2435 = vsel %vm1315, %v2414, 0.0
        %v2436 = vadd.f32 %v2434, %v2435
        %v2437 = vsel %vm1315, %v2415, 0.0
        %v2438 = vadd.f32 %v2436, %v2437
        %v2439 = vsel %vm1315, %v2416, 0.0
        %v2440 = vadd.f32 %v2438, %v2439
        %v2441 = vsel %vm1315, %v2417, 0.0
        %v2442 = vadd.f32 %v2440, %v2441
        %v2443 = vsel %vm1315, %v2418, 0.0
        %v2444 = vadd.f32 %v2442, %v2443
        %v2445 = vsel %vm1315, %v2419, 0.0
        %v2446 = vadd.f32 %v2444, %v2445
        %v2447 = vsel %vm1315, %v2420, 0.0
        %v2448 = vadd.f32 %v2446, %v2447
        %v2449 = vsel %vm1315, %v2421, 0.0
        %v2450 = vadd.f32 %v2448, %v2449
        %v2451 = vsel %vm1315, %v2422, 0.0
        %v2452 = vadd.f32 %v2450, %v2451
        %v2453 = vsel %vm1315, %v2423, 0.0
        %v2454 = vadd.f32 %v2452, %v2453
        %v2455 = vsel %vm1315, %v2424, 0.0
        %v2456 = vadd.f32 %v2454, %v2455
        %v2457 = vrot.slane %v2456, 4
        %v2458 = vadd.f32 %v2456, %v2457
        %v2459 = vrot.slane %v2458, 2
        %v2460 = vadd.f32 %v2458, %v2459
        %v2461 = vrot.slane %v2460, 1
        %v2462 = vadd.f32 %v2460, %v2461
        %v2465 = vunpack.c.l.s4 1966171168
        %v2466 = vunpack.c.0.s8 %v2465
        %v2467 = vlaneseq
        %v2468 = vshrl.u32 %v2467, 7
        %v2469 = vsub.s32 %v2466, %v2468
        %v2470 = vrot.slane %v2462, %v2469
        %v2472 = vunpack.c.l.s4 1966171168
        %v2473 = vunpack.c.0.s8 %v2472
        %v2474 = vlaneseq
        %v2475 = vshrl.u32 %v2474, 7
        %v2476 = vsub.s32 %v2473, %v2475
        %v2477 = vrot.slane %v2470, %v2476
        %2478 = vrot.lane.b32.xlu0 %v2477, 64
        %v2479 = vpop.permute.xlu0 %2478
        %v2481 = vadd.f32 %v2425, %v2479
        %vm2482 = vcmask 778752
        %2483 = vst.msk [vmem:[#allocation4] sm:$0x1] %vm2482, %v2481
        %2484 = vset.pattern.permute.xlu0 3
        %2485 = vperm.xlu0 %2484, %v634
        %v2486 = vpop.permute.xlu0 %2485
        %2488 = vset.pattern.permute.xlu0 3
        %2489 = vperm.xlu0 %2488, %v637
        %v2490 = vpop.permute.xlu0 %2489
        %2492 = vset.pattern.permute.xlu0 3
        %2493 = vperm.xlu0 %2492, %v642
        %v2494 = vpop.permute.xlu0 %2493
        %2496 = vset.pattern.permute.xlu0 3
        %2497 = vperm.xlu0 %2496, %v645
        %v2498 = vpop.permute.xlu0 %2497
        %2500 = vset.pattern.permute.xlu0 3
        %2501 = vperm.xlu0 %2500, %v650
        %v2502 = vpop.permute.xlu0 %2501
        %2504 = vset.pattern.permute.xlu0 3
        %2505 = vperm.xlu0 %2504, %v653
        %v2506 = vpop.permute.xlu0 %2505
        %2508 = vset.pattern.permute.xlu0 3
        %2509 = vperm.xlu0 %2508, %v658
        %v2510 = vpop.permute.xlu0 %2509
        %2512 = vset.pattern.permute.xlu0 3
        %2513 = vperm.xlu0 %2512, %v661
        %v2514 = vpop.permute.xlu0 %2513
        %2516 = vset.pattern.permute.xlu0 3
        %2517 = vperm.xlu0 %2516, %v666
        %v2518 = vpop.permute.xlu0 %2517
        %2520 = vset.pattern.permute.xlu0 3
        %2521 = vperm.xlu0 %2520, %v669
        %v2522 = vpop.permute.xlu0 %2521
        %2524 = vset.pattern.permute.xlu0 3
        %2525 = vperm.xlu0 %2524, %v674
        %v2526 = vpop.permute.xlu0 %2525
        %2528 = vset.pattern.permute.xlu0 3
        %2529 = vperm.xlu0 %2528, %v677
        %v2530 = vpop.permute.xlu0 %2529
        %2532 = vset.pattern.permute.xlu0 3
        %2533 = vperm.xlu0 %2532, %v682
        %v2534 = vpop.permute.xlu0 %2533
        %2536 = vset.pattern.permute.xlu0 3
        %2537 = vperm.xlu0 %2536, %v685
        %v2538 = vpop.permute.xlu0 %2537
        %2540 = vset.pattern.permute.xlu0 3
        %2541 = vperm.xlu0 %2540, %v690
        %v2542 = vpop.permute.xlu0 %2541
        %2544 = vset.pattern.permute.xlu0 3
        %2545 = vperm.xlu0 %2544, %v693
        %v2546 = vpop.permute.xlu0 %2545
        %v2548 = vlaneseq
        %v2549 = vshrl.u32 %v2548, 7
        %v2550 = vsub.s32 3, %v2549
        %v2551 = vrot.slane %v704, %v2550
        %v2552 = vadd.f32 %v2486, %v2551
        %v2553 = vadd.f32 %v2490, %v2551
        %v2554 = vadd.f32 %v2494, %v2551
        %v2555 = vadd.f32 %v2498, %v2551
        %v2556 = vadd.f32 %v2502, %v2551
        %v2557 = vadd.f32 %v2506, %v2551
        %v2558 = vadd.f32 %v2510, %v2551
        %v2559 = vadd.f32 %v2514, %v2551
        %v2560 = vadd.f32 %v2518, %v2551
        %v2561 = vadd.f32 %v2522, %v2551
        %v2562 = vadd.f32 %v2526, %v2551
        %v2563 = vadd.f32 %v2530, %v2551
        %v2564 = vadd.f32 %v2534, %v2551
        %v2565 = vadd.f32 %v2538, %v2551
        %v2566 = vadd.f32 %v2542, %v2551
        %v2567 = vadd.f32 %v2546, %v2551
        %v2568 = vmul.f32 %v2552, 0.2
        %v2569 = vmul.f32 %v2553, 0.2
        %v2570 = vmul.f32 %v2554, 0.2
        %v2571 = vmul.f32 %v2555, 0.2
        %v2572 = vmul.f32 %v2556, 0.2
        %v2573 = vmul.f32 %v2557, 0.2
        %v2574 = vmul.f32 %v2558, 0.2
        %v2575 = vmul.f32 %v2559, 0.2
        %v2576 = vmul.f32 %v2560, 0.2
        %v2577 = vmul.f32 %v2561, 0.2
        %v2578 = vmul.f32 %v2562, 0.2
        %v2579 = vmul.f32 %v2563, 0.2
        %v2580 = vmul.f32 %v2564, 0.2
        %v2581 = vmul.f32 %v2565, 0.2
        %v2582 = vmul.f32 %v2566, 0.2
        %v2583 = vmul.f32 %v2567, 0.2
        %v2584 = vmax.f32 %v2552, %v2568
        %v2585 = vmax.f32 %v2553, %v2569
        %v2586 = vmax.f32 %v2554, %v2570
        %v2587 = vmax.f32 %v2555, %v2571
        %v2588 = vmax.f32 %v2556, %v2572
        %v2589 = vmax.f32 %v2557, %v2573
        %v2590 = vmax.f32 %v2558, %v2574
        %v2591 = vmax.f32 %v2559, %v2575
        %v2592 = vmax.f32 %v2560, %v2576
        %v2593 = vmax.f32 %v2561, %v2577
        %v2594 = vmax.f32 %v2562, %v2578
        %v2595 = vmax.f32 %v2563, %v2579
        %v2596 = vmax.f32 %v2564, %v2580
        %v2597 = vmax.f32 %v2565, %v2581
        %v2598 = vmax.f32 %v2566, %v2582
        %v2599 = vmax.f32 %v2567, %v2583
        %v2600 = vsel %vm937, %v2584, -9e+15
        %v2601 = vsel %vm938, %v2585, -9e+15
        %v2602 = vsel %vm939, %v2586, -9e+15
        %v2603 = vsel %vm940, %v2587, -9e+15
        %v2604 = vsel %vm941, %v2588, -9e+15
        %v2605 = vsel %vm942, %v2589, -9e+15
        %v2606 = vsel %vm943, %v2590, -9e+15
        %v2607 = vsel %vm944, %v2591, -9e+15
        %v2608 = vsel %vm945, %v2592, -9e+15
        %v2609 = vsel %vm946, %v2593, -9e+15
        %v2610 = vsel %vm947, %v2594, -9e+15
        %v2611 = vsel %vm948, %v2595, -9e+15
        %v2612 = vsel %vm949, %v2596, -9e+15
        %v2613 = vsel %vm950, %v2597, -9e+15
        %v2614 = vsel %vm951, %v2598, -9e+15
        %v2615 = vsel %vm952, %v2599, -9e+15
        %2616 = vmax.xlane.f32.xlu0 %v2600
        %v2617 = vpop.xlane.xlu0 %2616
        %2618 = vmax.xlane.f32.xlu0 %v2601
        %v2619 = vpop.xlane.xlu0 %2618
        %2620 = vmax.xlane.f32.xlu0 %v2602
        %v2621 = vpop.xlane.xlu0 %2620
        %2622 = vmax.xlane.f32.xlu0 %v2603
        %v2623 = vpop.xlane.xlu0 %2622
        %2624 = vmax.xlane.f32.xlu0 %v2604
        %v2625 = vpop.xlane.xlu0 %2624
        %2626 = vmax.xlane.f32.xlu0 %v2605
        %v2627 = vpop.xlane.xlu0 %2626
        %2628 = vmax.xlane.f32.xlu0 %v2606
        %v2629 = vpop.xlane.xlu0 %2628
        %2630 = vmax.xlane.f32.xlu0 %v2607
        %v2631 = vpop.xlane.xlu0 %2630
        %2632 = vmax.xlane.f32.xlu0 %v2608
        %v2633 = vpop.xlane.xlu0 %2632
        %2634 = vmax.xlane.f32.xlu0 %v2609
        %v2635 = vpop.xlane.xlu0 %2634
        %2636 = vmax.xlane.f32.xlu0 %v2610
        %v2637 = vpop.xlane.xlu0 %2636
        %2638 = vmax.xlane.f32.xlu0 %v2611
        %v2639 = vpop.xlane.xlu0 %2638
        %2640 = vmax.xlane.f32.xlu0 %v2612
        %v2641 = vpop.xlane.xlu0 %2640
        %2642 = vmax.xlane.f32.xlu0 %v2613
        %v2643 = vpop.xlane.xlu0 %2642
        %2644 = vmax.xlane.f32.xlu0 %v2614
        %v2645 = vpop.xlane.xlu0 %2644
        %2646 = vmax.xlane.f32.xlu0 %v2615
        %v2647 = vpop.xlane.xlu0 %2646
        %v2648 = vsub.f32 %v2600, %v2617
        %v2649 = vsub.f32 %v2601, %v2619
        %v2650 = vsub.f32 %v2602, %v2621
        %v2651 = vsub.f32 %v2603, %v2623
        %v2652 = vsub.f32 %v2604, %v2625
        %v2653 = vsub.f32 %v2605, %v2627
        %v2654 = vsub.f32 %v2606, %v2629
        %v2655 = vsub.f32 %v2607, %v2631
        %v2656 = vsub.f32 %v2608, %v2633
        %v2657 = vsub.f32 %v2609, %v2635
        %v2658 = vsub.f32 %v2610, %v2637
        %v2659 = vsub.f32 %v2611, %v2639
        %v2660 = vsub.f32 %v2612, %v2641
        %v2661 = vsub.f32 %v2613, %v2643
        %v2662 = vsub.f32 %v2614, %v2645
        %v2663 = vsub.f32 %v2615, %v2647
        %v2664 = vmul.f32 %v2648, 1.442695
        %v2665 = vpow.pop %v2664
        %v2666 = vmul.f32 %v2649, 1.442695
        %v2667 = vpow.pop %v2666
        %v2668 = vmul.f32 %v2650, 1.442695
        %v2669 = vpow.pop %v2668
        %v2670 = vmul.f32 %v2651, 1.442695
        %v2671 = vpow.pop %v2670
        %v2672 = vmul.f32 %v2652, 1.442695
        %v2673 = vpow.pop %v2672
        %v2674 = vmul.f32 %v2653, 1.442695
        %v2675 = vpow.pop %v2674
        %v2676 = vmul.f32 %v2654, 1.442695
        %v2677 = vpow.pop %v2676
        %v2678 = vmul.f32 %v2655, 1.442695
        %v2679 = vpow.pop %v2678
        %v2680 = vmul.f32 %v2656, 1.442695
        %v2681 = vpow.pop %v2680
        %v2682 = vmul.f32 %v2657, 1.442695
        %v2683 = vpow.pop %v2682
        %v2684 = vmul.f32 %v2658, 1.442695
        %v2685 = vpow.pop %v2684
        %v2686 = vmul.f32 %v2659, 1.442695
        %v2687 = vpow.pop %v2686
        %v2688 = vmul.f32 %v2660, 1.442695
        %v2689 = vpow.pop %v2688
        %v2690 = vmul.f32 %v2661, 1.442695
        %v2691 = vpow.pop %v2690
        %v2692 = vmul.f32 %v2662, 1.442695
        %v2693 = vpow.pop %v2692
        %v2694 = vmul.f32 %v2663, 1.442695
        %v2695 = vpow.pop %v2694
        %2696 = vadd.xlane.f32.xlu0 %v2665
        %v2697 = vpop.xlane.xlu0 %2696
        %2698 = vadd.xlane.f32.xlu0 %v2667
        %v2699 = vpop.xlane.xlu0 %2698
        %2700 = vadd.xlane.f32.xlu0 %v2669
        %v2701 = vpop.xlane.xlu0 %2700
        %2702 = vadd.xlane.f32.xlu0 %v2671
        %v2703 = vpop.xlane.xlu0 %2702
        %2704 = vadd.xlane.f32.xlu0 %v2673
        %v2705 = vpop.xlane.xlu0 %2704
        %2706 = vadd.xlane.f32.xlu0 %v2675
        %v2707 = vpop.xlane.xlu0 %2706
        %2708 = vadd.xlane.f32.xlu0 %v2677
        %v2709 = vpop.xlane.xlu0 %2708
        %2710 = vadd.xlane.f32.xlu0 %v2679
        %v2711 = vpop.xlane.xlu0 %2710
        %2712 = vadd.xlane.f32.xlu0 %v2681
        %v2713 = vpop.xlane.xlu0 %2712
        %2714 = vadd.xlane.f32.xlu0 %v2683
        %v2715 = vpop.xlane.xlu0 %2714
        %2716 = vadd.xlane.f32.xlu0 %v2685
        %v2717 = vpop.xlane.xlu0 %2716
        %2718 = vadd.xlane.f32.xlu0 %v2687
        %v2719 = vpop.xlane.xlu0 %2718
        %2720 = vadd.xlane.f32.xlu0 %v2689
        %v2721 = vpop.xlane.xlu0 %2720
        %2722 = vadd.xlane.f32.xlu0 %v2691
        %v2723 = vpop.xlane.xlu0 %2722
        %2724 = vadd.xlane.f32.xlu0 %v2693
        %v2725 = vpop.xlane.xlu0 %2724
        %2726 = vadd.xlane.f32.xlu0 %v2695
        %v2727 = vpop.xlane.xlu0 %2726
        %v2728 = vpack.c.bf16 %v2667, %v2665
        %v2729 = vpack.c.bf16 %v2671, %v2669
        %v2730 = vpack.c.bf16 %v2675, %v2673
        %v2731 = vpack.c.bf16 %v2679, %v2677
        %v2732 = vpack.c.bf16 %v2683, %v2681
        %v2733 = vpack.c.bf16 %v2687, %v2685
        %v2734 = vpack.c.bf16 %v2691, %v2689
        %v2735 = vpack.c.bf16 %v2695, %v2693
        %2736 = vrot.lane.b32.xlu0 %v579, 32
        %v2737 = vpop.permute.xlu0 %2736
        %2738 = vrot.lane.b32.xlu0 %v580, 32
        %v2739 = vpop.permute.xlu0 %2738
        %2740 = vrot.lane.b32.xlu0 %v581, 32
        %v2741 = vpop.permute.xlu0 %2740
        %2742 = vrot.lane.b32.xlu0 %v582, 32
        %v2743 = vpop.permute.xlu0 %2742
        %2744 = vrot.lane.b32.xlu0 %v583, 32
        %v2745 = vpop.permute.xlu0 %2744
        %2746 = vrot.lane.b32.xlu0 %v584, 32
        %v2747 = vpop.permute.xlu0 %2746
        %2748 = vrot.lane.b32.xlu0 %v585, 32
        %v2749 = vpop.permute.xlu0 %2748
        %2750 = vrot.lane.b32.xlu0 %v586, 32
        %v2751 = vpop.permute.xlu0 %2750
        %2760 = vmatprep.subr.bf16.mxu0 0
        %2761 = vmatpush1.bf16.msra.mxu0 %v2737
        %2762 = vmatprep.subr.bf16.mxu0 0
        %2763 = vmatpush1.bf16.msra.mxu0 %v2739
        %2764 = vmatprep.subr.bf16.mxu0 0
        %2765 = vmatpush1.bf16.msra.mxu0 %v2741
        %2766 = vmatprep.subr.bf16.mxu0 0
        %2767 = vmatpush1.bf16.msra.mxu0 %v2743
        %2768 = vmatprep.subr.bf16.mxu0 0
        %2769 = vmatpush1.bf16.msra.mxu0 %v2745
        %2770 = vmatprep.subr.bf16.mxu0 0
        %2771 = vmatpush1.bf16.msra.mxu0 %v2747
        %2772 = vmatprep.subr.bf16.mxu0 0
        %2773 = vmatpush1.bf16.msra.mxu0 %v2749
        %2774 = vmatprep.subr.bf16.mxu0 0
        %2775 = vmatpush1.bf16.msra.mxu0 %v2751
        %2776 = vmatprep.subr.bf16.mxu0 0
        %2777 = vmatpush1.bf16.msra.mxu0 0
        %2778 = vmatprep.subr.bf16.mxu0 0
        %2779 = vmatpush1.bf16.msra.mxu0 0
        %2780 = vmatprep.subr.bf16.mxu0 0
        %2781 = vmatpush1.bf16.msra.mxu0 0
        %2782 = vmatprep.subr.bf16.mxu0 0
        %2783 = vmatpush1.bf16.msra.mxu0 0
        %2784 = vmatprep.subr.bf16.mxu0 0
        %2785 = vmatpush1.bf16.msra.mxu0 0
        %2786 = vmatprep.subr.bf16.mxu0 0
        %2787 = vmatpush1.bf16.msra.mxu0 0
        %2788 = vmatprep.subr.bf16.mxu0 0
        %2789 = vmatpush1.bf16.msra.mxu0 0
        %2790 = vmatprep.subr.bf16.mxu0 0
        %2791 = vmatpush1.bf16.msra.mxu0 0
        %2792 = vmatprep.mubr.bf16.mxu0 0
        %2793 = vmatmul.mubr.bf16.gmra.mrb[0].mxu0 %v2728
        %v2794 = vpop.f32.mrb[0].mxu0
        %v2795 = vadd.f32 0.0, %v2794
        %v2796 = vpop.f32.mrb[0].mxu0
        %v2797 = vpop.f32.mrb[0].mxu0
        %v2798 = vadd.f32 0.0, %v2797
        %v2799 = vpop.f32.mrb[0].mxu0
        %2800 = vmatprep.mubr.bf16.mxu0 0
        %2801 = vmatmul.mubr.bf16.gmra.mrb[0].mxu0 %v2729
        %v2802 = vpop.f32.mrb[0].mxu0
        %v2803 = vadd.f32 0.0, %v2802
        %v2804 = vpop.f32.mrb[0].mxu0
        %v2805 = vpop.f32.mrb[0].mxu0
        %v2806 = vadd.f32 0.0, %v2805
        %v2807 = vpop.f32.mrb[0].mxu0
        %2808 = vmatprep.mubr.bf16.mxu0 0
        %2809 = vmatmul.mubr.bf16.gmra.mrb[0].mxu0 %v2730
        %v2810 = vpop.f32.mrb[0].mxu0
        %v2811 = vadd.f32 0.0, %v2810
        %v2812 = vpop.f32.mrb[0].mxu0
        %v2813 = vpop.f32.mrb[0].mxu0
        %v2814 = vadd.f32 0.0, %v2813
        %v2815 = vpop.f32.mrb[0].mxu0
        %2816 = vmatprep.mubr.bf16.mxu0 0
        %2817 = vmatmul.mubr.bf16.gmra.mrb[0].mxu0 %v2731
        %v2818 = vpop.f32.mrb[0].mxu0
        %v2819 = vadd.f32 0.0, %v2818
        %v2820 = vpop.f32.mrb[0].mxu0
        %v2821 = vpop.f32.mrb[0].mxu0
        %v2822 = vadd.f32 0.0, %v2821
        %v2823 = vpop.f32.mrb[0].mxu0
        %2824 = vmatprep.mubr.bf16.mxu0 0
        %2825 = vmatmul.mubr.bf16.gmra.mrb[0].mxu0 %v2732
        %v2826 = vpop.f32.mrb[0].mxu0
        %v2827 = vadd.f32 0.0, %v2826
        %v2828 = vpop.f32.mrb[0].mxu0
        %v2829 = vpop.f32.mrb[0].mxu0
        %v2830 = vadd.f32 0.0, %v2829
        %v2831 = vpop.f32.mrb[0].mxu0
        %2832 = vmatprep.mubr.bf16.mxu0 0
        %2833 = vmatmul.mubr.bf16.gmra.mrb[0].mxu0 %v2733
        %v2834 = vpop.f32.mrb[0].mxu0
        %v2835 = vadd.f32 0.0, %v2834
        %v2836 = vpop.f32.mrb[0].mxu0
        %v2837 = vpop.f32.mrb[0].mxu0
        %v2838 = vadd.f32 0.0, %v2837
        %v2839 = vpop.f32.mrb[0].mxu0
        %2840 = vmatprep.mubr.bf16.mxu0 0
        %2841 = vmatmul.mubr.bf16.gmra.mrb[0].mxu0 %v2734
        %v2842 = vpop.f32.mrb[0].mxu0
        %v2843 = vadd.f32 0.0, %v2842
        %v2844 = vpop.f32.mrb[0].mxu0
        %v2845 = vpop.f32.mrb[0].mxu0
        %v2846 = vadd.f32 0.0, %v2845
        %v2847 = vpop.f32.mrb[0].mxu0
        %2848 = vmatprep.mubr.bf16.mxu0 0
        %2849 = vmatmul.mubr.bf16.gmra.mrb[0].mxu0 %v2735
        %v2850 = vpop.f32.mrb[0].mxu0
        %v2851 = vadd.f32 0.0, %v2850
        %v2852 = vpop.f32.mrb[0].mxu0
        %v2853 = vpop.f32.mrb[0].mxu0
        %v2854 = vadd.f32 0.0, %v2853
        %v2855 = vpop.f32.mrb[0].mxu0
        %2856 = vdwg.mxu0
        %v2857 = vrcp.pop %v2697
        %v2858 = vrcp.pop %v2699
        %v2859 = vrcp.pop %v2701
        %v2860 = vrcp.pop %v2703
        %v2861 = vrcp.pop %v2705
        %v2862 = vrcp.pop %v2707
        %v2863 = vrcp.pop %v2709
        %v2864 = vrcp.pop %v2711
        %v2865 = vrcp.pop %v2713
        %v2866 = vrcp.pop %v2715
        %v2867 = vrcp.pop %v2717
        %v2868 = vrcp.pop %v2719
        %v2869 = vrcp.pop %v2721
        %v2870 = vrcp.pop %v2723
        %v2871 = vrcp.pop %v2725
        %v2872 = vrcp.pop %v2727
        %v2873 = vmul.f32 %v2795, %v2857
        %v2874 = vmul.f32 %v2798, %v2858
        %v2875 = vmul.f32 %v2803, %v2859
        %v2876 = vmul.f32 %v2806, %v2860
        %v2877 = vmul.f32 %v2811, %v2861
        %v2878 = vmul.f32 %v2814, %v2862
        %v2879 = vmul.f32 %v2819, %v2863
        %v2880 = vmul.f32 %v2822, %v2864
        %v2881 = vmul.f32 %v2827, %v2865
        %v2882 = vmul.f32 %v2830, %v2866
        %v2883 = vmul.f32 %v2835, %v2867
        %v2884 = vmul.f32 %v2838, %v2868
        %v2885 = vmul.f32 %v2843, %v2869
        %v2886 = vmul.f32 %v2846, %v2870
        %v2887 = vmul.f32 %v2851, %v2871
        %v2888 = vmul.f32 %v2854, %v2872
        %vm2889 = vcmp.gt.f32.partialorder %v2873, 0.0
        %vm2890 = vcmp.gt.f32.partialorder %v2874, 0.0
        %vm2891 = vcmp.gt.f32.partialorder %v2875, 0.0
        %vm2892 = vcmp.gt.f32.partialorder %v2876, 0.0
        %vm2893 = vcmp.gt.f32.partialorder %v2877, 0.0
        %vm2894 = vcmp.gt.f32.partialorder %v2878, 0.0
        %vm2895 = vcmp.gt.f32.partialorder %v2879, 0.0
        %vm2896 = vcmp.gt.f32.partialorder %v2880, 0.0
        %vm2897 = vcmp.gt.f32.partialorder %v2881, 0.0
        %vm2898 = vcmp.gt.f32.partialorder %v2882, 0.0
        %vm2899 = vcmp.gt.f32.partialorder %v2883, 0.0
        %vm2900 = vcmp.gt.f32.partialorder %v2884, 0.0
        %vm2901 = vcmp.gt.f32.partialorder %v2885, 0.0
        %vm2902 = vcmp.gt.f32.partialorder %v2886, 0.0
        %vm2903 = vcmp.gt.f32.partialorder %v2887, 0.0
        %vm2904 = vcmp.gt.f32.partialorder %v2888, 0.0
        %v2905 = vmin.f32 %v2873, 0.0
        %v2906 = vmin.f32 %v2874, 0.0
        %v2907 = vmin.f32 %v2875, 0.0
        %v2908 = vmin.f32 %v2876, 0.0
        %v2909 = vmin.f32 %v2877, 0.0
        %v2910 = vmin.f32 %v2878, 0.0
        %v2911 = vmin.f32 %v2879, 0.0
        %v2912 = vmin.f32 %v2880, 0.0
        %v2913 = vmin.f32 %v2881, 0.0
        %v2914 = vmin.f32 %v2882, 0.0
        %v2915 = vmin.f32 %v2883, 0.0
        %v2916 = vmin.f32 %v2884, 0.0
        %v2917 = vmin.f32 %v2885, 0.0
        %v2918 = vmin.f32 %v2886, 0.0
        %v2919 = vmin.f32 %v2887, 0.0
        %v2920 = vmin.f32 %v2888, 0.0
        %v2921 = vmul.f32 %v2905, 1.442695
        %v2922 = vpow.pop %v2921
        %v2923 = vmul.f32 %v2906, 1.442695
        %v2924 = vpow.pop %v2923
        %v2925 = vmul.f32 %v2907, 1.442695
        %v2926 = vpow.pop %v2925
        %v2927 = vmul.f32 %v2908, 1.442695
        %v2928 = vpow.pop %v2927
        %v2929 = vmul.f32 %v2909, 1.442695
        %v2930 = vpow.pop %v2929
        %v2931 = vmul.f32 %v2910, 1.442695
        %v2932 = vpow.pop %v2931
        %v2933 = vmul.f32 %v2911, 1.442695
        %v2934 = vpow.pop %v2933
        %v2935 = vmul.f32 %v2912, 1.442695
        %v2936 = vpow.pop %v2935
        %v2937 = vmul.f32 %v2913, 1.442695
        %v2938 = vpow.pop %v2937
        %v2939 = vmul.f32 %v2914, 1.442695
        %v2940 = vpow.pop %v2939
        %v2941 = vmul.f32 %v2915, 1.442695
        %v2942 = vpow.pop %v2941
        %v2943 = vmul.f32 %v2916, 1.442695
        %v2944 = vpow.pop %v2943
        %v2945 = vmul.f32 %v2917, 1.442695
        %v2946 = vpow.pop %v2945
        %v2947 = vmul.f32 %v2918, 1.442695
        %v2948 = vpow.pop %v2947
        %v2949 = vmul.f32 %v2919, 1.442695
        %v2950 = vpow.pop %v2949
        %v2951 = vmul.f32 %v2920, 1.442695
        %v2952 = vpow.pop %v2951
        %v2953 = vsub.f32 %v2922, 1.0
        %v2954 = vsub.f32 %v2924, 1.0
        %v2955 = vsub.f32 %v2926, 1.0
        %v2956 = vsub.f32 %v2928, 1.0
        %v2957 = vsub.f32 %v2930, 1.0
        %v2958 = vsub.f32 %v2932, 1.0
        %v2959 = vsub.f32 %v2934, 1.0
        %v2960 = vsub.f32 %v2936, 1.0
        %v2961 = vsub.f32 %v2938, 1.0
        %v2962 = vsub.f32 %v2940, 1.0
        %v2963 = vsub.f32 %v2942, 1.0
        %v2964 = vsub.f32 %v2944, 1.0
        %v2965 = vsub.f32 %v2946, 1.0
        %v2966 = vsub.f32 %v2948, 1.0
        %v2967 = vsub.f32 %v2950, 1.0
        %v2968 = vsub.f32 %v2952, 1.0
        %v2969 = vsel %vm2889, %v2873, %v2953
        %v2970 = vsel %vm2890, %v2874, %v2954
        %v2971 = vsel %vm2891, %v2875, %v2955
        %v2972 = vsel %vm2892, %v2876, %v2956
        %v2973 = vsel %vm2893, %v2877, %v2957
        %v2974 = vsel %vm2894, %v2878, %v2958
        %v2975 = vsel %vm2895, %v2879, %v2959
        %v2976 = vsel %vm2896, %v2880, %v2960
        %v2977 = vsel %vm2897, %v2881, %v2961
        %v2978 = vsel %vm2898, %v2882, %v2962
        %v2979 = vsel %vm2899, %v2883, %v2963
        %v2980 = vsel %vm2900, %v2884, %v2964
        %v2981 = vsel %vm2901, %v2885, %v2965
        %v2982 = vsel %vm2902, %v2886, %v2966
        %v2983 = vsel %vm2903, %v2887, %v2967
        %v2984 = vsel %vm2904, %v2888, %v2968
        %v2985 = vld [vmem:[#allocation4] sm:$0x1]
        %v2986 = vsel %vm1315, %v2969, 0.0
        %v2987 = vsel %vm1315, %v2970, 0.0
        %v2988 = vadd.f32 %v2986, %v2987
        %v2989 = vsel %vm1315, %v2971, 0.0
        %v2990 = vadd.f32 %v2988, %v2989
        %v2991 = vsel %vm1315, %v2972, 0.0
        %v2992 = vadd.f32 %v2990, %v2991
        %v2993 = vsel %vm1315, %v2973, 0.0
        %v2994 = vadd.f32 %v2992, %v2993
        %v2995 = vsel %vm1315, %v2974, 0.0
        %v2996 = vadd.f32 %v2994, %v2995
        %v2997 = vsel %vm1315, %v2975, 0.0
        %v2998 = vadd.f32 %v2996, %v2997
        %v2999 = vsel %vm1315, %v2976, 0.0
        %v3000 = vadd.f32 %v2998, %v2999
        %v3001 = vsel %vm1315, %v2977, 0.0
        %v3002 = vadd.f32 %v3000, %v3001
        %v3003 = vsel %vm1315, %v2978, 0.0
        %v3004 = vadd.f32 %v3002, %v3003
        %v3005 = vsel %vm1315, %v2979, 0.0
        %v3006 = vadd.f32 %v3004, %v3005
        %v3007 = vsel %vm1315, %v2980, 0.0
        %v3008 = vadd.f32 %v3006, %v3007
        %v3009 = vsel %vm1315, %v2981, 0.0
        %v3010 = vadd.f32 %v3008, %v3009
        %v3011 = vsel %vm1315, %v2982, 0.0
        %v3012 = vadd.f32 %v3010, %v3011
        %v3013 = vsel %vm1315, %v2983, 0.0
        %v3014 = vadd.f32 %v3012, %v3013
        %v3015 = vsel %vm1315, %v2984, 0.0
        %v3016 = vadd.f32 %v3014, %v3015
        %v3017 = vrot.slane %v3016, 4
        %v3018 = vadd.f32 %v3016, %v3017
        %v3019 = vrot.slane %v3018, 2
        %v3020 = vadd.f32 %v3018, %v3019
        %v3021 = vrot.slane %v3020, 1
        %v3022 = vadd.f32 %v3020, %v3021
        %v3025 = vunpack.c.l.s4 1966171168
        %v3026 = vunpack.c.0.s8 %v3025
        %v3027 = vlaneseq
        %v3028 = vshrl.u32 %v3027, 7
        %v3029 = vsub.s32 %v3026, %v3028
        %v3030 = vrot.slane %v3022, %v3029
        %v3032 = vunpack.c.l.s4 1966171168
        %v3033 = vunpack.c.0.s8 %v3032
        %v3034 = vlaneseq
        %v3035 = vshrl.u32 %v3034, 7
        %v3036 = vsub.s32 %v3033, %v3035
        %v3037 = vrot.slane %v3030, %v3036
        %3038 = vrot.lane.b32.xlu0 %v3037, 96
        %v3039 = vpop.permute.xlu0 %3038
        %v3041 = vadd.f32 %v2985, %v3039
        %vm3042 = vcmask 1041152
        %3043 = vst.msk [vmem:[#allocation4] sm:$0x1] %vm3042, %v3041
        // Predicated region
        $region49: #{tpu_custom_call.1} parent=43 // pred_check
          %p3044 = pneg %p301
        $region50: #{tpu_custom_call.1} parent=43 // pred_check_branch
          %3046 = sbr.rel (%p3044) target = $region52
        $region51: #{tpu_custom_call.1} parent=43 // pred_region
          %v3047 = vld [vmem:[#allocation4] sm:$0x1]
          %v3048 = vmul.f32 %v3047, 0.0078125
          %v3049 = vld [vmem:[%s4] sm:$0xff]
          %v3050 = vld [vmem:[%s4 + $0x8] sm:$0xff]
          %v3051 = vld [vmem:[%s4 + $0x10] sm:$0xff]
          %v3052 = vld [vmem:[%s4 + $0x18] sm:$0xff]
          %v3053 = vld [vmem:[%s4 + $0x20] sm:$0xff]
          %v3054 = vld [vmem:[%s4 + $0x28] sm:$0xff]
          %v3055 = vld [vmem:[%s4 + $0x30] sm:$0xff]
          %v3056 = vld [vmem:[%s4 + $0x38] sm:$0xff]
          %v3057 = vld [vmem:[%s4 + $0x40] sm:$0xff]
          %v3058 = vld [vmem:[%s4 + $0x48] sm:$0xff]
          %v3059 = vld [vmem:[%s4 + $0x50] sm:$0xff]
          %v3060 = vld [vmem:[%s4 + $0x58] sm:$0xff]
          %v3061 = vld [vmem:[%s4 + $0x60] sm:$0xff]
          %v3062 = vld [vmem:[%s4 + $0x68] sm:$0xff]
          %v3063 = vld [vmem:[%s4 + $0x70] sm:$0xff]
          %v3064 = vld [vmem:[%s4 + $0x78] sm:$0xff]
          %v3065 = vld [vmem:[%s5] sm:$0x1]
          %3066 = vmatprep.subr.mxu0 0.0
          %3067 = vmatpush1.msra.mxu0 %v3049
          %3068 = vmatprep.subr.mxu0 0.0
          %3069 = vmatpush1.msra.mxu0 %v3050
          %3070 = vmatprep.subr.mxu0 0.0
          %3071 = vmatpush1.msra.mxu0 %v3051
          %3072 = vmatprep.subr.mxu0 0.0
          %3073 = vmatpush1.msra.mxu0 %v3052
          %3074 = vmatprep.subr.mxu0 0.0
          %3075 = vmatpush1.msra.mxu0 %v3053
          %3076 = vmatprep.subr.mxu0 0.0
          %3077 = vmatpush1.msra.mxu0 %v3054
          %3078 = vmatprep.subr.mxu0 0.0
          %3079 = vmatpush1.msra.mxu0 %v3055
          %3080 = vmatprep.subr.mxu0 0.0
          %3081 = vmatpush1.msra.mxu0 %v3056
          %3082 = vmatprep.subr.mxu0 0.0
          %3083 = vmatpush1.msra.mxu0 %v3057
          %3084 = vmatprep.subr.mxu0 0.0
          %3085 = vmatpush1.msra.mxu0 %v3058
          %3086 = vmatprep.subr.mxu0 0.0
          %3087 = vmatpush1.msra.mxu0 %v3059
          %3088 = vmatprep.subr.mxu0 0.0
          %3089 = vmatpush1.msra.mxu0 %v3060
          %3090 = vmatprep.subr.mxu0 0.0
          %3091 = vmatpush1.msra.mxu0 %v3061
          %3092 = vmatprep.subr.mxu0 0.0
          %3093 = vmatpush1.msra.mxu0 %v3062
          %3094 = vmatprep.subr.mxu0 0.0
          %3095 = vmatpush1.msra.mxu0 %v3063
          %3096 = vmatprep.subr.mxu0 0.0
          %3097 = vmatpush1.msra.mxu0 %v3064
          %3098 = vmatprep.subr.mxu0 0.0
          %3099 = vmatpush1.msra.mxu0 0.0
          %3100 = vmatprep.subr.mxu0 0.0
          %3101 = vmatpush1.msra.mxu0 0.0
          %3102 = vmatprep.subr.mxu0 0.0
          %3103 = vmatpush1.msra.mxu0 0.0
          %3104 = vmatprep.subr.mxu0 0.0
          %3105 = vmatpush1.msra.mxu0 0.0
          %3106 = vmatprep.subr.mxu0 0.0
          %3107 = vmatpush1.msra.mxu0 0.0
          %3108 = vmatprep.subr.mxu0 0.0
          %3109 = vmatpush1.msra.mxu0 0.0
          %3110 = vmatprep.subr.mxu0 0.0
          %3111 = vmatpush1.msra.mxu0 0.0
          %3112 = vmatprep.subr.mxu0 0.0
          %3113 = vmatpush1.msra.mxu0 0.0
          %3114 = vmatprep.subr.mxu0 0.0
          %3115 = vmatpush1.msra.mxu0 0.0
          %3116 = vmatprep.subr.mxu0 0.0
          %3117 = vmatpush1.msra.mxu0 0.0
          %3118 = vmatprep.subr.mxu0 0.0
          %3119 = vmatpush1.msra.mxu0 0.0
          %3120 = vmatprep.subr.mxu0 0.0
          %3121 = vmatpush1.msra.mxu0 0.0
          %3122 = vmatprep.subr.mxu0 0.0
          %3123 = vmatpush1.msra.mxu0 0.0
          %3124 = vmatprep.subr.mxu0 0.0
          %3125 = vmatpush1.msra.mxu0 0.0
          %3126 = vmatprep.subr.mxu0 0.0
          %3127 = vmatpush1.msra.mxu0 0.0
          %3128 = vmatprep.subr.mxu0 0.0
          %3129 = vmatpush1.msra.mxu0 0.0
          %3130 = vmatprep.mubr.f32.mxu0 0.0
          %3131 = vmatmul.mubr.f32.gmra.mrb[0].mxu0 %v3048
          %v3132 = vpop.f32.mrb[0].mxu0
          %v3133 = vadd.f32 %v3065, %v3132
          %v3134 = vpop.f32.mrb[0].mxu0
          %3135 = vdwg.mxu0
          %vm3136 = vcmp.gt.f32.partialorder %v3133, 0.0
          %v3137 = vmin.f32 %v3133, 0.0
          %v3138 = vmul.f32 %v3137, 1.442695
          %v3139 = vpow.pop %v3138
          %v3140 = vsub.f32 %v3139, 1.0
          %v3141 = vsel %vm3136, %v3133, %v3140
          %vm3142 = vcmask 57344
          %v3143 = vsel %vm3142, %v3141, -inf
          %3144 = vmax.xlane.f32.xlu0 %v3143
          %v3145 = vpop.xlane.xlu0 %3144
          %v3146 = vsub.f32 %v3141, %v3145
          %v3147 = vmul.f32 %v3146, 1.442695
          %v3148 = vpow.pop %v3147
          %v3149 = vsel %vm3142, %v3148, 0.0
          %3150 = vadd.xlane.f32.xlu0 %v3149
          %v3151 = vpop.xlane.xlu0 %3150
          %v3152 = vlog2.pop %v3151
          %v3153 = vmul.f32 %v3152, 0.6931472
          %v3154 = vsub.f32 %v3146, %v3153
          %3155 = vst.msk [vmem:[%s281] sm:$0x1] %vm3142, %v3154
        $region52: #{tpu_custom_call.1} parent=43 // pred_fallthru
          _
        %s3156 = sand.u32 %s178, 1
        %s3157 = scalar_lea.sflag [#allocation6], %s3156
        %s3158 = sand.u32 %s178, 1
        %s3159 = scalar_lea.vmem [#allocation5], %s3158
        // Predicated region
        $region53: #{tpu_custom_call.1} parent=43 // pred_check
          %p3160 = pneg %p188
        $region54: #{tpu_custom_call.1} parent=43 // pred_check_branch
          %3162 = sbr.rel (%p3160) target = $region56
        $region55: #{tpu_custom_call.1} parent=43 // pred_region
          %s3164 = ssub.s32 16, 16
          %3165 = vsyncadd %s3157, %s3164
          %s3166 = smul.addr %s24, 16
          %s3167 = scalar_lea.hbm %s6, %s3166
          %s3169 = sshll.u32 %s3159, 4
          %s3170 = int_to_ptr.vmem [resolvable:$true] %s3169
          %3172 = dma.vmem_to_hbm [thread:$0]  %s3170, 16, %s3167, %s3157
        $region56: #{tpu_custom_call.1} parent=43 // pred_fallthru
          _
      $region44: #{tpu_custom_call.1} parent=5 // pred_fallthru
        _
      %p3173 = scmp.le.s32.totalorder 2, %s15
      // Predicated region
      $region57: #{tpu_custom_call.1} parent=5 // pred_check
        %p3174 = pneg %p3173
      $region58: #{tpu_custom_call.1} parent=5 // pred_check_branch
        %3176 = sbr.rel (%p3174) target = $region60
      $region59: #{tpu_custom_call.1} parent=5 // pred_region
        %s3177 = ssub.s32 %s15, 2
        // Predicated region
        $region61: #{tpu_custom_call.1} parent=59 // pred_check
          %p3178 = pneg %p194
        $region62: #{tpu_custom_call.1} parent=59 // pred_check_branch
          %3180 = sbr.rel (%p3178) target = $region64
        $region63: #{tpu_custom_call.1} parent=59 // pred_region
          %s3181 = sand.u32 %s179, 1
          %s3182 = scalar_lea.sflag [#allocation6], %s3181
          %s3183 = sand.u32 %s179, 1
          %s3184 = scalar_lea.vmem [#allocation5], %s3183
          %3185 = dma.done %s3182, 16
        $region64: #{tpu_custom_call.1} parent=59 // pred_fallthru
          _
      $region60: #{tpu_custom_call.1} parent=5 // pred_fallthru
        _
    $region6: #{tpu_custom_call.1} parent=1 // loop_footer
      %s19 = sadd.s32 1, %s15
    $region7: #{tpu_custom_call.1} parent=1 // loop_footer_branch
      %14 = sbr.rel target = $region3
    $region8: #{tpu_custom_call.1} parent=1 // loop_exit
      _
    %3186 = vsyncpa [#allocation6], 1
    %s3187 = scalar_lea.sflag [#allocation6], 1
    %3188 = vsyncpa %s3187, 1

</llo_original>
